<compile_context>
chip_gen: v7x
topology: tpu7x:2x2x1
jax: 0.10.0
libtpu: 0.0.40
codegen_flags: <defaults>
</compile_context>

<pallas_src>
import jax
import jax.numpy as jnp
import numpy as np
from jax import lax
from jax.experimental import pallas as pl
from jax.experimental.pallas import tpu as pltpu

BN_EPS = 1e-5


def _round_up(x, m):
    return -(-x // m) * m


def _upconv_phase_taps(up_k):
    """Static decomposition of ConvTranspose1d(k=up_k, stride=up_k//2, padding=up_k//4):
    output time t = s*stride + r receives x[s + q] @ w[:, :, k] for every (q, k) in taps[r]."""
    stride = up_k // 2
    padding = up_k // 4
    taps = []
    for r in range(stride):
        lst = []
        for k in range(up_k):
            num = r + padding - k
            if num % stride == 0:
                lst.append((num // stride, k))
        taps.append(lst)
    return stride, padding, taps


# ------------------------------ fused stack kernel ----------------------------------
def make_stack_kernel(N, L, C, K, dilations, use_up, up_phase_taps):
    ctr = (K - 1) // 2
    halo = max([ctr * d for d in dilations] + [1]
               + ([abs(q) for taps in up_phase_taps for (q, _) in taps] if use_up else []))
    pad_l = _round_up(halo, 8)   # align the interior store to the 8-sublane tile
    pad_r = _round_up(halo, 8)
    Lp = pad_l + L + pad_r
    inv_nl = 1.0 / float(N * L)

    def conv_bn(src_ref, w_kcc, b, g, be, dil):
        # dilated conv as K per-tap matmuls (bf16 MXU operands, f32 accumulate),
        # accumulator seeded by tap 0.
        # TODO(synk): merge the K taps into one (N*L, K*C) im2col matmul (3x contraction
        # utilization) once minor-dim concatenation / lane-offset stores are reliably lowered.
        acc = None
        for k in range(K):
            off = pad_l + (k - ctr) * dil
            v = src_ref[:, off:off + L, :].reshape(N * L, C).astype(jnp.bfloat16)
            z = jnp.dot(v, w_kcc[k], preferred_element_type=jnp.float32)
            acc = z if acc is None else acc + z
        acc = acc + b
        # single-pass train-mode BatchNorm1d stats (biased variance) over the (N, L) axes
        s1 = jnp.sum(acc, axis=0, keepdims=True)
        s2 = jnp.sum(acc * acc, axis=0, keepdims=True)
        mean = s1 * inv_nl
        var = s2 * inv_nl - mean * mean
        scale = g * lax.rsqrt(var + BN_EPS)
        return acc * scale + (be - mean * scale)

    def kernel(*refs):
        if use_up:
            (x_ref, w1_ref, b1_ref, g1_ref, be1_ref, w2_ref, b2_ref, g2_ref, be2_ref,
             wup_ref, bup_ref, o_ref, abuf, bbuf) = refs
        else:
            (x_ref, w1_ref, b1_ref, g1_ref, be1_ref, w2_ref, b2_ref, g2_ref, be2_ref,
             o_ref, abuf, bbuf) = refs

        # zero the halos exactly once; every later store only touches the aligned interior,
        # so the halos stay zero for the whole kernel (correct zero padding for every layer).
        zl = jnp.zeros((N, pad_l, C), jnp.float32)
        zr = jnp.zeros((N, pad_r, C), jnp.float32)
        abuf[:, :pad_l, :] = zl
        abuf[:, pad_l + L:Lp, :] = zr
        bbuf[:, :pad_l, :] = zl
        bbuf[:, pad_l + L:Lp, :] = zr
        abuf[:, pad_l:pad_l + L, :] = x_ref[...]

        # static unroll over resblocks; weights are stacked on a leading axis per block
        for i, dil in enumerate(dilations):
            w1 = w1_ref[i]
            w2 = w2_ref[i]
            h1 = jnp.maximum(conv_bn(abuf, w1, b1_ref[i], g1_ref[i], be1_ref[i], dil), 0.0)
            bbuf[:, pad_l:pad_l + L, :] = h1.reshape(N, L, C)
            h2 = conv_bn(bbuf, w2, b2_ref[i], g2_ref[i], be2_ref[i], dil)
            resid = abuf[:, pad_l:pad_l + L, :].reshape(N * L, C)
            abuf[:, pad_l:pad_l + L, :] = jnp.maximum(h2 + resid, 0.0).reshape(N, L, C)

        if use_up:
            wup = wup_ref[...]      # (K_up, Cin, Cout) bf16
            bup = bup_ref[...]      # (1, C) f32
            for r, taps in enumerate(up_phase_taps):   # one register accumulator per phase
                acc = None
                for (q, k) in taps:
                    v = abuf[:, pad_l + q:pad_l + q + L, :].reshape(N * L, C).astype(jnp.bfloat16)
                    z = jnp.dot(v, wup[k], preferred_element_type=jnp.float32)
                    acc = z if acc is None else acc + z
                if acc is None:
                    acc = jnp.zeros((N * L, C), jnp.float32)
                # single store per output phase, bias + ReLU fused
                o_ref[r] = jnp.maximum(acc + bup, 0.0).reshape(N, L, C)
        else:
            o_ref[...] = abuf[:, pad_l:pad_l + L, :]

    return kernel, Lp


# ------------------------------ full stack wrapper -----------------------------------
def dilated_conv_stack_forward(x_ncl, params, kernel_size, stride, dilations,
                               use_transposed_conv, up_kernel_size):
    assert stride == 1  # TODO(synk): strided ResBlock (conv residual path + res BN) not implemented
    N, C, L = x_ncl.shape
    K = kernel_size
    x = jnp.transpose(x_ncl, (0, 2, 1))  # NCL -> NLC

    # per-tap weight matrices (K, Cin, Cout), stacked over blocks, pre-cast to bf16 for the MXU
    def conv_w(w):
        return jnp.transpose(w, (2, 1, 0)).astype(jnp.bfloat16)

    W1 = jnp.stack([conv_w(p["w1"]) for p in params["resblocks"]])
    W2 = jnp.stack([conv_w(p["w2"]) for p in params["resblocks"]])

    def vec(name):
        return jnp.stack([p[name].reshape(1, C) for p in params["resblocks"]])

    args = [x, W1, vec("b1"), vec("g1"), vec("be1"), W2, vec("b2"), vec("g2"), vec("be2")]

    if use_transposed_conv:
        up_stride, up_padding, up_taps = _upconv_phase_taps(up_kernel_size)
        l_out = (L - 1) * up_stride - 2 * up_padding + up_kernel_size
        assert l_out == L * up_stride  # holds for the module's (up_k, up_k//2, up_k//4) params
        wup = jnp.transpose(params["up_w"], (2, 0, 1)).astype(jnp.bfloat16)  # (K_up, Cin, Cout)
        args += [wup, params["up_b"].reshape(1, C)]
        out_shape = jax.ShapeDtypeStruct((up_stride, N, L, C), jnp.float32)
    else:
        up_stride, up_taps = 1, []
        out_shape = jax.ShapeDtypeStruct((N, L, C), jnp.float32)

    kernel, Lp = make_stack_kernel(N, L, C, K, dilations, use_transposed_conv, up_taps)

    # TODO(synk): for production-size L, add a time-tiled grid (halo-aware BlockSpecs, two-pass
    # BN for cross-tile stats) with dimension_semantics=('parallel', ...) so both v7x cores are
    # used, and size tiles for the 64 MiB v7x VMEM.
    y = pl.pallas_call(
        kernel,
        out_shape=out_shape,
        in_specs=[pl.BlockSpec(memory_space=pltpu.MemorySpace.VMEM)] * len(args),
        out_specs=pl.BlockSpec(memory_space=pltpu.MemorySpace.VMEM),
        scratch_shapes=[pltpu.VMEM((N, Lp, C), jnp.float32),   # ping-pong padded activations
                        pltpu.VMEM((N, Lp, C), jnp.float32)],
    )(*args)

    if use_transposed_conv:
        # interleave the `stride` output phases into the time axis (cheap glue on a small tensor)
        # TODO(synk): emit a lane-dense (N, L, stride*C) output directly once lane-offset
        # sub-tile stores are supported; that removes this transpose entirely.
        y = jnp.transpose(y, (1, 2, 0, 3)).reshape(N, L * up_stride, C)
    return jnp.transpose(y, (0, 2, 1))  # NLC -> NCL


# ------------------------------ deterministic init -----------------------------------
def init_params(key, C, K, dilations, use_transposed_conv, up_kernel_size):
    params = {"resblocks": []}
    for _ in dilations:
        key, *ks = jax.random.split(key, 9)
        params["resblocks"].append({
            "w1": jax.random.normal(ks[0], (C, C, K), jnp.float32) / np.sqrt(C * K),
            "b1": 0.1 * jax.random.normal(ks[1], (C,), jnp.float32),
            "g1": 1.0 + 0.1 * jax.random.normal(ks[2], (C,), jnp.float32),
            "be1": 0.1 * jax.random.normal(ks[3], (C,), jnp.float32),
            "w2": jax.random.normal(ks[4], (C, C, K), jnp.float32) / np.sqrt(C * K),
            "b2": 0.1 * jax.random.normal(ks[5], (C,), jnp.float32),
            "g2": 1.0 + 0.1 * jax.random.normal(ks[6], (C,), jnp.float32),
            "be2": 0.1 * jax.random.normal(ks[7], (C,), jnp.float32),
        })
    if use_transposed_conv:
        key, k1, k2 = jax.random.split(key, 3)
        params["up_w"] = jax.random.normal(k1, (C, C, up_kernel_size),
                                           jnp.float32) / np.sqrt(C * up_kernel_size)
        params["up_b"] = 0.1 * jax.random.normal(k2, (C,), jnp.float32)
    return params


# ------------------------------ numpy reference --------------------------------------
def _conv1d_ref(x, w, b, pad, dil):
    N, Ci, L = x.shape
    Co, _, K = w.shape
    xp = np.zeros((N, Ci, L + 2 * pad), np.float64)
    xp[:, :, pad:pad + L] = x
    y = np.zeros((N, Co, L), np.float64)
    for t in range(L):
        for k in range(K):
            y[:, :, t] += xp[:, :, t + k * dil] @ w[:, :, k].T
    return y + b[None, :, None]


def _bn_train_ref(x, g, be, eps=BN_EPS):
    mean = x.mean(axis=(0, 2), keepdims=True)
    var = ((x - mean) ** 2).mean(axis=(0, 2), keepdims=True)
    return (x - mean) / np.sqrt(var + eps) * g[None, :, None] + be[None, :, None]


def _resblock_ref(x, p, K, dil):
    pad = (K - 1) // 2 * dil
    h = np.maximum(_bn_train_ref(_conv1d_ref(x, p["w1"], p["b1"], pad, dil),
                                 p["g1"], p["be1"]), 0.0)
    h = _bn_train_ref(_conv1d_ref(h, p["w2"], p["b2"], pad, dil), p["g2"], p["be2"])
    return np.maximum(h + x, 0.0)


def _convtranspose_ref(x, w, b, K):
    stride, padding = K // 2, K // 4
    N, _, L = x.shape
    Co = w.shape[1]
    Lout = (L - 1) * stride - 2 * padding + K
    y = np.zeros((N, Co, Lout), np.float64)
    for s in range(L):
        for k in range(K):
            t = s * stride + k - padding
            if 0 <= t < Lout:
                y[:, :, t] += x[:, :, s] @ w[:, :, k]
    return np.maximum(y + b[None, :, None], 0.0)


def _stack_ref(x, params, K, dilations, use_transposed_conv, up_kernel_size):
    for p, d in zip(params["resblocks"], dilations):
        pnp = {k: np.asarray(v, np.float64) for k, v in p.items()}
        x = _resblock_ref(x, pnp, K, d)
    if use_transposed_conv:
        x = _convtranspose_ref(x, np.asarray(params["up_w"], np.float64),
                               np.asarray(params["up_b"], np.float64), up_kernel_size)
    return x


# ----------------------------------- main ---------------------------------------------
if __name__ == "__main__":
    hidden_dim = 32
    kernel_size = 3
    stride = 1
    dilations = (1, 2, 4)
    use_transposed_conv = True
    up_kernel_size = 4
    N, L = 2, 16

    key = jax.random.PRNGKey(0)
    key, kx = jax.random.split(key)
    x = jax.random.normal(kx, (N, hidden_dim, L), jnp.float32)  # PyTorch NCL input

    params = init_params(key, hidden_dim, kernel_size, dilations,
                         use_transposed_conv, up_kernel_size)

    out = dilated_conv_stack_forward(x, params, kernel_size, stride, dilations,
                                     use_transposed_conv, up_kernel_size)
    out = jax.block_until_ready(out)

    ref = _stack_ref(np.asarray(x, np.float64), params, kernel_size, dilations,
                     use_transposed_conv, up_kernel_size)
    # bf16 MXU operands (f32 accumulate) shift results at the ~1e-2 level vs the f64 reference
    if not np.allclose(np.asarray(out, np.float64), ref, rtol=3e-2, atol=3e-2):
        raise AssertionError("Pallas output does not match reference")
    print("KERNEL_OK")
</pallas_src>

<mosaic_0001>
module attributes {stable_mosaic.version = 11 : i64} {
  func.func @kernel(%arg0: memref<2x16x32xf32, #tpu.memory_space<vmem>>, %arg1: memref<3x3x32x32xbf16, #tpu.memory_space<vmem>>, %arg2: memref<3x1x32xf32, #tpu.memory_space<vmem>>, %arg3: memref<3x1x32xf32, #tpu.memory_space<vmem>>, %arg4: memref<3x1x32xf32, #tpu.memory_space<vmem>>, %arg5: memref<3x3x32x32xbf16, #tpu.memory_space<vmem>>, %arg6: memref<3x1x32xf32, #tpu.memory_space<vmem>>, %arg7: memref<3x1x32xf32, #tpu.memory_space<vmem>>, %arg8: memref<3x1x32xf32, #tpu.memory_space<vmem>>, %arg9: memref<4x32x32xbf16, #tpu.memory_space<vmem>>, %arg10: memref<1x32xf32, #tpu.memory_space<vmem>>, %arg11: memref<2x2x16x32xf32, #tpu.memory_space<vmem>>, %arg12: memref<2x32x32xf32, #tpu.memory_space<vmem>>, %arg13: memref<2x32x32xf32, #tpu.memory_space<vmem>>) attributes {dimension_semantics = [], scalar_prefetch = 0 : i64, scratch_operands = 2 : i64, tpu.core_type = #tpu.core_type<tc>} {
    %cst = arith.constant 0.000000e+00 : f32
    %0 = vector.broadcast %cst : f32 to vector<2x8x32xf32>
    %cst_0 = arith.constant 0.000000e+00 : f32
    %1 = vector.broadcast %cst_0 : f32 to vector<2x8x32xf32>
    %c0 = arith.constant 0 : index
    %c0_1 = arith.constant 0 : index
    %c0_2 = arith.constant 0 : index
    %2 = vector.load %arg12[%c0, %c0_1, %c0_2] : memref<2x32x32xf32, #tpu.memory_space<vmem>>, vector<2x8x32xf32>
    tpu.vector_store %arg12[%c0, %c0_1, %c0_2], %0 {strides = array<i32>} : memref<2x32x32xf32, #tpu.memory_space<vmem>>, vector<2x8x32xf32>,
    %c0_3 = arith.constant 0 : index
    %c24 = arith.constant 24 : index
    %c0_4 = arith.constant 0 : index
    %3 = vector.load %arg12[%c0_3, %c24, %c0_4] : memref<2x32x32xf32, #tpu.memory_space<vmem>>, vector<2x8x32xf32>
    tpu.vector_store %arg12[%c0_3, %c24, %c0_4], %1 {strides = array<i32>} : memref<2x32x32xf32, #tpu.memory_space<vmem>>, vector<2x8x32xf32>,
    %c0_5 = arith.constant 0 : index
    %c0_6 = arith.constant 0 : index
    %c0_7 = arith.constant 0 : index
    %4 = vector.load %arg13[%c0_5, %c0_6, %c0_7] : memref<2x32x32xf32, #tpu.memory_space<vmem>>, vector<2x8x32xf32>
    tpu.vector_store %arg13[%c0_5, %c0_6, %c0_7], %0 {strides = array<i32>} : memref<2x32x32xf32, #tpu.memory_space<vmem>>, vector<2x8x32xf32>,
    %c0_8 = arith.constant 0 : index
    %c24_9 = arith.constant 24 : index
    %c0_10 = arith.constant 0 : index
    %5 = vector.load %arg13[%c0_8, %c24_9, %c0_10] : memref<2x32x32xf32, #tpu.memory_space<vmem>>, vector<2x8x32xf32>
    tpu.vector_store %arg13[%c0_8, %c24_9, %c0_10], %1 {strides = array<i32>} : memref<2x32x32xf32, #tpu.memory_space<vmem>>, vector<2x8x32xf32>,
    %c0_11 = arith.constant 0 : index
    %c0_12 = arith.constant 0 : index
    %c0_13 = arith.constant 0 : index
    %6 = vector.load %arg0[%c0_11, %c0_12, %c0_13] : memref<2x16x32xf32, #tpu.memory_space<vmem>>, vector<2x16x32xf32>
    %c0_14 = arith.constant 0 : index
    %c8 = arith.constant 8 : index
    %c0_15 = arith.constant 0 : index
    %7 = vector.load %arg12[%c0_14, %c8, %c0_15] : memref<2x32x32xf32, #tpu.memory_space<vmem>>, vector<2x16x32xf32>
    tpu.vector_store %arg12[%c0_14, %c8, %c0_15], %6 {strides = array<i32>} : memref<2x32x32xf32, #tpu.memory_space<vmem>>, vector<2x16x32xf32>,
    %c0_16 = arith.constant 0 : index
    %c0_17 = arith.constant 0 : index
    %c0_18 = arith.constant 0 : index
    %c0_19 = arith.constant 0 : index
    %8 = vector.load %arg1[%c0_16, %c0_17, %c0_18, %c0_19] : memref<3x3x32x32xbf16, #tpu.memory_space<vmem>>, vector<1x3x32x32xbf16>
    %9 = vector.shape_cast %8 : vector<1x3x32x32xbf16> to vector<3x32x32xbf16>
    %c0_20 = arith.constant 0 : index
    %c0_21 = arith.constant 0 : index
    %c0_22 = arith.constant 0 : index
    %c0_23 = arith.constant 0 : index
    %10 = vector.load %arg5[%c0_20, %c0_21, %c0_22, %c0_23] : memref<3x3x32x32xbf16, #tpu.memory_space<vmem>>, vector<1x3x32x32xbf16>
    %11 = vector.shape_cast %10 : vector<1x3x32x32xbf16> to vector<3x32x32xbf16>
    %c0_24 = arith.constant 0 : index
    %c0_25 = arith.constant 0 : index
    %c0_26 = arith.constant 0 : index
    %12 = vector.load %arg2[%c0_24, %c0_25, %c0_26] : memref<3x1x32xf32, #tpu.memory_space<vmem>>, vector<1x1x32xf32>
    %13 = vector.shape_cast %12 : vector<1x1x32xf32> to vector<1x32xf32>
    %c0_27 = arith.constant 0 : index
    %c0_28 = arith.constant 0 : index
    %c0_29 = arith.constant 0 : index
    %14 = vector.load %arg3[%c0_27, %c0_28, %c0_29] : memref<3x1x32xf32, #tpu.memory_space<vmem>>, vector<1x1x32xf32>
    %15 = vector.shape_cast %14 : vector<1x1x32xf32> to vector<1x32xf32>
    %c0_30 = arith.constant 0 : index
    %c0_31 = arith.constant 0 : index
    %c0_32 = arith.constant 0 : index
    %16 = vector.load %arg4[%c0_30, %c0_31, %c0_32] : memref<3x1x32xf32, #tpu.memory_space<vmem>>, vector<1x1x32xf32>
    %17 = vector.shape_cast %16 : vector<1x1x32xf32> to vector<1x32xf32>
    %c0_33 = arith.constant 0 : index
    %c7 = arith.constant 7 : index
    %c0_34 = arith.constant 0 : index
    %18 = vector.load %arg12[%c0_33, %c7, %c0_34] : memref<2x32x32xf32, #tpu.memory_space<vmem>>, vector<2x16x32xf32>
    %19 = vector.shape_cast %18 : vector<2x16x32xf32> to vector<32x32xf32>
    %20 = arith.truncf %19 : vector<32x32xf32> to vector<32x32xbf16>
    %21 = vector.extract_strided_slice %9 {offsets = [0, 0, 0], sizes = [1, 32, 32], strides = [1, 1, 1]} : vector<3x32x32xbf16> to vector<1x32x32xbf16>
    %22 = vector.shape_cast %21 : vector<1x32x32xbf16> to vector<32x32xbf16>
    %cst_35 = arith.constant dense<0.000000e+00> : vector<32x32xf32>
    %23 = tpu.matmul %20, %22, %cst_35 {dimension_numbers = #tpu.dot_dimension_numbers<[1], [0], [0], [1], [0, 0, 1, 1], [], []>} : vector<32x32xbf16>, vector<32x32xbf16>, vector<32x32xf32> -> vector<32x32xf32>
    %c0_36 = arith.constant 0 : index
    %c8_37 = arith.constant 8 : index
    %c0_38 = arith.constant 0 : index
    %24 = vector.load %arg12[%c0_36, %c8_37, %c0_38] : memref<2x32x32xf32, #tpu.memory_space<vmem>>, vector<2x16x32xf32>
    %25 = vector.shape_cast %24 : vector<2x16x32xf32> to vector<32x32xf32>
    %26 = arith.truncf %25 : vector<32x32xf32> to vector<32x32xbf16>
    %27 = vector.extract_strided_slice %9 {offsets = [1, 0, 0], sizes = [1, 32, 32], strides = [1, 1, 1]} : vector<3x32x32xbf16> to vector<1x32x32xbf16>
    %28 = vector.shape_cast %27 : vector<1x32x32xbf16> to vector<32x32xbf16>
    %cst_39 = arith.constant dense<0.000000e+00> : vector<32x32xf32>
    %29 = tpu.matmul %26, %28, %cst_39 {dimension_numbers = #tpu.dot_dimension_numbers<[1], [0], [0], [1], [0, 0, 1, 1], [], []>} : vector<32x32xbf16>, vector<32x32xbf16>, vector<32x32xf32> -> vector<32x32xf32>
    %30 = arith.addf %23, %29 : vector<32x32xf32>
    %c0_40 = arith.constant 0 : index
    %c9 = arith.constant 9 : index
    %c0_41 = arith.constant 0 : index
    %31 = vector.load %arg12[%c0_40, %c9, %c0_41] : memref<2x32x32xf32, #tpu.memory_space<vmem>>, vector<2x16x32xf32>
    %32 = vector.shape_cast %31 : vector<2x16x32xf32> to vector<32x32xf32>
    %33 = arith.truncf %32 : vector<32x32xf32> to vector<32x32xbf16>
    %34 = vector.extract_strided_slice %9 {offsets = [2, 0, 0], sizes = [1, 32, 32], strides = [1, 1, 1]} : vector<3x32x32xbf16> to vector<1x32x32xbf16>
    %35 = vector.shape_cast %34 : vector<1x32x32xbf16> to vector<32x32xbf16>
    %cst_42 = arith.constant dense<0.000000e+00> : vector<32x32xf32>
    %36 = tpu.matmul %33, %35, %cst_42 {dimension_numbers = #tpu.dot_dimension_numbers<[1], [0], [0], [1], [0, 0, 1, 1], [], []>} : vector<32x32xbf16>, vector<32x32xbf16>, vector<32x32xf32> -> vector<32x32xf32>
    %37 = arith.addf %30, %36 : vector<32x32xf32>
    %38 = vector.broadcast %13 : vector<1x32xf32> to vector<32x32xf32>
    %39 = arith.addf %37, %38 : vector<32x32xf32>
    %cst_43 = arith.constant dense<0.000000e+00> : vector<32xf32>
    %40 = vector.multi_reduction <add>, %39, %cst_43 [0] : vector<32x32xf32> to vector<32xf32>
    %41 = vector.shape_cast %40 : vector<32xf32> to vector<1x32xf32>
    %42 = arith.mulf %39, %39 : vector<32x32xf32>
    %cst_44 = arith.constant dense<0.000000e+00> : vector<32xf32>
    %43 = vector.multi_reduction <add>, %42, %cst_44 [0] : vector<32x32xf32> to vector<32xf32>
    %44 = vector.shape_cast %43 : vector<32xf32> to vector<1x32xf32>
    %cst_45 = arith.constant 3.125000e-02 : f32
    %45 = vector.broadcast %cst_45 : f32 to vector<1x32xf32>
    %46 = arith.mulf %41, %45 : vector<1x32xf32>
    %cst_46 = arith.constant 3.125000e-02 : f32
    %47 = vector.broadcast %cst_46 : f32 to vector<1x32xf32>
    %48 = arith.mulf %44, %47 : vector<1x32xf32>
    %49 = arith.mulf %46, %46 : vector<1x32xf32>
    %50 = arith.subf %48, %49 : vector<1x32xf32>
    %cst_47 = arith.constant 9.99999974E-6 : f32
    %51 = vector.broadcast %cst_47 : f32 to vector<1x32xf32>
    %52 = arith.addf %50, %51 : vector<1x32xf32>
    %53 = math.rsqrt %52 : vector<1x32xf32>
    %54 = arith.mulf %15, %53 : vector<1x32xf32>
    %55 = vector.broadcast %54 : vector<1x32xf32> to vector<32x32xf32>
    %56 = arith.mulf %39, %55 : vector<32x32xf32>
    %57 = arith.mulf %46, %54 : vector<1x32xf32>
    %58 = arith.subf %17, %57 : vector<1x32xf32>
    %59 = vector.broadcast %58 : vector<1x32xf32> to vector<32x32xf32>
    %60 = arith.addf %56, %59 : vector<32x32xf32>
    %cst_48 = arith.constant 0.000000e+00 : f32
    %61 = vector.broadcast %cst_48 : f32 to vector<32x32xf32>
    %62 = arith.maximumf %60, %61 : vector<32x32xf32>
    %63 = vector.shape_cast %62 : vector<32x32xf32> to vector<2x16x32xf32>
    %c0_49 = arith.constant 0 : index
    %c8_50 = arith.constant 8 : index
    %c0_51 = arith.constant 0 : index
    %64 = vector.load %arg13[%c0_49, %c8_50, %c0_51] : memref<2x32x32xf32, #tpu.memory_space<vmem>>, vector<2x16x32xf32>
    tpu.vector_store %arg13[%c0_49, %c8_50, %c0_51], %63 {strides = array<i32>} : memref<2x32x32xf32, #tpu.memory_space<vmem>>, vector<2x16x32xf32>,
    %c0_52 = arith.constant 0 : index
    %c0_53 = arith.constant 0 : index
    %c0_54 = arith.constant 0 : index
    %65 = vector.load %arg6[%c0_52, %c0_53, %c0_54] : memref<3x1x32xf32, #tpu.memory_space<vmem>>, vector<1x1x32xf32>
    %66 = vector.shape_cast %65 : vector<1x1x32xf32> to vector<1x32xf32>
    %c0_55 = arith.constant 0 : index
    %c0_56 = arith.constant 0 : index
    %c0_57 = arith.constant 0 : index
    %67 = vector.load %arg7[%c0_55, %c0_56, %c0_57] : memref<3x1x32xf32, #tpu.memory_space<vmem>>, vector<1x1x32xf32>
    %68 = vector.shape_cast %67 : vector<1x1x32xf32> to vector<1x32xf32>
    %c0_58 = arith.constant 0 : index
    %c0_59 = arith.constant 0 : index
    %c0_60 = arith.constant 0 : index
    %69 = vector.load %arg8[%c0_58, %c0_59, %c0_60] : memref<3x1x32xf32, #tpu.memory_space<vmem>>, vector<1x1x32xf32>
    %70 = vector.shape_cast %69 : vector<1x1x32xf32> to vector<1x32xf32>
    %c0_61 = arith.constant 0 : index
    %c7_62 = arith.constant 7 : index
    %c0_63 = arith.constant 0 : index
    %71 = vector.load %arg13[%c0_61, %c7_62, %c0_63] : memref<2x32x32xf32, #tpu.memory_space<vmem>>, vector<2x16x32xf32>
    %72 = vector.shape_cast %71 : vector<2x16x32xf32> to vector<32x32xf32>
    %73 = arith.truncf %72 : vector<32x32xf32> to vector<32x32xbf16>
    %74 = vector.extract_strided_slice %11 {offsets = [0, 0, 0], sizes = [1, 32, 32], strides = [1, 1, 1]} : vector<3x32x32xbf16> to vector<1x32x32xbf16>
    %75 = vector.shape_cast %74 : vector<1x32x32xbf16> to vector<32x32xbf16>
    %cst_64 = arith.constant dense<0.000000e+00> : vector<32x32xf32>
    %76 = tpu.matmul %73, %75, %cst_64 {dimension_numbers = #tpu.dot_dimension_numbers<[1], [0], [0], [1], [0, 0, 1, 1], [], []>} : vector<32x32xbf16>, vector<32x32xbf16>, vector<32x32xf32> -> vector<32x32xf32>
    %c0_65 = arith.constant 0 : index
    %c8_66 = arith.constant 8 : index
    %c0_67 = arith.constant 0 : index
    %77 = vector.load %arg13[%c0_65, %c8_66, %c0_67] : memref<2x32x32xf32, #tpu.memory_space<vmem>>, vector<2x16x32xf32>
    %78 = vector.shape_cast %77 : vector<2x16x32xf32> to vector<32x32xf32>
    %79 = arith.truncf %78 : vector<32x32xf32> to vector<32x32xbf16>
    %80 = vector.extract_strided_slice %11 {offsets = [1, 0, 0], sizes = [1, 32, 32], strides = [1, 1, 1]} : vector<3x32x32xbf16> to vector<1x32x32xbf16>
    %81 = vector.shape_cast %80 : vector<1x32x32xbf16> to vector<32x32xbf16>
    %cst_68 = arith.constant dense<0.000000e+00> : vector<32x32xf32>
    %82 = tpu.matmul %79, %81, %cst_68 {dimension_numbers = #tpu.dot_dimension_numbers<[1], [0], [0], [1], [0, 0, 1, 1], [], []>} : vector<32x32xbf16>, vector<32x32xbf16>, vector<32x32xf32> -> vector<32x32xf32>
    %83 = arith.addf %76, %82 : vector<32x32xf32>
    %c0_69 = arith.constant 0 : index
    %c9_70 = arith.constant 9 : index
    %c0_71 = arith.constant 0 : index
    %84 = vector.load %arg13[%c0_69, %c9_70, %c0_71] : memref<2x32x32xf32, #tpu.memory_space<vmem>>, vector<2x16x32xf32>
    %85 = vector.shape_cast %84 : vector<2x16x32xf32> to vector<32x32xf32>
    %86 = arith.truncf %85 : vector<32x32xf32> to vector<32x32xbf16>
    %87 = vector.extract_strided_slice %11 {offsets = [2, 0, 0], sizes = [1, 32, 32], strides = [1, 1, 1]} : vector<3x32x32xbf16> to vector<1x32x32xbf16>
    %88 = vector.shape_cast %87 : vector<1x32x32xbf16> to vector<32x32xbf16>
    %cst_72 = arith.constant dense<0.000000e+00> : vector<32x32xf32>
    %89 = tpu.matmul %86, %88, %cst_72 {dimension_numbers = #tpu.dot_dimension_numbers<[1], [0], [0], [1], [0, 0, 1, 1], [], []>} : vector<32x32xbf16>, vector<32x32xbf16>, vector<32x32xf32> -> vector<32x32xf32>
    %90 = arith.addf %83, %89 : vector<32x32xf32>
    %91 = vector.broadcast %66 : vector<1x32xf32> to vector<32x32xf32>
    %92 = arith.addf %90, %91 : vector<32x32xf32>
    %cst_73 = arith.constant dense<0.000000e+00> : vector<32xf32>
    %93 = vector.multi_reduction <add>, %92, %cst_73 [0] : vector<32x32xf32> to vector<32xf32>
    %94 = vector.shape_cast %93 : vector<32xf32> to vector<1x32xf32>
    %95 = arith.mulf %92, %92 : vector<32x32xf32>
    %cst_74 = arith.constant dense<0.000000e+00> : vector<32xf32>
    %96 = vector.multi_reduction <add>, %95, %cst_74 [0] : vector<32x32xf32> to vector<32xf32>
    %97 = vector.shape_cast %96 : vector<32xf32> to vector<1x32xf32>
    %cst_75 = arith.constant 3.125000e-02 : f32
    %98 = vector.broadcast %cst_75 : f32 to vector<1x32xf32>
    %99 = arith.mulf %94, %98 : vector<1x32xf32>
    %cst_76 = arith.constant 3.125000e-02 : f32
    %100 = vector.broadcast %cst_76 : f32 to vector<1x32xf32>
    %101 = arith.mulf %97, %100 : vector<1x32xf32>
    %102 = arith.mulf %99, %99 : vector<1x32xf32>
    %103 = arith.subf %101, %102 : vector<1x32xf32>
    %cst_77 = arith.constant 9.99999974E-6 : f32
    %104 = vector.broadcast %cst_77 : f32 to vector<1x32xf32>
    %105 = arith.addf %103, %104 : vector<1x32xf32>
    %106 = math.rsqrt %105 : vector<1x32xf32>
    %107 = arith.mulf %68, %106 : vector<1x32xf32>
    %108 = vector.broadcast %107 : vector<1x32xf32> to vector<32x32xf32>
    %109 = arith.mulf %92, %108 : vector<32x32xf32>
    %110 = arith.mulf %99, %107 : vector<1x32xf32>
    %111 = arith.subf %70, %110 : vector<1x32xf32>
    %112 = vector.broadcast %111 : vector<1x32xf32> to vector<32x32xf32>
    %113 = arith.addf %109, %112 : vector<32x32xf32>
    %c0_78 = arith.constant 0 : index
    %c8_79 = arith.constant 8 : index
    %c0_80 = arith.constant 0 : index
    %114 = vector.load %arg12[%c0_78, %c8_79, %c0_80] : memref<2x32x32xf32, #tpu.memory_space<vmem>>, vector<2x16x32xf32>
    %115 = vector.shape_cast %114 : vector<2x16x32xf32> to vector<32x32xf32>
    %116 = arith.addf %113, %115 : vector<32x32xf32>
    %cst_81 = arith.constant 0.000000e+00 : f32
    %117 = vector.broadcast %cst_81 : f32 to vector<32x32xf32>
    %118 = arith.maximumf %116, %117 : vector<32x32xf32>
    %119 = vector.shape_cast %118 : vector<32x32xf32> to vector<2x16x32xf32>
    %c0_82 = arith.constant 0 : index
    %c8_83 = arith.constant 8 : index
    %c0_84 = arith.constant 0 : index
    %120 = vector.load %arg12[%c0_82, %c8_83, %c0_84] : memref<2x32x32xf32, #tpu.memory_space<vmem>>, vector<2x16x32xf32>
    tpu.vector_store %arg12[%c0_82, %c8_83, %c0_84], %119 {strides = array<i32>} : memref<2x32x32xf32, #tpu.memory_space<vmem>>, vector<2x16x32xf32>,
    %c1 = arith.constant 1 : index
    %c0_85 = arith.constant 0 : index
    %c0_86 = arith.constant 0 : index
    %c0_87 = arith.constant 0 : index
    %121 = vector.load %arg1[%c1, %c0_85, %c0_86, %c0_87] : memref<3x3x32x32xbf16, #tpu.memory_space<vmem>>, vector<1x3x32x32xbf16>
    %122 = vector.shape_cast %121 : vector<1x3x32x32xbf16> to vector<3x32x32xbf16>
    %c1_88 = arith.constant 1 : index
    %c0_89 = arith.constant 0 : index
    %c0_90 = arith.constant 0 : index
    %c0_91 = arith.constant 0 : index
    %123 = vector.load %arg5[%c1_88, %c0_89, %c0_90, %c0_91] : memref<3x3x32x32xbf16, #tpu.memory_space<vmem>>, vector<1x3x32x32xbf16>
    %124 = vector.shape_cast %123 : vector<1x3x32x32xbf16> to vector<3x32x32xbf16>
    %c1_92 = arith.constant 1 : index
    %c0_93 = arith.constant 0 : index
    %c0_94 = arith.constant 0 : index
    %125 = vector.load %arg2[%c1_92, %c0_93, %c0_94] : memref<3x1x32xf32, #tpu.memory_space<vmem>>, vector<1x1x32xf32>
    %126 = vector.shape_cast %125 : vector<1x1x32xf32> to vector<1x32xf32>
    %c1_95 = arith.constant 1 : index
    %c0_96 = arith.constant 0 : index
    %c0_97 = arith.constant 0 : index
    %127 = vector.load %arg3[%c1_95, %c0_96, %c0_97] : memref<3x1x32xf32, #tpu.memory_space<vmem>>, vector<1x1x32xf32>
    %128 = vector.shape_cast %127 : vector<1x1x32xf32> to vector<1x32xf32>
    %c1_98 = arith.constant 1 : index
    %c0_99 = arith.constant 0 : index
    %c0_100 = arith.constant 0 : index
    %129 = vector.load %arg4[%c1_98, %c0_99, %c0_100] : memref<3x1x32xf32, #tpu.memory_space<vmem>>, vector<1x1x32xf32>
    %130 = vector.shape_cast %129 : vector<1x1x32xf32> to vector<1x32xf32>
    %c0_101 = arith.constant 0 : index
    %c6 = arith.constant 6 : index
    %c0_102 = arith.constant 0 : index
    %131 = vector.load %arg12[%c0_101, %c6, %c0_102] : memref<2x32x32xf32, #tpu.memory_space<vmem>>, vector<2x16x32xf32>
    %132 = vector.shape_cast %131 : vector<2x16x32xf32> to vector<32x32xf32>
    %133 = arith.truncf %132 : vector<32x32xf32> to vector<32x32xbf16>
    %134 = vector.extract_strided_slice %122 {offsets = [0, 0, 0], sizes = [1, 32, 32], strides = [1, 1, 1]} : vector<3x32x32xbf16> to vector<1x32x32xbf16>
    %135 = vector.shape_cast %134 : vector<1x32x32xbf16> to vector<32x32xbf16>
    %cst_103 = arith.constant dense<0.000000e+00> : vector<32x32xf32>
    %136 = tpu.matmul %133, %135, %cst_103 {dimension_numbers = #tpu.dot_dimension_numbers<[1], [0], [0], [1], [0, 0, 1, 1], [], []>} : vector<32x32xbf16>, vector<32x32xbf16>, vector<32x32xf32> -> vector<32x32xf32>
    %c0_104 = arith.constant 0 : index
    %c8_105 = arith.constant 8 : index
    %c0_106 = arith.constant 0 : index
    %137 = vector.load %arg12[%c0_104, %c8_105, %c0_106] : memref<2x32x32xf32, #tpu.memory_space<vmem>>, vector<2x16x32xf32>
    %138 = vector.shape_cast %137 : vector<2x16x32xf32> to vector<32x32xf32>
    %139 = arith.truncf %138 : vector<32x32xf32> to vector<32x32xbf16>
    %140 = vector.extract_strided_slice %122 {offsets = [1, 0, 0], sizes = [1, 32, 32], strides = [1, 1, 1]} : vector<3x32x32xbf16> to vector<1x32x32xbf16>
    %141 = vector.shape_cast %140 : vector<1x32x32xbf16> to vector<32x32xbf16>
    %cst_107 = arith.constant dense<0.000000e+00> : vector<32x32xf32>
    %142 = tpu.matmul %139, %141, %cst_107 {dimension_numbers = #tpu.dot_dimension_numbers<[1], [0], [0], [1], [0, 0, 1, 1], [], []>} : vector<32x32xbf16>, vector<32x32xbf16>, vector<32x32xf32> -> vector<32x32xf32>
    %143 = arith.addf %136, %142 : vector<32x32xf32>
    %c0_108 = arith.constant 0 : index
    %c10 = arith.constant 10 : index
    %c0_109 = arith.constant 0 : index
    %144 = vector.load %arg12[%c0_108, %c10, %c0_109] : memref<2x32x32xf32, #tpu.memory_space<vmem>>, vector<2x16x32xf32>
    %145 = vector.shape_cast %144 : vector<2x16x32xf32> to vector<32x32xf32>
    %146 = arith.truncf %145 : vector<32x32xf32> to vector<32x32xbf16>
    %147 = vector.extract_strided_slice %122 {offsets = [2, 0, 0], sizes = [1, 32, 32], strides = [1, 1, 1]} : vector<3x32x32xbf16> to vector<1x32x32xbf16>
    %148 = vector.shape_cast %147 : vector<1x32x32xbf16> to vector<32x32xbf16>
    %cst_110 = arith.constant dense<0.000000e+00> : vector<32x32xf32>
    %149 = tpu.matmul %146, %148, %cst_110 {dimension_numbers = #tpu.dot_dimension_numbers<[1], [0], [0], [1], [0, 0, 1, 1], [], []>} : vector<32x32xbf16>, vector<32x32xbf16>, vector<32x32xf32> -> vector<32x32xf32>
    %150 = arith.addf %143, %149 : vector<32x32xf32>
    %151 = vector.broadcast %126 : vector<1x32xf32> to vector<32x32xf32>
    %152 = arith.addf %150, %151 : vector<32x32xf32>
    %cst_111 = arith.constant dense<0.000000e+00> : vector<32xf32>
    %153 = vector.multi_reduction <add>, %152, %cst_111 [0] : vector<32x32xf32> to vector<32xf32>
    %154 = vector.shape_cast %153 : vector<32xf32> to vector<1x32xf32>
    %155 = arith.mulf %152, %152 : vector<32x32xf32>
    %cst_112 = arith.constant dense<0.000000e+00> : vector<32xf32>
    %156 = vector.multi_reduction <add>, %155, %cst_112 [0] : vector<32x32xf32> to vector<32xf32>
    %157 = vector.shape_cast %156 : vector<32xf32> to vector<1x32xf32>
    %cst_113 = arith.constant 3.125000e-02 : f32
    %158 = vector.broadcast %cst_113 : f32 to vector<1x32xf32>
    %159 = arith.mulf %154, %158 : vector<1x32xf32>
    %cst_114 = arith.constant 3.125000e-02 : f32
    %160 = vector.broadcast %cst_114 : f32 to vector<1x32xf32>
    %161 = arith.mulf %157, %160 : vector<1x32xf32>
    %162 = arith.mulf %159, %159 : vector<1x32xf32>
    %163 = arith.subf %161, %162 : vector<1x32xf32>
    %cst_115 = arith.constant 9.99999974E-6 : f32
    %164 = vector.broadcast %cst_115 : f32 to vector<1x32xf32>
    %165 = arith.addf %163, %164 : vector<1x32xf32>
    %166 = math.rsqrt %165 : vector<1x32xf32>
    %167 = arith.mulf %128, %166 : vector<1x32xf32>
    %168 = vector.broadcast %167 : vector<1x32xf32> to vector<32x32xf32>
    %169 = arith.mulf %152, %168 : vector<32x32xf32>
    %170 = arith.mulf %159, %167 : vector<1x32xf32>
    %171 = arith.subf %130, %170 : vector<1x32xf32>
    %172 = vector.broadcast %171 : vector<1x32xf32> to vector<32x32xf32>
    %173 = arith.addf %169, %172 : vector<32x32xf32>
    %cst_116 = arith.constant 0.000000e+00 : f32
    %174 = vector.broadcast %cst_116 : f32 to vector<32x32xf32>
    %175 = arith.maximumf %173, %174 : vector<32x32xf32>
    %176 = vector.shape_cast %175 : vector<32x32xf32> to vector<2x16x32xf32>
    %c0_117 = arith.constant 0 : index
    %c8_118 = arith.constant 8 : index
    %c0_119 = arith.constant 0 : index
    %177 = vector.load %arg13[%c0_117, %c8_118, %c0_119] : memref<2x32x32xf32, #tpu.memory_space<vmem>>, vector<2x16x32xf32>
    tpu.vector_store %arg13[%c0_117, %c8_118, %c0_119], %176 {strides = array<i32>} : memref<2x32x32xf32, #tpu.memory_space<vmem>>, vector<2x16x32xf32>,
    %c1_120 = arith.constant 1 : index
    %c0_121 = arith.constant 0 : index
    %c0_122 = arith.constant 0 : index
    %178 = vector.load %arg6[%c1_120, %c0_121, %c0_122] : memref<3x1x32xf32, #tpu.memory_space<vmem>>, vector<1x1x32xf32>
    %179 = vector.shape_cast %178 : vector<1x1x32xf32> to vector<1x32xf32>
    %c1_123 = arith.constant 1 : index
    %c0_124 = arith.constant 0 : index
    %c0_125 = arith.constant 0 : index
    %180 = vector.load %arg7[%c1_123, %c0_124, %c0_125] : memref<3x1x32xf32, #tpu.memory_space<vmem>>, vector<1x1x32xf32>
    %181 = vector.shape_cast %180 : vector<1x1x32xf32> to vector<1x32xf32>
    %c1_126 = arith.constant 1 : index
    %c0_127 = arith.constant 0 : index
    %c0_128 = arith.constant 0 : index
    %182 = vector.load %arg8[%c1_126, %c0_127, %c0_128] : memref<3x1x32xf32, #tpu.memory_space<vmem>>, vector<1x1x32xf32>
    %183 = vector.shape_cast %182 : vector<1x1x32xf32> to vector<1x32xf32>
    %c0_129 = arith.constant 0 : index
    %c6_130 = arith.constant 6 : index
    %c0_131 = arith.constant 0 : index
    %184 = vector.load %arg13[%c0_129, %c6_130, %c0_131] : memref<2x32x32xf32, #tpu.memory_space<vmem>>, vector<2x16x32xf32>
    %185 = vector.shape_cast %184 : vector<2x16x32xf32> to vector<32x32xf32>
    %186 = arith.truncf %185 : vector<32x32xf32> to vector<32x32xbf16>
    %187 = vector.extract_strided_slice %124 {offsets = [0, 0, 0], sizes = [1, 32, 32], strides = [1, 1, 1]} : vector<3x32x32xbf16> to vector<1x32x32xbf16>
    %188 = vector.shape_cast %187 : vector<1x32x32xbf16> to vector<32x32xbf16>
    %cst_132 = arith.constant dense<0.000000e+00> : vector<32x32xf32>
    %189 = tpu.matmul %186, %188, %cst_132 {dimension_numbers = #tpu.dot_dimension_numbers<[1], [0], [0], [1], [0, 0, 1, 1], [], []>} : vector<32x32xbf16>, vector<32x32xbf16>, vector<32x32xf32> -> vector<32x32xf32>
    %c0_133 = arith.constant 0 : index
    %c8_134 = arith.constant 8 : index
    %c0_135 = arith.constant 0 : index
    %190 = vector.load %arg13[%c0_133, %c8_134, %c0_135] : memref<2x32x32xf32, #tpu.memory_space<vmem>>, vector<2x16x32xf32>
    %191 = vector.shape_cast %190 : vector<2x16x32xf32> to vector<32x32xf32>
    %192 = arith.truncf %191 : vector<32x32xf32> to vector<32x32xbf16>
    %193 = vector.extract_strided_slice %124 {offsets = [1, 0, 0], sizes = [1, 32, 32], strides = [1, 1, 1]} : vector<3x32x32xbf16> to vector<1x32x32xbf16>
    %194 = vector.shape_cast %193 : vector<1x32x32xbf16> to vector<32x32xbf16>
    %cst_136 = arith.constant dense<0.000000e+00> : vector<32x32xf32>
    %195 = tpu.matmul %192, %194, %cst_136 {dimension_numbers = #tpu.dot_dimension_numbers<[1], [0], [0], [1], [0, 0, 1, 1], [], []>} : vector<32x32xbf16>, vector<32x32xbf16>, vector<32x32xf32> -> vector<32x32xf32>
    %196 = arith.addf %189, %195 : vector<32x32xf32>
    %c0_137 = arith.constant 0 : index
    %c10_138 = arith.constant 10 : index
    %c0_139 = arith.constant 0 : index
    %197 = vector.load %arg13[%c0_137, %c10_138, %c0_139] : memref<2x32x32xf32, #tpu.memory_space<vmem>>, vector<2x16x32xf32>
    %198 = vector.shape_cast %197 : vector<2x16x32xf32> to vector<32x32xf32>
    %199 = arith.truncf %198 : vector<32x32xf32> to vector<32x32xbf16>
    %200 = vector.extract_strided_slice %124 {offsets = [2, 0, 0], sizes = [1, 32, 32], strides = [1, 1, 1]} : vector<3x32x32xbf16> to vector<1x32x32xbf16>
    %201 = vector.shape_cast %200 : vector<1x32x32xbf16> to vector<32x32xbf16>
    %cst_140 = arith.constant dense<0.000000e+00> : vector<32x32xf32>
    %202 = tpu.matmul %199, %201, %cst_140 {dimension_numbers = #tpu.dot_dimension_numbers<[1], [0], [0], [1], [0, 0, 1, 1], [], []>} : vector<32x32xbf16>, vector<32x32xbf16>, vector<32x32xf32> -> vector<32x32xf32>
    %203 = arith.addf %196, %202 : vector<32x32xf32>
    %204 = vector.broadcast %179 : vector<1x32xf32> to vector<32x32xf32>
    %205 = arith.addf %203, %204 : vector<32x32xf32>
    %cst_141 = arith.constant dense<0.000000e+00> : vector<32xf32>
    %206 = vector.multi_reduction <add>, %205, %cst_141 [0] : vector<32x32xf32> to vector<32xf32>
    %207 = vector.shape_cast %206 : vector<32xf32> to vector<1x32xf32>
    %208 = arith.mulf %205, %205 : vector<32x32xf32>
    %cst_142 = arith.constant dense<0.000000e+00> : vector<32xf32>
    %209 = vector.multi_reduction <add>, %208, %cst_142 [0] : vector<32x32xf32> to vector<32xf32>
    %210 = vector.shape_cast %209 : vector<32xf32> to vector<1x32xf32>
    %cst_143 = arith.constant 3.125000e-02 : f32
    %211 = vector.broadcast %cst_143 : f32 to vector<1x32xf32>
    %212 = arith.mulf %207, %211 : vector<1x32xf32>
    %cst_144 = arith.constant 3.125000e-02 : f32
    %213 = vector.broadcast %cst_144 : f32 to vector<1x32xf32>
    %214 = arith.mulf %210, %213 : vector<1x32xf32>
    %215 = arith.mulf %212, %212 : vector<1x32xf32>
    %216 = arith.subf %214, %215 : vector<1x32xf32>
    %cst_145 = arith.constant 9.99999974E-6 : f32
    %217 = vector.broadcast %cst_145 : f32 to vector<1x32xf32>
    %218 = arith.addf %216, %217 : vector<1x32xf32>
    %219 = math.rsqrt %218 : vector<1x32xf32>
    %220 = arith.mulf %181, %219 : vector<1x32xf32>
    %221 = vector.broadcast %220 : vector<1x32xf32> to vector<32x32xf32>
    %222 = arith.mulf %205, %221 : vector<32x32xf32>
    %223 = arith.mulf %212, %220 : vector<1x32xf32>
    %224 = arith.subf %183, %223 : vector<1x32xf32>
    %225 = vector.broadcast %224 : vector<1x32xf32> to vector<32x32xf32>
    %226 = arith.addf %222, %225 : vector<32x32xf32>
    %c0_146 = arith.constant 0 : index
    %c8_147 = arith.constant 8 : index
    %c0_148 = arith.constant 0 : index
    %227 = vector.load %arg12[%c0_146, %c8_147, %c0_148] : memref<2x32x32xf32, #tpu.memory_space<vmem>>, vector<2x16x32xf32>
    %228 = vector.shape_cast %227 : vector<2x16x32xf32> to vector<32x32xf32>
    %229 = arith.addf %226, %228 : vector<32x32xf32>
    %cst_149 = arith.constant 0.000000e+00 : f32
    %230 = vector.broadcast %cst_149 : f32 to vector<32x32xf32>
    %231 = arith.maximumf %229, %230 : vector<32x32xf32>
    %232 = vector.shape_cast %231 : vector<32x32xf32> to vector<2x16x32xf32>
    %c0_150 = arith.constant 0 : index
    %c8_151 = arith.constant 8 : index
    %c0_152 = arith.constant 0 : index
    %233 = vector.load %arg12[%c0_150, %c8_151, %c0_152] : memref<2x32x32xf32, #tpu.memory_space<vmem>>, vector<2x16x32xf32>
    tpu.vector_store %arg12[%c0_150, %c8_151, %c0_152], %232 {strides = array<i32>} : memref<2x32x32xf32, #tpu.memory_space<vmem>>, vector<2x16x32xf32>,
    %c2 = arith.constant 2 : index
    %c0_153 = arith.constant 0 : index
    %c0_154 = arith.constant 0 : index
    %c0_155 = arith.constant 0 : index
    %234 = vector.load %arg1[%c2, %c0_153, %c0_154, %c0_155] : memref<3x3x32x32xbf16, #tpu.memory_space<vmem>>, vector<1x3x32x32xbf16>
    %235 = vector.shape_cast %234 : vector<1x3x32x32xbf16> to vector<3x32x32xbf16>
    %c2_156 = arith.constant 2 : index
    %c0_157 = arith.constant 0 : index
    %c0_158 = arith.constant 0 : index
    %c0_159 = arith.constant 0 : index
    %236 = vector.load %arg5[%c2_156, %c0_157, %c0_158, %c0_159] : memref<3x3x32x32xbf16, #tpu.memory_space<vmem>>, vector<1x3x32x32xbf16>
    %237 = vector.shape_cast %236 : vector<1x3x32x32xbf16> to vector<3x32x32xbf16>
    %c2_160 = arith.constant 2 : index
    %c0_161 = arith.constant 0 : index
    %c0_162 = arith.constant 0 : index
    %238 = vector.load %arg2[%c2_160, %c0_161, %c0_162] : memref<3x1x32xf32, #tpu.memory_space<vmem>>, vector<1x1x32xf32>
    %239 = vector.shape_cast %238 : vector<1x1x32xf32> to vector<1x32xf32>
    %c2_163 = arith.constant 2 : index
    %c0_164 = arith.constant 0 : index
    %c0_165 = arith.constant 0 : index
    %240 = vector.load %arg3[%c2_163, %c0_164, %c0_165] : memref<3x1x32xf32, #tpu.memory_space<vmem>>, vector<1x1x32xf32>
    %241 = vector.shape_cast %240 : vector<1x1x32xf32> to vector<1x32xf32>
    %c2_166 = arith.constant 2 : index
    %c0_167 = arith.constant 0 : index
    %c0_168 = arith.constant 0 : index
    %242 = vector.load %arg4[%c2_166, %c0_167, %c0_168] : memref<3x1x32xf32, #tpu.memory_space<vmem>>, vector<1x1x32xf32>
    %243 = vector.shape_cast %242 : vector<1x1x32xf32> to vector<1x32xf32>
    %c0_169 = arith.constant 0 : index
    %c4 = arith.constant 4 : index
    %c0_170 = arith.constant 0 : index
    %244 = vector.load %arg12[%c0_169, %c4, %c0_170] : memref<2x32x32xf32, #tpu.memory_space<vmem>>, vector<2x16x32xf32>
    %245 = vector.shape_cast %244 : vector<2x16x32xf32> to vector<32x32xf32>
    %246 = arith.truncf %245 : vector<32x32xf32> to vector<32x32xbf16>
    %247 = vector.extract_strided_slice %235 {offsets = [0, 0, 0], sizes = [1, 32, 32], strides = [1, 1, 1]} : vector<3x32x32xbf16> to vector<1x32x32xbf16>
    %248 = vector.shape_cast %247 : vector<1x32x32xbf16> to vector<32x32xbf16>
    %cst_171 = arith.constant dense<0.000000e+00> : vector<32x32xf32>
    %249 = tpu.matmul %246, %248, %cst_171 {dimension_numbers = #tpu.dot_dimension_numbers<[1], [0], [0], [1], [0, 0, 1, 1], [], []>} : vector<32x32xbf16>, vector<32x32xbf16>, vector<32x32xf32> -> vector<32x32xf32>
    %c0_172 = arith.constant 0 : index
    %c8_173 = arith.constant 8 : index
    %c0_174 = arith.constant 0 : index
    %250 = vector.load %arg12[%c0_172, %c8_173, %c0_174] : memref<2x32x32xf32, #tpu.memory_space<vmem>>, vector<2x16x32xf32>
    %251 = vector.shape_cast %250 : vector<2x16x32xf32> to vector<32x32xf32>
    %252 = arith.truncf %251 : vector<32x32xf32> to vector<32x32xbf16>
    %253 = vector.extract_strided_slice %235 {offsets = [1, 0, 0], sizes = [1, 32, 32], strides = [1, 1, 1]} : vector<3x32x32xbf16> to vector<1x32x32xbf16>
    %254 = vector.shape_cast %253 : vector<1x32x32xbf16> to vector<32x32xbf16>
    %cst_175 = arith.constant dense<0.000000e+00> : vector<32x32xf32>
    %255 = tpu.matmul %252, %254, %cst_175 {dimension_numbers = #tpu.dot_dimension_numbers<[1], [0], [0], [1], [0, 0, 1, 1], [], []>} : vector<32x32xbf16>, vector<32x32xbf16>, vector<32x32xf32> -> vector<32x32xf32>
    %256 = arith.addf %249, %255 : vector<32x32xf32>
    %c0_176 = arith.constant 0 : index
    %c12 = arith.constant 12 : index
    %c0_177 = arith.constant 0 : index
    %257 = vector.load %arg12[%c0_176, %c12, %c0_177] : memref<2x32x32xf32, #tpu.memory_space<vmem>>, vector<2x16x32xf32>
    %258 = vector.shape_cast %257 : vector<2x16x32xf32> to vector<32x32xf32>
    %259 = arith.truncf %258 : vector<32x32xf32> to vector<32x32xbf16>
    %260 = vector.extract_strided_slice %235 {offsets = [2, 0, 0], sizes = [1, 32, 32], strides = [1, 1, 1]} : vector<3x32x32xbf16> to vector<1x32x32xbf16>
    %261 = vector.shape_cast %260 : vector<1x32x32xbf16> to vector<32x32xbf16>
    %cst_178 = arith.constant dense<0.000000e+00> : vector<32x32xf32>
    %262 = tpu.matmul %259, %261, %cst_178 {dimension_numbers = #tpu.dot_dimension_numbers<[1], [0], [0], [1], [0, 0, 1, 1], [], []>} : vector<32x32xbf16>, vector<32x32xbf16>, vector<32x32xf32> -> vector<32x32xf32>
    %263 = arith.addf %256, %262 : vector<32x32xf32>
    %264 = vector.broadcast %239 : vector<1x32xf32> to vector<32x32xf32>
    %265 = arith.addf %263, %264 : vector<32x32xf32>
    %cst_179 = arith.constant dense<0.000000e+00> : vector<32xf32>
    %266 = vector.multi_reduction <add>, %265, %cst_179 [0] : vector<32x32xf32> to vector<32xf32>
    %267 = vector.shape_cast %266 : vector<32xf32> to vector<1x32xf32>
    %268 = arith.mulf %265, %265 : vector<32x32xf32>
    %cst_180 = arith.constant dense<0.000000e+00> : vector<32xf32>
    %269 = vector.multi_reduction <add>, %268, %cst_180 [0] : vector<32x32xf32> to vector<32xf32>
    %270 = vector.shape_cast %269 : vector<32xf32> to vector<1x32xf32>
    %cst_181 = arith.constant 3.125000e-02 : f32
    %271 = vector.broadcast %cst_181 : f32 to vector<1x32xf32>
    %272 = arith.mulf %267, %271 : vector<1x32xf32>
    %cst_182 = arith.constant 3.125000e-02 : f32
    %273 = vector.broadcast %cst_182 : f32 to vector<1x32xf32>
    %274 = arith.mulf %270, %273 : vector<1x32xf32>
    %275 = arith.mulf %272, %272 : vector<1x32xf32>
    %276 = arith.subf %274, %275 : vector<1x32xf32>
    %cst_183 = arith.constant 9.99999974E-6 : f32
    %277 = vector.broadcast %cst_183 : f32 to vector<1x32xf32>
    %278 = arith.addf %276, %277 : vector<1x32xf32>
    %279 = math.rsqrt %278 : vector<1x32xf32>
    %280 = arith.mulf %241, %279 : vector<1x32xf32>
    %281 = vector.broadcast %280 : vector<1x32xf32> to vector<32x32xf32>
    %282 = arith.mulf %265, %281 : vector<32x32xf32>
    %283 = arith.mulf %272, %280 : vector<1x32xf32>
    %284 = arith.subf %243, %283 : vector<1x32xf32>
    %285 = vector.broadcast %284 : vector<1x32xf32> to vector<32x32xf32>
    %286 = arith.addf %282, %285 : vector<32x32xf32>
    %cst_184 = arith.constant 0.000000e+00 : f32
    %287 = vector.broadcast %cst_184 : f32 to vector<32x32xf32>
    %288 = arith.maximumf %286, %287 : vector<32x32xf32>
    %289 = vector.shape_cast %288 : vector<32x32xf32> to vector<2x16x32xf32>
    %c0_185 = arith.constant 0 : index
    %c8_186 = arith.constant 8 : index
    %c0_187 = arith.constant 0 : index
    %290 = vector.load %arg13[%c0_185, %c8_186, %c0_187] : memref<2x32x32xf32, #tpu.memory_space<vmem>>, vector<2x16x32xf32>
    tpu.vector_store %arg13[%c0_185, %c8_186, %c0_187], %289 {strides = array<i32>} : memref<2x32x32xf32, #tpu.memory_space<vmem>>, vector<2x16x32xf32>,
    %c2_188 = arith.constant 2 : index
    %c0_189 = arith.constant 0 : index
    %c0_190 = arith.constant 0 : index
    %291 = vector.load %arg6[%c2_188, %c0_189, %c0_190] : memref<3x1x32xf32, #tpu.memory_space<vmem>>, vector<1x1x32xf32>
    %292 = vector.shape_cast %291 : vector<1x1x32xf32> to vector<1x32xf32>
    %c2_191 = arith.constant 2 : index
    %c0_192 = arith.constant 0 : index
    %c0_193 = arith.constant 0 : index
    %293 = vector.load %arg7[%c2_191, %c0_192, %c0_193] : memref<3x1x32xf32, #tpu.memory_space<vmem>>, vector<1x1x32xf32>
    %294 = vector.shape_cast %293 : vector<1x1x32xf32> to vector<1x32xf32>
    %c2_194 = arith.constant 2 : index
    %c0_195 = arith.constant 0 : index
    %c0_196 = arith.constant 0 : index
    %295 = vector.load %arg8[%c2_194, %c0_195, %c0_196] : memref<3x1x32xf32, #tpu.memory_space<vmem>>, vector<1x1x32xf32>
    %296 = vector.shape_cast %295 : vector<1x1x32xf32> to vector<1x32xf32>
    %c0_197 = arith.constant 0 : index
    %c4_198 = arith.constant 4 : index
    %c0_199 = arith.constant 0 : index
    %297 = vector.load %arg13[%c0_197, %c4_198, %c0_199] : memref<2x32x32xf32, #tpu.memory_space<vmem>>, vector<2x16x32xf32>
    %298 = vector.shape_cast %297 : vector<2x16x32xf32> to vector<32x32xf32>
    %299 = arith.truncf %298 : vector<32x32xf32> to vector<32x32xbf16>
    %300 = vector.extract_strided_slice %237 {offsets = [0, 0, 0], sizes = [1, 32, 32], strides = [1, 1, 1]} : vector<3x32x32xbf16> to vector<1x32x32xbf16>
    %301 = vector.shape_cast %300 : vector<1x32x32xbf16> to vector<32x32xbf16>
    %cst_200 = arith.constant dense<0.000000e+00> : vector<32x32xf32>
    %302 = tpu.matmul %299, %301, %cst_200 {dimension_numbers = #tpu.dot_dimension_numbers<[1], [0], [0], [1], [0, 0, 1, 1], [], []>} : vector<32x32xbf16>, vector<32x32xbf16>, vector<32x32xf32> -> vector<32x32xf32>
    %c0_201 = arith.constant 0 : index
    %c8_202 = arith.constant 8 : index
    %c0_203 = arith.constant 0 : index
    %303 = vector.load %arg13[%c0_201, %c8_202, %c0_203] : memref<2x32x32xf32, #tpu.memory_space<vmem>>, vector<2x16x32xf32>
    %304 = vector.shape_cast %303 : vector<2x16x32xf32> to vector<32x32xf32>
    %305 = arith.truncf %304 : vector<32x32xf32> to vector<32x32xbf16>
    %306 = vector.extract_strided_slice %237 {offsets = [1, 0, 0], sizes = [1, 32, 32], strides = [1, 1, 1]} : vector<3x32x32xbf16> to vector<1x32x32xbf16>
    %307 = vector.shape_cast %306 : vector<1x32x32xbf16> to vector<32x32xbf16>
    %cst_204 = arith.constant dense<0.000000e+00> : vector<32x32xf32>
    %308 = tpu.matmul %305, %307, %cst_204 {dimension_numbers = #tpu.dot_dimension_numbers<[1], [0], [0], [1], [0, 0, 1, 1], [], []>} : vector<32x32xbf16>, vector<32x32xbf16>, vector<32x32xf32> -> vector<32x32xf32>
    %309 = arith.addf %302, %308 : vector<32x32xf32>
    %c0_205 = arith.constant 0 : index
    %c12_206 = arith.constant 12 : index
    %c0_207 = arith.constant 0 : index
    %310 = vector.load %arg13[%c0_205, %c12_206, %c0_207] : memref<2x32x32xf32, #tpu.memory_space<vmem>>, vector<2x16x32xf32>
    %311 = vector.shape_cast %310 : vector<2x16x32xf32> to vector<32x32xf32>
    %312 = arith.truncf %311 : vector<32x32xf32> to vector<32x32xbf16>
    %313 = vector.extract_strided_slice %237 {offsets = [2, 0, 0], sizes = [1, 32, 32], strides = [1, 1, 1]} : vector<3x32x32xbf16> to vector<1x32x32xbf16>
    %314 = vector.shape_cast %313 : vector<1x32x32xbf16> to vector<32x32xbf16>
    %cst_208 = arith.constant dense<0.000000e+00> : vector<32x32xf32>
    %315 = tpu.matmul %312, %314, %cst_208 {dimension_numbers = #tpu.dot_dimension_numbers<[1], [0], [0], [1], [0, 0, 1, 1], [], []>} : vector<32x32xbf16>, vector<32x32xbf16>, vector<32x32xf32> -> vector<32x32xf32>
    %316 = arith.addf %309, %315 : vector<32x32xf32>
    %317 = vector.broadcast %292 : vector<1x32xf32> to vector<32x32xf32>
    %318 = arith.addf %316, %317 : vector<32x32xf32>
    %cst_209 = arith.constant dense<0.000000e+00> : vector<32xf32>
    %319 = vector.multi_reduction <add>, %318, %cst_209 [0] : vector<32x32xf32> to vector<32xf32>
    %320 = vector.shape_cast %319 : vector<32xf32> to vector<1x32xf32>
    %321 = arith.mulf %318, %318 : vector<32x32xf32>
    %cst_210 = arith.constant dense<0.000000e+00> : vector<32xf32>
    %322 = vector.multi_reduction <add>, %321, %cst_210 [0] : vector<32x32xf32> to vector<32xf32>
    %323 = vector.shape_cast %322 : vector<32xf32> to vector<1x32xf32>
    %cst_211 = arith.constant 3.125000e-02 : f32
    %324 = vector.broadcast %cst_211 : f32 to vector<1x32xf32>
    %325 = arith.mulf %320, %324 : vector<1x32xf32>
    %cst_212 = arith.constant 3.125000e-02 : f32
    %326 = vector.broadcast %cst_212 : f32 to vector<1x32xf32>
    %327 = arith.mulf %323, %326 : vector<1x32xf32>
    %328 = arith.mulf %325, %325 : vector<1x32xf32>
    %329 = arith.subf %327, %328 : vector<1x32xf32>
    %cst_213 = arith.constant 9.99999974E-6 : f32
    %330 = vector.broadcast %cst_213 : f32 to vector<1x32xf32>
    %331 = arith.addf %329, %330 : vector<1x32xf32>
    %332 = math.rsqrt %331 : vector<1x32xf32>
    %333 = arith.mulf %294, %332 : vector<1x32xf32>
    %334 = vector.broadcast %333 : vector<1x32xf32> to vector<32x32xf32>
    %335 = arith.mulf %318, %334 : vector<32x32xf32>
    %336 = arith.mulf %325, %333 : vector<1x32xf32>
    %337 = arith.subf %296, %336 : vector<1x32xf32>
    %338 = vector.broadcast %337 : vector<1x32xf32> to vector<32x32xf32>
    %339 = arith.addf %335, %338 : vector<32x32xf32>
    %c0_214 = arith.constant 0 : index
    %c8_215 = arith.constant 8 : index
    %c0_216 = arith.constant 0 : index
    %340 = vector.load %arg12[%c0_214, %c8_215, %c0_216] : memref<2x32x32xf32, #tpu.memory_space<vmem>>, vector<2x16x32xf32>
    %341 = vector.shape_cast %340 : vector<2x16x32xf32> to vector<32x32xf32>
    %342 = arith.addf %339, %341 : vector<32x32xf32>
    %cst_217 = arith.constant 0.000000e+00 : f32
    %343 = vector.broadcast %cst_217 : f32 to vector<32x32xf32>
    %344 = arith.maximumf %342, %343 : vector<32x32xf32>
    %345 = vector.shape_cast %344 : vector<32x32xf32> to vector<2x16x32xf32>
    %c0_218 = arith.constant 0 : index
    %c8_219 = arith.constant 8 : index
    %c0_220 = arith.constant 0 : index
    %346 = vector.load %arg12[%c0_218, %c8_219, %c0_220] : memref<2x32x32xf32, #tpu.memory_space<vmem>>, vector<2x16x32xf32>
    tpu.vector_store %arg12[%c0_218, %c8_219, %c0_220], %345 {strides = array<i32>} : memref<2x32x32xf32, #tpu.memory_space<vmem>>, vector<2x16x32xf32>,
    %c0_221 = arith.constant 0 : index
    %c0_222 = arith.constant 0 : index
    %c0_223 = arith.constant 0 : index
    %347 = vector.load %arg9[%c0_221, %c0_222, %c0_223] : memref<4x32x32xbf16, #tpu.memory_space<vmem>>, vector<4x32x32xbf16>
    %c0_224 = arith.constant 0 : index
    %c0_225 = arith.constant 0 : index
    %348 = vector.load %arg10[%c0_224, %c0_225] : memref<1x32xf32, #tpu.memory_space<vmem>>, vector<1x32xf32>
    %c0_226 = arith.constant 0 : index
    %c8_227 = arith.constant 8 : index
    %c0_228 = arith.constant 0 : index
    %349 = vector.load %arg12[%c0_226, %c8_227, %c0_228] : memref<2x32x32xf32, #tpu.memory_space<vmem>>, vector<2x16x32xf32>
    %350 = vector.shape_cast %349 : vector<2x16x32xf32> to vector<32x32xf32>
    %351 = arith.truncf %350 : vector<32x32xf32> to vector<32x32xbf16>
    %352 = vector.extract_strided_slice %347 {offsets = [1, 0, 0], sizes = [1, 32, 32], strides = [1, 1, 1]} : vector<4x32x32xbf16> to vector<1x32x32xbf16>
    %353 = vector.shape_cast %352 : vector<1x32x32xbf16> to vector<32x32xbf16>
    %cst_229 = arith.constant dense<0.000000e+00> : vector<32x32xf32>
    %354 = tpu.matmul %351, %353, %cst_229 {dimension_numbers = #tpu.dot_dimension_numbers<[1], [0], [0], [1], [0, 0, 1, 1], [], []>} : vector<32x32xbf16>, vector<32x32xbf16>, vector<32x32xf32> -> vector<32x32xf32>
    %c0_230 = arith.constant 0 : index
    %c7_231 = arith.constant 7 : index
    %c0_232 = arith.constant 0 : index
    %355 = vector.load %arg12[%c0_230, %c7_231, %c0_232] : memref<2x32x32xf32, #tpu.memory_space<vmem>>, vector<2x16x32xf32>
    %356 = vector.shape_cast %355 : vector<2x16x32xf32> to vector<32x32xf32>
    %357 = arith.truncf %356 : vector<32x32xf32> to vector<32x32xbf16>
    %358 = vector.extract_strided_slice %347 {offsets = [3, 0, 0], sizes = [1, 32, 32], strides = [1, 1, 1]} : vector<4x32x32xbf16> to vector<1x32x32xbf16>
    %359 = vector.shape_cast %358 : vector<1x32x32xbf16> to vector<32x32xbf16>
    %cst_233 = arith.constant dense<0.000000e+00> : vector<32x32xf32>
    %360 = tpu.matmul %357, %359, %cst_233 {dimension_numbers = #tpu.dot_dimension_numbers<[1], [0], [0], [1], [0, 0, 1, 1], [], []>} : vector<32x32xbf16>, vector<32x32xbf16>, vector<32x32xf32> -> vector<32x32xf32>
    %361 = arith.addf %354, %360 : vector<32x32xf32>
    %362 = vector.broadcast %348 : vector<1x32xf32> to vector<32x32xf32>
    %363 = arith.addf %361, %362 : vector<32x32xf32>
    %cst_234 = arith.constant 0.000000e+00 : f32
    %364 = vector.broadcast %cst_234 : f32 to vector<32x32xf32>
    %365 = arith.maximumf %363, %364 : vector<32x32xf32>
    %366 = vector.shape_cast %365 : vector<32x32xf32> to vector<2x16x32xf32>
    %c0_235 = arith.constant 0 : index
    %c0_236 = arith.constant 0 : index
    %c0_237 = arith.constant 0 : index
    %c0_238 = arith.constant 0 : index
    %367 = vector.load %arg11[%c0_235, %c0_236, %c0_237, %c0_238] : memref<2x2x16x32xf32, #tpu.memory_space<vmem>>, vector<1x2x16x32xf32>
    %368 = vector.shape_cast %367 : vector<1x2x16x32xf32> to vector<2x16x32xf32>
    %369 = vector.shape_cast %366 : vector<2x16x32xf32> to vector<1x2x16x32xf32>
    tpu.vector_store %arg11[%c0_235, %c0_236, %c0_237, %c0_238], %369 {strides = array<i32>} : memref<2x2x16x32xf32, #tpu.memory_space<vmem>>, vector<1x2x16x32xf32>,
    %c0_239 = arith.constant 0 : index
    %c9_240 = arith.constant 9 : index
    %c0_241 = arith.constant 0 : index
    %370 = vector.load %arg12[%c0_239, %c9_240, %c0_241] : memref<2x32x32xf32, #tpu.memory_space<vmem>>, vector<2x16x32xf32>
    %371 = vector.shape_cast %370 : vector<2x16x32xf32> to vector<32x32xf32>
    %372 = arith.truncf %371 : vector<32x32xf32> to vector<32x32xbf16>
    %373 = vector.extract_strided_slice %347 {offsets = [0, 0, 0], sizes = [1, 32, 32], strides = [1, 1, 1]} : vector<4x32x32xbf16> to vector<1x32x32xbf16>
    %374 = vector.shape_cast %373 : vector<1x32x32xbf16> to vector<32x32xbf16>
    %cst_242 = arith.constant dense<0.000000e+00> : vector<32x32xf32>
    %375 = tpu.matmul %372, %374, %cst_242 {dimension_numbers = #tpu.dot_dimension_numbers<[1], [0], [0], [1], [0, 0, 1, 1], [], []>} : vector<32x32xbf16>, vector<32x32xbf16>, vector<32x32xf32> -> vector<32x32xf32>
    %c0_243 = arith.constant 0 : index
    %c8_244 = arith.constant 8 : index
    %c0_245 = arith.constant 0 : index
    %376 = vector.load %arg12[%c0_243, %c8_244, %c0_245] : memref<2x32x32xf32, #tpu.memory_space<vmem>>, vector<2x16x32xf32>
    %377 = vector.shape_cast %376 : vector<2x16x32xf32> to vector<32x32xf32>
    %378 = arith.truncf %377 : vector<32x32xf32> to vector<32x32xbf16>
    %379 = vector.extract_strided_slice %347 {offsets = [2, 0, 0], sizes = [1, 32, 32], strides = [1, 1, 1]} : vector<4x32x32xbf16> to vector<1x32x32xbf16>
    %380 = vector.shape_cast %379 : vector<1x32x32xbf16> to vector<32x32xbf16>
    %cst_246 = arith.constant dense<0.000000e+00> : vector<32x32xf32>
    %381 = tpu.matmul %378, %380, %cst_246 {dimension_numbers = #tpu.dot_dimension_numbers<[1], [0], [0], [1], [0, 0, 1, 1], [], []>} : vector<32x32xbf16>, vector<32x32xbf16>, vector<32x32xf32> -> vector<32x32xf32>
    %382 = arith.addf %375, %381 : vector<32x32xf32>
    %383 = vector.broadcast %348 : vector<1x32xf32> to vector<32x32xf32>
    %384 = arith.addf %382, %383 : vector<32x32xf32>
    %cst_247 = arith.constant 0.000000e+00 : f32
    %385 = vector.broadcast %cst_247 : f32 to vector<32x32xf32>
    %386 = arith.maximumf %384, %385 : vector<32x32xf32>
    %387 = vector.shape_cast %386 : vector<32x32xf32> to vector<2x16x32xf32>
    %c1_248 = arith.constant 1 : index
    %c0_249 = arith.constant 0 : index
    %c0_250 = arith.constant 0 : index
    %c0_251 = arith.constant 0 : index
    %388 = vector.load %arg11[%c1_248, %c0_249, %c0_250, %c0_251] : memref<2x2x16x32xf32, #tpu.memory_space<vmem>>, vector<1x2x16x32xf32>
    %389 = vector.shape_cast %388 : vector<1x2x16x32xf32> to vector<2x16x32xf32>
    %390 = vector.shape_cast %387 : vector<2x16x32xf32> to vector<1x2x16x32xf32>
    tpu.vector_store %arg11[%c1_248, %c0_249, %c0_250, %c0_251], %390 {strides = array<i32>} : memref<2x2x16x32xf32, #tpu.memory_space<vmem>>, vector<1x2x16x32xf32>,
    return
  }
}

</mosaic_0001>

<llo_original>
// kernel: tpu_custom_call.1
$region0: #{tpu_custom_call.1}
  #allocation0 [shape = 'u32[]', space=smem, size = 0x4, offset = 0x4, fixed_abs, tag = 'smem constant byte address 0x4 - core index']
  #allocation1 [shape = 'u32[144,128]{1,0:T(1,128)}', space=vmem, size = 0x12000, scoped, tag = 'internal scratch']
  #allocation2 [shape = 'f32[2,32,32]{2,1,0:T(8,128)}', space=vmem, size = 0x8000, scoped, tag = 'scratch operand']
  #allocation3 [shape = 'f32[2,32,32]{2,1,0:T(8,128)}', space=vmem, size = 0x8000, scoped, tag = 'scratch operand']
  %s0 = inlined_call_operand.hbm [shape: f32[2,16,32], index: 0, kind: input, shape index: {}]
  %s1 = inlined_call_operand.hbm [shape: bf16[3,3,32,32], index: 1, kind: input, shape index: {}]
  %s2 = inlined_call_operand.vmem [shape: f32[3,1,32], index: 2, kind: input, shape index: {}]
  %s3 = inlined_call_operand.vmem [shape: f32[3,1,32], index: 3, kind: input, shape index: {}]
  %s4 = inlined_call_operand.vmem [shape: f32[3,1,32], index: 4, kind: input, shape index: {}]
  %s5 = inlined_call_operand.hbm [shape: bf16[3,3,32,32], index: 5, kind: input, shape index: {}]
  %s6 = inlined_call_operand.vmem [shape: f32[3,1,32], index: 6, kind: input, shape index: {}]
  %s7 = inlined_call_operand.vmem [shape: f32[3,1,32], index: 7, kind: input, shape index: {}]
  %s8 = inlined_call_operand.vmem [shape: f32[3,1,32], index: 8, kind: input, shape index: {}]
  %s9 = inlined_call_operand.hbm [shape: bf16[4,32,32], index: 9, kind: input, shape index: {}]
  %s10 = inlined_call_operand.vmem [shape: f32[1,32], index: 10, kind: input, shape index: {}]
  %s11 = inlined_call_operand.hbm [shape: f32[2,2,16,32], index: 11, kind: output, shape index: {}]
  %s12 = sld [smem:[#allocation0]]
  $region70: #{tpu_custom_call.1} parent=0
    _
  %s14 = ssub.s32 1, %s12
  %s15 = scalar_select 0, %s14, %s12
  $region1: #{tpu_custom_call.1} parent=0
    #allocation4 [shape = 'u8[16384]{0}', space=vmem, size = 0x4000, scoped, tag = 'input window, operand 0, single buffered']
    #allocation5 [shape = 's32[1]{0}', space=sflag, size = 0x4, scoped, tag = 'scoped memory for tpu_custom_call.1']
    #allocation6 [shape = 's32[1]{0}', space=sflag, size = 0x4, scoped, tag = 'scoped memory for tpu_custom_call.1']
    #allocation7 [shape = 'u8[73728]{0}', space=vmem, size = 0x12000, scoped, tag = 'input window, operand 1, single buffered']
    #allocation8 [shape = 's32[1]{0}', space=sflag, size = 0x4, scoped, tag = 'scoped memory for tpu_custom_call.1']
    #allocation9 [shape = 'u8[73728]{0}', space=vmem, size = 0x12000, scoped, tag = 'input window, operand 5, single buffered']
    #allocation10 [shape = 'u8[32768]{0}', space=vmem, size = 0x8000, scoped, tag = 'input window, operand 9, single buffered']
    #allocation11 [shape = 's32[1]{0}', space=sflag, size = 0x4, scoped, tag = 'scoped memory for tpu_custom_call.1']
    #allocation12 [shape = 'u8[32768]{0}', space=vmem, size = 0x8000, scoped, tag = 'output window, operand 0, single buffered']
    %16 = vsyncpa [#allocation5], 0
    %17 = vsyncpa [#allocation8], 0
    %18 = vsyncpa [#allocation11], 0
    %19 = vsyncpa [#allocation6], 0
    // Predicated region
    $region2: #{tpu_custom_call.1} parent=1 // pred_check
      _
    $region3: #{tpu_custom_call.1} parent=1 // pred_check_branch
      %21 = sbr.rel (0) target = $region5
    $region4: #{tpu_custom_call.1} parent=1 // pred_region
      %s23 = ssub.s32 512, 512
      %24 = vsyncadd [#allocation5], %s23
      %s25 = sshll.u32 [#allocation4], 4
      %s26 = int_to_ptr.vmem [resolvable:$true] %s25
      %31 = dma.hbm_to_vmem [thread:$0]  %s0, 512, %s26, [#allocation5], 128, 128, 8
    $region5: #{tpu_custom_call.1} parent=1 // pred_fallthru
      _
    // Predicated region
    $region6: #{tpu_custom_call.1} parent=1 // pred_check
      _
    $region7: #{tpu_custom_call.1} parent=1 // pred_check_branch
      %33 = sbr.rel (0) target = $region9
    $region8: #{tpu_custom_call.1} parent=1 // pred_region
      %s35 = ssub.s32 2304, 2304
      %36 = vsyncadd [#allocation8], %s35
      %s37 = sshll.u32 [#allocation7], 4
      %s38 = int_to_ptr.vmem [resolvable:$true] %s37
      %43 = dma.hbm_to_vmem [thread:$0]  %s1, 2304, %s38, [#allocation8], 64, 64, 4
    $region9: #{tpu_custom_call.1} parent=1 // pred_fallthru
      _
    // Predicated region
    $region10: #{tpu_custom_call.1} parent=1 // pred_check
      _
    $region11: #{tpu_custom_call.1} parent=1 // pred_check_branch
      %45 = sbr.rel (0) target = $region13
    $region12: #{tpu_custom_call.1} parent=1 // pred_region
      _
    $region13: #{tpu_custom_call.1} parent=1 // pred_fallthru
      _
    // Predicated region
    $region14: #{tpu_custom_call.1} parent=1 // pred_check
      _
    $region15: #{tpu_custom_call.1} parent=1 // pred_check_branch
      %47 = sbr.rel (0) target = $region17
    $region16: #{tpu_custom_call.1} parent=1 // pred_region
      _
    $region17: #{tpu_custom_call.1} parent=1 // pred_fallthru
      _
    // Predicated region
    $region18: #{tpu_custom_call.1} parent=1 // pred_check
      _
    $region19: #{tpu_custom_call.1} parent=1 // pred_check_branch
      %49 = sbr.rel (0) target = $region21
    $region20: #{tpu_custom_call.1} parent=1 // pred_region
      _
    $region21: #{tpu_custom_call.1} parent=1 // pred_fallthru
      _
    // Predicated region
    $region22: #{tpu_custom_call.1} parent=1 // pred_check
      _
    $region23: #{tpu_custom_call.1} parent=1 // pred_check_branch
      %51 = sbr.rel (0) target = $region25
    $region24: #{tpu_custom_call.1} parent=1 // pred_region
      %s53 = ssub.s32 2304, 2304
      %54 = vsyncadd [#allocation8], %s53
      %s55 = sshll.u32 [#allocation9], 4
      %s56 = int_to_ptr.vmem [resolvable:$true] %s55
      %61 = dma.hbm_to_vmem [thread:$0]  %s5, 2304, %s56, [#allocation8], 64, 64, 4
    $region25: #{tpu_custom_call.1} parent=1 // pred_fallthru
      _
    // Predicated region
    $region26: #{tpu_custom_call.1} parent=1 // pred_check
      _
    $region27: #{tpu_custom_call.1} parent=1 // pred_check_branch
      %63 = sbr.rel (0) target = $region29
    $region28: #{tpu_custom_call.1} parent=1 // pred_region
      _
    $region29: #{tpu_custom_call.1} parent=1 // pred_fallthru
      _
    // Predicated region
    $region30: #{tpu_custom_call.1} parent=1 // pred_check
      _
    $region31: #{tpu_custom_call.1} parent=1 // pred_check_branch
      %65 = sbr.rel (0) target = $region33
    $region32: #{tpu_custom_call.1} parent=1 // pred_region
      _
    $region33: #{tpu_custom_call.1} parent=1 // pred_fallthru
      _
    // Predicated region
    $region34: #{tpu_custom_call.1} parent=1 // pred_check
      _
    $region35: #{tpu_custom_call.1} parent=1 // pred_check_branch
      %67 = sbr.rel (0) target = $region37
    $region36: #{tpu_custom_call.1} parent=1 // pred_region
      _
    $region37: #{tpu_custom_call.1} parent=1 // pred_fallthru
      _
    // Predicated region
    $region38: #{tpu_custom_call.1} parent=1 // pred_check
      _
    $region39: #{tpu_custom_call.1} parent=1 // pred_check_branch
      %69 = sbr.rel (0) target = $region41
    $region40: #{tpu_custom_call.1} parent=1 // pred_region
      %s71 = ssub.s32 1024, 1024
      %72 = vsyncadd [#allocation11], %s71
      %s73 = sshll.u32 [#allocation10], 4
      %s74 = int_to_ptr.vmem [resolvable:$true] %s73
      %79 = dma.hbm_to_vmem [thread:$0]  %s9, 1024, %s74, [#allocation11], 64, 64, 4
    $region41: #{tpu_custom_call.1} parent=1 // pred_fallthru
      _
    // Predicated region
    $region42: #{tpu_custom_call.1} parent=1 // pred_check
      _
    $region43: #{tpu_custom_call.1} parent=1 // pred_check_branch
      %81 = sbr.rel (0) target = $region45
    $region44: #{tpu_custom_call.1} parent=1 // pred_region
      _
    $region45: #{tpu_custom_call.1} parent=1 // pred_fallthru
      _
    // Predicated region
    $region46: #{tpu_custom_call.1} parent=1 // pred_check
      _
    $region47: #{tpu_custom_call.1} parent=1 // pred_check_branch
      %83 = sbr.rel (0) target = $region49
    $region48: #{tpu_custom_call.1} parent=1 // pred_region
      %84 = dma.done [#allocation5], 512
    $region49: #{tpu_custom_call.1} parent=1 // pred_fallthru
      _
    // Predicated region
    $region50: #{tpu_custom_call.1} parent=1 // pred_check
      _
    $region51: #{tpu_custom_call.1} parent=1 // pred_check_branch
      %86 = sbr.rel (0) target = $region53
    $region52: #{tpu_custom_call.1} parent=1 // pred_region
      %87 = dma.done [#allocation8], 2304
    $region53: #{tpu_custom_call.1} parent=1 // pred_fallthru
      _
    // Predicated region
    $region54: #{tpu_custom_call.1} parent=1 // pred_check
      _
    $region55: #{tpu_custom_call.1} parent=1 // pred_check_branch
      %89 = sbr.rel (0) target = $region57
    $region56: #{tpu_custom_call.1} parent=1 // pred_region
      %90 = dma.done [#allocation8], 2304
    $region57: #{tpu_custom_call.1} parent=1 // pred_fallthru
      _
    // Predicated region
    $region58: #{tpu_custom_call.1} parent=1 // pred_check
      _
    $region59: #{tpu_custom_call.1} parent=1 // pred_check_branch
      %92 = sbr.rel (0) target = $region61
    $region60: #{tpu_custom_call.1} parent=1 // pred_region
      %93 = dma.done [#allocation11], 1024
    $region61: #{tpu_custom_call.1} parent=1 // pred_fallthru
      _
    %vm95 = vcmask 261120
    %96 = vst.msk [vmem:[#allocation2] sm:$0xff] %vm95, 0.0
    %97 = vst.msk [vmem:[#allocation2 + $0x20] sm:$0xff] %vm95, 0.0
    %98 = vst.msk [vmem:[#allocation2 + $0x18] sm:$0xff] %vm95, 0.0
    %99 = vst.msk [vmem:[#allocation2 + $0x38] sm:$0xff] %vm95, 0.0
    %100 = vst.msk [vmem:[#allocation3] sm:$0xff] %vm95, 0.0
    %101 = vst.msk [vmem:[#allocation3 + $0x20] sm:$0xff] %vm95, 0.0
    %102 = vst.msk [vmem:[#allocation3 + $0x18] sm:$0xff] %vm95, 0.0
    %103 = vst.msk [vmem:[#allocation3 + $0x38] sm:$0xff] %vm95, 0.0
    %v104 = vld [vmem:[#allocation4] sm:$0xff]
    %v105 = vld [vmem:[#allocation4 + $0x8] sm:$0xff]
    %v106 = vld [vmem:[#allocation4 + $0x10] sm:$0xff]
    %v107 = vld [vmem:[#allocation4 + $0x18] sm:$0xff]
    %108 = vst.msk [vmem:[#allocation2 + $0x8] sm:$0xff] %vm95, %v104
    %109 = vst.msk [vmem:[#allocation2 + $0x10] sm:$0xff] %vm95, %v105
    %110 = vst.msk [vmem:[#allocation2 + $0x28] sm:$0xff] %vm95, %v106
    %111 = vst.msk [vmem:[#allocation2 + $0x30] sm:$0xff] %vm95, %v107
    %v112 = vld [vmem:[#allocation7] sm:$0xf]
    %v113 = vld [vmem:[#allocation7 + $0x4] sm:$0xf]
    %v114 = vld [vmem:[#allocation7 + $0x8] sm:$0xf]
    %v115 = vld [vmem:[#allocation7 + $0xc] sm:$0xf]
    %v116 = vld [vmem:[#allocation7 + $0x10] sm:$0xf]
    %v117 = vld [vmem:[#allocation7 + $0x14] sm:$0xf]
    %v118 = vld [vmem:[#allocation7 + $0x18] sm:$0xf]
    %v119 = vld [vmem:[#allocation7 + $0x1c] sm:$0xf]
    %v120 = vld [vmem:[#allocation7 + $0x20] sm:$0xf]
    %v121 = vld [vmem:[#allocation7 + $0x24] sm:$0xf]
    %v122 = vld [vmem:[#allocation7 + $0x28] sm:$0xf]
    %v123 = vld [vmem:[#allocation7 + $0x2c] sm:$0xf]
    %v124 = vld [vmem:[#allocation9] sm:$0xf]
    %v125 = vld [vmem:[#allocation9 + $0x4] sm:$0xf]
    %v126 = vld [vmem:[#allocation9 + $0x8] sm:$0xf]
    %v127 = vld [vmem:[#allocation9 + $0xc] sm:$0xf]
    %v128 = vld [vmem:[#allocation9 + $0x10] sm:$0xf]
    %v129 = vld [vmem:[#allocation9 + $0x14] sm:$0xf]
    %v130 = vld [vmem:[#allocation9 + $0x18] sm:$0xf]
    %v131 = vld [vmem:[#allocation9 + $0x1c] sm:$0xf]
    %v132 = vld [vmem:[#allocation9 + $0x20] sm:$0xf]
    %v133 = vld [vmem:[#allocation9 + $0x24] sm:$0xf]
    %v134 = vld [vmem:[#allocation9 + $0x28] sm:$0xf]
    %v135 = vld [vmem:[#allocation9 + $0x2c] sm:$0xf]
    %v136 = vld [vmem:[%s2] sm:$0x1]
    %v137 = vld [vmem:[%s3] sm:$0x1]
    %v138 = vld [vmem:[%s4] sm:$0x1]
    %v139 = vld [vmem:[#allocation2 + $0x7] sm:$0xff]
    %v140 = vld [vmem:[#allocation2 + $0xf] sm:$0xff]
    %v141 = vld [vmem:[#allocation2 + $0x27] sm:$0xff]
    %v142 = vld [vmem:[#allocation2 + $0x2f] sm:$0xff]
    %v143 = vpack.c.bf16 %v140, %v139
    %v144 = vpack.c.bf16 %v142, %v141
    %v145 = vld [vmem:[#allocation2 + $0x8] sm:$0xff]
    %v146 = vld [vmem:[#allocation2 + $0x10] sm:$0xff]
    %v147 = vld [vmem:[#allocation2 + $0x28] sm:$0xff]
    %v148 = vld [vmem:[#allocation2 + $0x30] sm:$0xff]
    %v149 = vpack.c.bf16 %v146, %v145
    %v150 = vpack.c.bf16 %v148, %v147
    %v155 = vunpack.c.l.b16 %v116
    %v156 = vunpack.c.l.b16 %v117
    %v157 = vunpack.c.l.b16 %v118
    %v158 = vunpack.c.l.b16 %v119
    %v159 = vpack.c.b16 %v156, %v155
    %v160 = vpack.c.b16 %v158, %v157
    %v164 = vsel %vm95, %v149, 0
    %v167 = vsel %vm95, %v150, 0
    %169 = vmatprep.subr.bf16.mxu0 0
    %170 = vmatpush1.bf16.msra.mxu0 %v159
    %171 = vmatprep.subr.bf16.mxu0 0
    %172 = vmatpush1.bf16.msra.mxu0 %v160
    %173 = vmatprep.subr.bf16.mxu0 0
    %174 = vmatpush1.bf16.msra.mxu0 0
    %175 = vmatprep.subr.bf16.mxu0 0
    %176 = vmatpush1.bf16.msra.mxu0 0
    %177 = vmatprep.subr.bf16.mxu0 0
    %178 = vmatpush1.bf16.msra.mxu0 0
    %179 = vmatprep.subr.bf16.mxu0 0
    %180 = vmatpush1.bf16.msra.mxu0 0
    %181 = vmatprep.subr.bf16.mxu0 0
    %182 = vmatpush1.bf16.msra.mxu0 0
    %183 = vmatprep.subr.bf16.mxu0 0
    %184 = vmatpush1.bf16.msra.mxu0 0
    %185 = vmatprep.subr.bf16.mxu0 0
    %186 = vmatpush1.bf16.msra.mxu0 0
    %187 = vmatprep.subr.bf16.mxu0 0
    %188 = vmatpush1.bf16.msra.mxu0 0
    %189 = vmatprep.subr.bf16.mxu0 0
    %190 = vmatpush1.bf16.msra.mxu0 0
    %191 = vmatprep.subr.bf16.mxu0 0
    %192 = vmatpush1.bf16.msra.mxu0 0
    %193 = vmatprep.subr.bf16.mxu0 0
    %194 = vmatpush1.bf16.msra.mxu0 0
    %195 = vmatprep.subr.bf16.mxu0 0
    %196 = vmatpush1.bf16.msra.mxu0 0
    %197 = vmatprep.subr.bf16.mxu0 0
    %198 = vmatpush1.bf16.msra.mxu0 0
    %199 = vmatprep.subr.bf16.mxu0 0
    %200 = vmatpush1.bf16.msra.mxu0 0
    %201 = vmatprep.mubr.bf16.mxu0 0
    %202 = vmatmul.mubr.bf16.gmra.mrb[0].mxu0 %v164
    %v203 = vpop.f32.mrb[0].mxu0
    %v204 = vadd.f32 0.0, %v203
    %v205 = vpop.f32.mrb[0].mxu0
    %v206 = vpop.f32.mrb[0].mxu0
    %v207 = vadd.f32 0.0, %v206
    %v208 = vpop.f32.mrb[0].mxu0
    %209 = vmatprep.mubr.bf16.mxu0 0
    %210 = vmatmul.mubr.bf16.gmra.mrb[0].mxu0 %v167
    %v211 = vpop.f32.mrb[0].mxu0
    %v212 = vadd.f32 0.0, %v211
    %v213 = vpop.f32.mrb[0].mxu0
    %v214 = vpop.f32.mrb[0].mxu0
    %v215 = vadd.f32 0.0, %v214
    %v216 = vpop.f32.mrb[0].mxu0
    %217 = vdwg.mxu0
    %v222 = vunpack.c.l.b16 %v112
    %v223 = vunpack.c.l.b16 %v113
    %v224 = vunpack.c.l.b16 %v114
    %v225 = vunpack.c.l.b16 %v115
    %v226 = vpack.c.b16 %v223, %v222
    %v227 = vpack.c.b16 %v225, %v224
    %v231 = vsel %vm95, %v143, 0
    %v234 = vsel %vm95, %v144, 0
    %236 = vmatprep.subr.bf16.mxu0 0
    %237 = vmatpush1.bf16.msra.mxu0 %v226
    %238 = vmatprep.subr.bf16.mxu0 0
    %239 = vmatpush1.bf16.msra.mxu0 %v227
    %240 = vmatprep.subr.bf16.mxu0 0
    %241 = vmatpush1.bf16.msra.mxu0 0
    %242 = vmatprep.subr.bf16.mxu0 0
    %243 = vmatpush1.bf16.msra.mxu0 0
    %244 = vmatprep.subr.bf16.mxu0 0
    %245 = vmatpush1.bf16.msra.mxu0 0
    %246 = vmatprep.subr.bf16.mxu0 0
    %247 = vmatpush1.bf16.msra.mxu0 0
    %248 = vmatprep.subr.bf16.mxu0 0
    %249 = vmatpush1.bf16.msra.mxu0 0
    %250 = vmatprep.subr.bf16.mxu0 0
    %251 = vmatpush1.bf16.msra.mxu0 0
    %252 = vmatprep.subr.bf16.mxu0 0
    %253 = vmatpush1.bf16.msra.mxu0 0
    %254 = vmatprep.subr.bf16.mxu0 0
    %255 = vmatpush1.bf16.msra.mxu0 0
    %256 = vmatprep.subr.bf16.mxu0 0
    %257 = vmatpush1.bf16.msra.mxu0 0
    %258 = vmatprep.subr.bf16.mxu0 0
    %259 = vmatpush1.bf16.msra.mxu0 0
    %260 = vmatprep.subr.bf16.mxu0 0
    %261 = vmatpush1.bf16.msra.mxu0 0
    %262 = vmatprep.subr.bf16.mxu0 0
    %263 = vmatpush1.bf16.msra.mxu0 0
    %264 = vmatprep.subr.bf16.mxu0 0
    %265 = vmatpush1.bf16.msra.mxu0 0
    %266 = vmatprep.subr.bf16.mxu0 0
    %267 = vmatpush1.bf16.msra.mxu0 0
    %268 = vmatprep.mubr.bf16.mxu0 0
    %269 = vmatmul.mubr.bf16.gmra.mrb[0].mxu0 %v231
    %v270 = vpop.f32.mrb[0].mxu0
    %v271 = vadd.f32 %v204, %v270
    %v272 = vpop.f32.mrb[0].mxu0
    %v273 = vpop.f32.mrb[0].mxu0
    %v274 = vadd.f32 %v207, %v273
    %v275 = vpop.f32.mrb[0].mxu0
    %276 = vmatprep.mubr.bf16.mxu0 0
    %277 = vmatmul.mubr.bf16.gmra.mrb[0].mxu0 %v234
    %v278 = vpop.f32.mrb[0].mxu0
    %v279 = vadd.f32 %v212, %v278
    %v280 = vpop.f32.mrb[0].mxu0
    %v281 = vpop.f32.mrb[0].mxu0
    %v282 = vadd.f32 %v215, %v281
    %v283 = vpop.f32.mrb[0].mxu0
    %284 = vdwg.mxu0
    %v285 = vld [vmem:[#allocation2 + $0x9] sm:$0xff]
    %v286 = vld [vmem:[#allocation2 + $0x11] sm:$0xff]
    %v287 = vld [vmem:[#allocation2 + $0x29] sm:$0xff]
    %v288 = vld [vmem:[#allocation2 + $0x31] sm:$0xff]
    %v289 = vpack.c.bf16 %v286, %v285
    %v290 = vpack.c.bf16 %v288, %v287
    %v295 = vunpack.c.l.b16 %v120
    %v296 = vunpack.c.l.b16 %v121
    %v297 = vunpack.c.l.b16 %v122
    %v298 = vunpack.c.l.b16 %v123
    %v299 = vpack.c.b16 %v296, %v295
    %v300 = vpack.c.b16 %v298, %v297
    %v304 = vsel %vm95, %v289, 0
    %v307 = vsel %vm95, %v290, 0
    %309 = vmatprep.subr.bf16.mxu0 0
    %310 = vmatpush1.bf16.msra.mxu0 %v299
    %311 = vmatprep.subr.bf16.mxu0 0
    %312 = vmatpush1.bf16.msra.mxu0 %v300
    %313 = vmatprep.subr.bf16.mxu0 0
    %314 = vmatpush1.bf16.msra.mxu0 0
    %315 = vmatprep.subr.bf16.mxu0 0
    %316 = vmatpush1.bf16.msra.mxu0 0
    %317 = vmatprep.subr.bf16.mxu0 0
    %318 = vmatpush1.bf16.msra.mxu0 0
    %319 = vmatprep.subr.bf16.mxu0 0
    %320 = vmatpush1.bf16.msra.mxu0 0
    %321 = vmatprep.subr.bf16.mxu0 0
    %322 = vmatpush1.bf16.msra.mxu0 0
    %323 = vmatprep.subr.bf16.mxu0 0
    %324 = vmatpush1.bf16.msra.mxu0 0
    %325 = vmatprep.subr.bf16.mxu0 0
    %326 = vmatpush1.bf16.msra.mxu0 0
    %327 = vmatprep.subr.bf16.mxu0 0
    %328 = vmatpush1.bf16.msra.mxu0 0
    %329 = vmatprep.subr.bf16.mxu0 0
    %330 = vmatpush1.bf16.msra.mxu0 0
    %331 = vmatprep.subr.bf16.mxu0 0
    %332 = vmatpush1.bf16.msra.mxu0 0
    %333 = vmatprep.subr.bf16.mxu0 0
    %334 = vmatpush1.bf16.msra.mxu0 0
    %335 = vmatprep.subr.bf16.mxu0 0
    %336 = vmatpush1.bf16.msra.mxu0 0
    %337 = vmatprep.subr.bf16.mxu0 0
    %338 = vmatpush1.bf16.msra.mxu0 0
    %339 = vmatprep.subr.bf16.mxu0 0
    %340 = vmatpush1.bf16.msra.mxu0 0
    %341 = vmatprep.mubr.bf16.mxu0 0
    %342 = vmatmul.mubr.bf16.gmra.mrb[0].mxu0 %v304
    %v343 = vpop.f32.mrb[0].mxu0
    %v344 = vadd.f32 0.0, %v343
    %v345 = vpop.f32.mrb[0].mxu0
    %v346 = vpop.f32.mrb[0].mxu0
    %v347 = vadd.f32 0.0, %v346
    %v348 = vpop.f32.mrb[0].mxu0
    %349 = vmatprep.mubr.bf16.mxu0 0
    %350 = vmatmul.mubr.bf16.gmra.mrb[0].mxu0 %v307
    %v351 = vpop.f32.mrb[0].mxu0
    %v352 = vadd.f32 0.0, %v351
    %v353 = vpop.f32.mrb[0].mxu0
    %v354 = vpop.f32.mrb[0].mxu0
    %v355 = vadd.f32 0.0, %v354
    %v356 = vpop.f32.mrb[0].mxu0
    %357 = vdwg.mxu0
    %v358 = vadd.f32 %v271, %v344
    %v359 = vadd.f32 %v274, %v347
    %v360 = vadd.f32 %v279, %v352
    %v361 = vadd.f32 %v282, %v355
    %v363 = vlaneseq
    %v364 = vshrl.u32 %v363, 7
    %v365 = vsub.s32 0, %v364
    %v366 = vrot.slane %v136, %v365
    %v368 = vadd.f32 %v358, %v366
    %v369 = vadd.f32 %v359, %v366
    %v370 = vadd.f32 %v360, %v366
    %v371 = vadd.f32 %v361, %v366
    %v372 = vsel %vm95, %v368, 0.0
    %v373 = vsel %vm95, %v369, 0.0
    %v374 = vadd.f32 %v372, %v373
    %v375 = vsel %vm95, %v370, 0.0
    %v376 = vadd.f32 %v374, %v375
    %v377 = vsel %vm95, %v371, 0.0
    %v378 = vadd.f32 %v376, %v377
    %v379 = vrot.slane %v378, 4
    %v380 = vadd.f32 %v378, %v379
    %v381 = vrot.slane %v380, 2
    %v382 = vadd.f32 %v380, %v381
    %v383 = vrot.slane %v382, 1
    %v384 = vadd.f32 %v382, %v383
    %v385 = vmul.f32 %v368, %v368
    %v386 = vmul.f32 %v369, %v369
    %v387 = vmul.f32 %v370, %v370
    %v388 = vmul.f32 %v371, %v371
    %v389 = vsel %vm95, %v385, 0.0
    %v390 = vsel %vm95, %v386, 0.0
    %v391 = vadd.f32 %v389, %v390
    %v392 = vsel %vm95, %v387, 0.0
    %v393 = vadd.f32 %v391, %v392
    %v394 = vsel %vm95, %v388, 0.0
    %v395 = vadd.f32 %v393, %v394
    %v396 = vrot.slane %v395, 4
    %v397 = vadd.f32 %v395, %v396
    %v398 = vrot.slane %v397, 2
    %v399 = vadd.f32 %v397, %v398
    %v400 = vrot.slane %v399, 1
    %v401 = vadd.f32 %v399, %v400
    %v402 = vmul.f32 %v384, 0.03125
    %v403 = vmul.f32 %v401, 0.03125
    %v404 = vmul.f32 %v402, %v402
    %v405 = vsub.f32 %v403, %v404
    %v406 = vadd.f32 %v405, 1e-05
    %v407 = vrsqrt.pop %v406
    %v408 = vmul.f32 %v137, %v407
    %v410 = vlaneseq
    %v411 = vshrl.u32 %v410, 7
    %v412 = vsub.s32 0, %v411
    %v413 = vrot.slane %v408, %v412
    %v415 = vmul.f32 %v368, %v413
    %v416 = vmul.f32 %v369, %v413
    %v417 = vmul.f32 %v370, %v413
    %v418 = vmul.f32 %v371, %v413
    %v419 = vmul.f32 %v402, %v408
    %v420 = vsub.f32 %v138, %v419
    %v422 = vlaneseq
    %v423 = vshrl.u32 %v422, 7
    %v424 = vsub.s32 0, %v423
    %v425 = vrot.slane %v420, %v424
    %v427 = vadd.f32 %v415, %v425
    %v428 = vadd.f32 %v416, %v425
    %v429 = vadd.f32 %v417, %v425
    %v430 = vadd.f32 %v418, %v425
    %v431 = vmax.f32 %v427, 0.0
    %v432 = vmax.f32 %v428, 0.0
    %v433 = vmax.f32 %v429, 0.0
    %v434 = vmax.f32 %v430, 0.0
    %435 = vst.msk [vmem:[#allocation3 + $0x8] sm:$0xff] %vm95, %v431
    %436 = vst.msk [vmem:[#allocation3 + $0x10] sm:$0xff] %vm95, %v432
    %437 = vst.msk [vmem:[#allocation3 + $0x28] sm:$0xff] %vm95, %v433
    %438 = vst.msk [vmem:[#allocation3 + $0x30] sm:$0xff] %vm95, %v434
    %v439 = vld [vmem:[%s6] sm:$0x1]
    %v440 = vld [vmem:[%s7] sm:$0x1]
    %v441 = vld [vmem:[%s8] sm:$0x1]
    %v442 = vld [vmem:[#allocation3 + $0x7] sm:$0xff]
    %v443 = vld [vmem:[#allocation3 + $0xf] sm:$0xff]
    %v444 = vld [vmem:[#allocation3 + $0x27] sm:$0xff]
    %v445 = vld [vmem:[#allocation3 + $0x2f] sm:$0xff]
    %v446 = vpack.c.bf16 %v443, %v442
    %v447 = vpack.c.bf16 %v445, %v444
    %v448 = vld [vmem:[#allocation3 + $0x8] sm:$0xff]
    %v449 = vld [vmem:[#allocation3 + $0x10] sm:$0xff]
    %v450 = vld [vmem:[#allocation3 + $0x28] sm:$0xff]
    %v451 = vld [vmem:[#allocation3 + $0x30] sm:$0xff]
    %v452 = vpack.c.bf16 %v449, %v448
    %v453 = vpack.c.bf16 %v451, %v450
    %v458 = vunpack.c.l.b16 %v128
    %v459 = vunpack.c.l.b16 %v129
    %v460 = vunpack.c.l.b16 %v130
    %v461 = vunpack.c.l.b16 %v131
    %v462 = vpack.c.b16 %v459, %v458
    %v463 = vpack.c.b16 %v461, %v460
    %v467 = vsel %vm95, %v452, 0
    %v470 = vsel %vm95, %v453, 0
    %472 = vmatprep.subr.bf16.mxu0 0
    %473 = vmatpush1.bf16.msra.mxu0 %v462
    %474 = vmatprep.subr.bf16.mxu0 0
    %475 = vmatpush1.bf16.msra.mxu0 %v463
    %476 = vmatprep.subr.bf16.mxu0 0
    %477 = vmatpush1.bf16.msra.mxu0 0
    %478 = vmatprep.subr.bf16.mxu0 0
    %479 = vmatpush1.bf16.msra.mxu0 0
    %480 = vmatprep.subr.bf16.mxu0 0
    %481 = vmatpush1.bf16.msra.mxu0 0
    %482 = vmatprep.subr.bf16.mxu0 0
    %483 = vmatpush1.bf16.msra.mxu0 0
    %484 = vmatprep.subr.bf16.mxu0 0
    %485 = vmatpush1.bf16.msra.mxu0 0
    %486 = vmatprep.subr.bf16.mxu0 0
    %487 = vmatpush1.bf16.msra.mxu0 0
    %488 = vmatprep.subr.bf16.mxu0 0
    %489 = vmatpush1.bf16.msra.mxu0 0
    %490 = vmatprep.subr.bf16.mxu0 0
    %491 = vmatpush1.bf16.msra.mxu0 0
    %492 = vmatprep.subr.bf16.mxu0 0
    %493 = vmatpush1.bf16.msra.mxu0 0
    %494 = vmatprep.subr.bf16.mxu0 0
    %495 = vmatpush1.bf16.msra.mxu0 0
    %496 = vmatprep.subr.bf16.mxu0 0
    %497 = vmatpush1.bf16.msra.mxu0 0
    %498 = vmatprep.subr.bf16.mxu0 0
    %499 = vmatpush1.bf16.msra.mxu0 0
    %500 = vmatprep.subr.bf16.mxu0 0
    %501 = vmatpush1.bf16.msra.mxu0 0
    %502 = vmatprep.subr.bf16.mxu0 0
    %503 = vmatpush1.bf16.msra.mxu0 0
    %504 = vmatprep.mubr.bf16.mxu0 0
    %505 = vmatmul.mubr.bf16.gmra.mrb[0].mxu0 %v467
    %v506 = vpop.f32.mrb[0].mxu0
    %v507 = vadd.f32 0.0, %v506
    %v508 = vpop.f32.mrb[0].mxu0
    %v509 = vpop.f32.mrb[0].mxu0
    %v510 = vadd.f32 0.0, %v509
    %v511 = vpop.f32.mrb[0].mxu0
    %512 = vmatprep.mubr.bf16.mxu0 0
    %513 = vmatmul.mubr.bf16.gmra.mrb[0].mxu0 %v470
    %v514 = vpop.f32.mrb[0].mxu0
    %v515 = vadd.f32 0.0, %v514
    %v516 = vpop.f32.mrb[0].mxu0
    %v517 = vpop.f32.mrb[0].mxu0
    %v518 = vadd.f32 0.0, %v517
    %v519 = vpop.f32.mrb[0].mxu0
    %520 = vdwg.mxu0
    %v525 = vunpack.c.l.b16 %v124
    %v526 = vunpack.c.l.b16 %v125
    %v527 = vunpack.c.l.b16 %v126
    %v528 = vunpack.c.l.b16 %v127
    %v529 = vpack.c.b16 %v526, %v525
    %v530 = vpack.c.b16 %v528, %v527
    %v534 = vsel %vm95, %v446, 0
    %v537 = vsel %vm95, %v447, 0
    %539 = vmatprep.subr.bf16.mxu0 0
    %540 = vmatpush1.bf16.msra.mxu0 %v529
    %541 = vmatprep.subr.bf16.mxu0 0
    %542 = vmatpush1.bf16.msra.mxu0 %v530
    %543 = vmatprep.subr.bf16.mxu0 0
    %544 = vmatpush1.bf16.msra.mxu0 0
    %545 = vmatprep.subr.bf16.mxu0 0
    %546 = vmatpush1.bf16.msra.mxu0 0
    %547 = vmatprep.subr.bf16.mxu0 0
    %548 = vmatpush1.bf16.msra.mxu0 0
    %549 = vmatprep.subr.bf16.mxu0 0
    %550 = vmatpush1.bf16.msra.mxu0 0
    %551 = vmatprep.subr.bf16.mxu0 0
    %552 = vmatpush1.bf16.msra.mxu0 0
    %553 = vmatprep.subr.bf16.mxu0 0
    %554 = vmatpush1.bf16.msra.mxu0 0
    %555 = vmatprep.subr.bf16.mxu0 0
    %556 = vmatpush1.bf16.msra.mxu0 0
    %557 = vmatprep.subr.bf16.mxu0 0
    %558 = vmatpush1.bf16.msra.mxu0 0
    %559 = vmatprep.subr.bf16.mxu0 0
    %560 = vmatpush1.bf16.msra.mxu0 0
    %561 = vmatprep.subr.bf16.mxu0 0
    %562 = vmatpush1.bf16.msra.mxu0 0
    %563 = vmatprep.subr.bf16.mxu0 0
    %564 = vmatpush1.bf16.msra.mxu0 0
    %565 = vmatprep.subr.bf16.mxu0 0
    %566 = vmatpush1.bf16.msra.mxu0 0
    %567 = vmatprep.subr.bf16.mxu0 0
    %568 = vmatpush1.bf16.msra.mxu0 0
    %569 = vmatprep.subr.bf16.mxu0 0
    %570 = vmatpush1.bf16.msra.mxu0 0
    %571 = vmatprep.mubr.bf16.mxu0 0
    %572 = vmatmul.mubr.bf16.gmra.mrb[0].mxu0 %v534
    %v573 = vpop.f32.mrb[0].mxu0
    %v574 = vadd.f32 %v507, %v573
    %v575 = vpop.f32.mrb[0].mxu0
    %v576 = vpop.f32.mrb[0].mxu0
    %v577 = vadd.f32 %v510, %v576
    %v578 = vpop.f32.mrb[0].mxu0
    %579 = vmatprep.mubr.bf16.mxu0 0
    %580 = vmatmul.mubr.bf16.gmra.mrb[0].mxu0 %v537
    %v581 = vpop.f32.mrb[0].mxu0
    %v582 = vadd.f32 %v515, %v581
    %v583 = vpop.f32.mrb[0].mxu0
    %v584 = vpop.f32.mrb[0].mxu0
    %v585 = vadd.f32 %v518, %v584
    %v586 = vpop.f32.mrb[0].mxu0
    %587 = vdwg.mxu0
    %v588 = vld [vmem:[#allocation3 + $0x9] sm:$0xff]
    %v589 = vld [vmem:[#allocation3 + $0x11] sm:$0xff]
    %v590 = vld [vmem:[#allocation3 + $0x29] sm:$0xff]
    %v591 = vld [vmem:[#allocation3 + $0x31] sm:$0xff]
    %v592 = vpack.c.bf16 %v589, %v588
    %v593 = vpack.c.bf16 %v591, %v590
    %v598 = vunpack.c.l.b16 %v132
    %v599 = vunpack.c.l.b16 %v133
    %v600 = vunpack.c.l.b16 %v134
    %v601 = vunpack.c.l.b16 %v135
    %v602 = vpack.c.b16 %v599, %v598
    %v603 = vpack.c.b16 %v601, %v600
    %v607 = vsel %vm95, %v592, 0
    %v610 = vsel %vm95, %v593, 0
    %612 = vmatprep.subr.bf16.mxu0 0
    %613 = vmatpush1.bf16.msra.mxu0 %v602
    %614 = vmatprep.subr.bf16.mxu0 0
    %615 = vmatpush1.bf16.msra.mxu0 %v603
    %616 = vmatprep.subr.bf16.mxu0 0
    %617 = vmatpush1.bf16.msra.mxu0 0
    %618 = vmatprep.subr.bf16.mxu0 0
    %619 = vmatpush1.bf16.msra.mxu0 0
    %620 = vmatprep.subr.bf16.mxu0 0
    %621 = vmatpush1.bf16.msra.mxu0 0
    %622 = vmatprep.subr.bf16.mxu0 0
    %623 = vmatpush1.bf16.msra.mxu0 0
    %624 = vmatprep.subr.bf16.mxu0 0
    %625 = vmatpush1.bf16.msra.mxu0 0
    %626 = vmatprep.subr.bf16.mxu0 0
    %627 = vmatpush1.bf16.msra.mxu0 0
    %628 = vmatprep.subr.bf16.mxu0 0
    %629 = vmatpush1.bf16.msra.mxu0 0
    %630 = vmatprep.subr.bf16.mxu0 0
    %631 = vmatpush1.bf16.msra.mxu0 0
    %632 = vmatprep.subr.bf16.mxu0 0
    %633 = vmatpush1.bf16.msra.mxu0 0
    %634 = vmatprep.subr.bf16.mxu0 0
    %635 = vmatpush1.bf16.msra.mxu0 0
    %636 = vmatprep.subr.bf16.mxu0 0
    %637 = vmatpush1.bf16.msra.mxu0 0
    %638 = vmatprep.subr.bf16.mxu0 0
    %639 = vmatpush1.bf16.msra.mxu0 0
    %640 = vmatprep.subr.bf16.mxu0 0
    %641 = vmatpush1.bf16.msra.mxu0 0
    %642 = vmatprep.subr.bf16.mxu0 0
    %643 = vmatpush1.bf16.msra.mxu0 0
    %644 = vmatprep.mubr.bf16.mxu0 0
    %645 = vmatmul.mubr.bf16.gmra.mrb[0].mxu0 %v607
    %v646 = vpop.f32.mrb[0].mxu0
    %v647 = vadd.f32 0.0, %v646
    %v648 = vpop.f32.mrb[0].mxu0
    %v649 = vpop.f32.mrb[0].mxu0
    %v650 = vadd.f32 0.0, %v649
    %v651 = vpop.f32.mrb[0].mxu0
    %652 = vmatprep.mubr.bf16.mxu0 0
    %653 = vmatmul.mubr.bf16.gmra.mrb[0].mxu0 %v610
    %v654 = vpop.f32.mrb[0].mxu0
    %v655 = vadd.f32 0.0, %v654
    %v656 = vpop.f32.mrb[0].mxu0
    %v657 = vpop.f32.mrb[0].mxu0
    %v658 = vadd.f32 0.0, %v657
    %v659 = vpop.f32.mrb[0].mxu0
    %660 = vdwg.mxu0
    %v661 = vadd.f32 %v574, %v647
    %v662 = vadd.f32 %v577, %v650
    %v663 = vadd.f32 %v582, %v655
    %v664 = vadd.f32 %v585, %v658
    %v666 = vlaneseq
    %v667 = vshrl.u32 %v666, 7
    %v668 = vsub.s32 0, %v667
    %v669 = vrot.slane %v439, %v668
    %v671 = vadd.f32 %v661, %v669
    %v672 = vadd.f32 %v662, %v669
    %v673 = vadd.f32 %v663, %v669
    %v674 = vadd.f32 %v664, %v669
    %v675 = vsel %vm95, %v671, 0.0
    %v676 = vsel %vm95, %v672, 0.0
    %v677 = vadd.f32 %v675, %v676
    %v678 = vsel %vm95, %v673, 0.0
    %v679 = vadd.f32 %v677, %v678
    %v680 = vsel %vm95, %v674, 0.0
    %v681 = vadd.f32 %v679, %v680
    %v682 = vrot.slane %v681, 4
    %v683 = vadd.f32 %v681, %v682
    %v684 = vrot.slane %v683, 2
    %v685 = vadd.f32 %v683, %v684
    %v686 = vrot.slane %v685, 1
    %v687 = vadd.f32 %v685, %v686
    %v688 = vmul.f32 %v671, %v671
    %v689 = vmul.f32 %v672, %v672
    %v690 = vmul.f32 %v673, %v673
    %v691 = vmul.f32 %v674, %v674
    %v692 = vsel %vm95, %v688, 0.0
    %v693 = vsel %vm95, %v689, 0.0
    %v694 = vadd.f32 %v692, %v693
    %v695 = vsel %vm95, %v690, 0.0
    %v696 = vadd.f32 %v694, %v695
    %v697 = vsel %vm95, %v691, 0.0
    %v698 = vadd.f32 %v696, %v697
    %v699 = vrot.slane %v698, 4
    %v700 = vadd.f32 %v698, %v699
    %v701 = vrot.slane %v700, 2
    %v702 = vadd.f32 %v700, %v701
    %v703 = vrot.slane %v702, 1
    %v704 = vadd.f32 %v702, %v703
    %v705 = vmul.f32 %v687, 0.03125
    %v706 = vmul.f32 %v704, 0.03125
    %v707 = vmul.f32 %v705, %v705
    %v708 = vsub.f32 %v706, %v707
    %v709 = vadd.f32 %v708, 1e-05
    %v710 = vrsqrt.pop %v709
    %v711 = vmul.f32 %v440, %v710
    %v713 = vlaneseq
    %v714 = vshrl.u32 %v713, 7
    %v715 = vsub.s32 0, %v714
    %v716 = vrot.slane %v711, %v715
    %v718 = vmul.f32 %v671, %v716
    %v719 = vmul.f32 %v672, %v716
    %v720 = vmul.f32 %v673, %v716
    %v721 = vmul.f32 %v674, %v716
    %v722 = vmul.f32 %v705, %v711
    %v723 = vsub.f32 %v441, %v722
    %v725 = vlaneseq
    %v726 = vshrl.u32 %v725, 7
    %v727 = vsub.s32 0, %v726
    %v728 = vrot.slane %v723, %v727
    %v730 = vadd.f32 %v718, %v728
    %v731 = vadd.f32 %v719, %v728
    %v732 = vadd.f32 %v720, %v728
    %v733 = vadd.f32 %v721, %v728
    %v734 = vld [vmem:[#allocation2 + $0x8] sm:$0xff]
    %v735 = vld [vmem:[#allocation2 + $0x10] sm:$0xff]
    %v736 = vld [vmem:[#allocation2 + $0x28] sm:$0xff]
    %v737 = vld [vmem:[#allocation2 + $0x30] sm:$0xff]
    %v738 = vadd.f32 %v730, %v734
    %v739 = vadd.f32 %v731, %v735
    %v740 = vadd.f32 %v732, %v736
    %v741 = vadd.f32 %v733, %v737
    %v742 = vmax.f32 %v738, 0.0
    %v743 = vmax.f32 %v739, 0.0
    %v744 = vmax.f32 %v740, 0.0
    %v745 = vmax.f32 %v741, 0.0
    %746 = vst.msk [vmem:[#allocation2 + $0x8] sm:$0xff] %vm95, %v742
    %747 = vst.msk [vmem:[#allocation2 + $0x10] sm:$0xff] %vm95, %v743
    %748 = vst.msk [vmem:[#allocation2 + $0x28] sm:$0xff] %vm95, %v744
    %749 = vst.msk [vmem:[#allocation2 + $0x30] sm:$0xff] %vm95, %v745
    %s750 = scalar_lea.vmem [#allocation7], 48
    %v751 = vld [vmem:[%s750] sm:$0xf]
    %v752 = vld [vmem:[%s750 + $0x4] sm:$0xf]
    %v753 = vld [vmem:[%s750 + $0x8] sm:$0xf]
    %v754 = vld [vmem:[%s750 + $0xc] sm:$0xf]
    %v755 = vld [vmem:[%s750 + $0x10] sm:$0xf]
    %v756 = vld [vmem:[%s750 + $0x14] sm:$0xf]
    %v757 = vld [vmem:[%s750 + $0x18] sm:$0xf]
    %v758 = vld [vmem:[%s750 + $0x1c] sm:$0xf]
    %v759 = vld [vmem:[%s750 + $0x20] sm:$0xf]
    %v760 = vld [vmem:[%s750 + $0x24] sm:$0xf]
    %v761 = vld [vmem:[%s750 + $0x28] sm:$0xf]
    %v762 = vld [vmem:[%s750 + $0x2c] sm:$0xf]
    %s763 = scalar_lea.vmem [#allocation9], 48
    %v764 = vld [vmem:[%s763] sm:$0xf]
    %v765 = vld [vmem:[%s763 + $0x4] sm:$0xf]
    %v766 = vld [vmem:[%s763 + $0x8] sm:$0xf]
    %v767 = vld [vmem:[%s763 + $0xc] sm:$0xf]
    %v768 = vld [vmem:[%s763 + $0x10] sm:$0xf]
    %v769 = vld [vmem:[%s763 + $0x14] sm:$0xf]
    %v770 = vld [vmem:[%s763 + $0x18] sm:$0xf]
    %v771 = vld [vmem:[%s763 + $0x1c] sm:$0xf]
    %v772 = vld [vmem:[%s763 + $0x20] sm:$0xf]
    %v773 = vld [vmem:[%s763 + $0x24] sm:$0xf]
    %v774 = vld [vmem:[%s763 + $0x28] sm:$0xf]
    %v775 = vld [vmem:[%s763 + $0x2c] sm:$0xf]
    %s776 = scalar_lea.vmem %s2, 1
    %v777 = vld [vmem:[%s776] sm:$0x1]
    %s778 = scalar_lea.vmem %s3, 1
    %v779 = vld [vmem:[%s778] sm:$0x1]
    %s780 = scalar_lea.vmem %s4, 1
    %v781 = vld [vmem:[%s780] sm:$0x1]
    %v782 = vld [vmem:[#allocation2 + $0x6] sm:$0xff]
    %v783 = vld [vmem:[#allocation2 + $0xe] sm:$0xff]
    %v784 = vld [vmem:[#allocation2 + $0x26] sm:$0xff]
    %v785 = vld [vmem:[#allocation2 + $0x2e] sm:$0xff]
    %v786 = vpack.c.bf16 %v783, %v782
    %v787 = vpack.c.bf16 %v785, %v784
    %v788 = vld [vmem:[#allocation2 + $0x8] sm:$0xff]
    %v789 = vld [vmem:[#allocation2 + $0x10] sm:$0xff]
    %v790 = vld [vmem:[#allocation2 + $0x28] sm:$0xff]
    %v791 = vld [vmem:[#allocation2 + $0x30] sm:$0xff]
    %v792 = vpack.c.bf16 %v789, %v788
    %v793 = vpack.c.bf16 %v791, %v790
    %v798 = vunpack.c.l.b16 %v755
    %v799 = vunpack.c.l.b16 %v756
    %v800 = vunpack.c.l.b16 %v757
    %v801 = vunpack.c.l.b16 %v758
    %v802 = vpack.c.b16 %v799, %v798
    %v803 = vpack.c.b16 %v801, %v800
    %v807 = vsel %vm95, %v792, 0
    %v810 = vsel %vm95, %v793, 0
    %812 = vmatprep.subr.bf16.mxu0 0
    %813 = vmatpush1.bf16.msra.mxu0 %v802
    %814 = vmatprep.subr.bf16.mxu0 0
    %815 = vmatpush1.bf16.msra.mxu0 %v803
    %816 = vmatprep.subr.bf16.mxu0 0
    %817 = vmatpush1.bf16.msra.mxu0 0
    %818 = vmatprep.subr.bf16.mxu0 0
    %819 = vmatpush1.bf16.msra.mxu0 0
    %820 = vmatprep.subr.bf16.mxu0 0
    %821 = vmatpush1.bf16.msra.mxu0 0
    %822 = vmatprep.subr.bf16.mxu0 0
    %823 = vmatpush1.bf16.msra.mxu0 0
    %824 = vmatprep.subr.bf16.mxu0 0
    %825 = vmatpush1.bf16.msra.mxu0 0
    %826 = vmatprep.subr.bf16.mxu0 0
    %827 = vmatpush1.bf16.msra.mxu0 0
    %828 = vmatprep.subr.bf16.mxu0 0
    %829 = vmatpush1.bf16.msra.mxu0 0
    %830 = vmatprep.subr.bf16.mxu0 0
    %831 = vmatpush1.bf16.msra.mxu0 0
    %832 = vmatprep.subr.bf16.mxu0 0
    %833 = vmatpush1.bf16.msra.mxu0 0
    %834 = vmatprep.subr.bf16.mxu0 0
    %835 = vmatpush1.bf16.msra.mxu0 0
    %836 = vmatprep.subr.bf16.mxu0 0
    %837 = vmatpush1.bf16.msra.mxu0 0
    %838 = vmatprep.subr.bf16.mxu0 0
    %839 = vmatpush1.bf16.msra.mxu0 0
    %840 = vmatprep.subr.bf16.mxu0 0
    %841 = vmatpush1.bf16.msra.mxu0 0
    %842 = vmatprep.subr.bf16.mxu0 0
    %843 = vmatpush1.bf16.msra.mxu0 0
    %844 = vmatprep.mubr.bf16.mxu0 0
    %845 = vmatmul.mubr.bf16.gmra.mrb[0].mxu0 %v807
    %v846 = vpop.f32.mrb[0].mxu0
    %v847 = vadd.f32 0.0, %v846
    %v848 = vpop.f32.mrb[0].mxu0
    %v849 = vpop.f32.mrb[0].mxu0
    %v850 = vadd.f32 0.0, %v849
    %v851 = vpop.f32.mrb[0].mxu0
    %852 = vmatprep.mubr.bf16.mxu0 0
    %853 = vmatmul.mubr.bf16.gmra.mrb[0].mxu0 %v810
    %v854 = vpop.f32.mrb[0].mxu0
    %v855 = vadd.f32 0.0, %v854
    %v856 = vpop.f32.mrb[0].mxu0
    %v857 = vpop.f32.mrb[0].mxu0
    %v858 = vadd.f32 0.0, %v857
    %v859 = vpop.f32.mrb[0].mxu0
    %860 = vdwg.mxu0
    %v865 = vunpack.c.l.b16 %v751
    %v866 = vunpack.c.l.b16 %v752
    %v867 = vunpack.c.l.b16 %v753
    %v868 = vunpack.c.l.b16 %v754
    %v869 = vpack.c.b16 %v866, %v865
    %v870 = vpack.c.b16 %v868, %v867
    %v874 = vsel %vm95, %v786, 0
    %v877 = vsel %vm95, %v787, 0
    %879 = vmatprep.subr.bf16.mxu0 0
    %880 = vmatpush1.bf16.msra.mxu0 %v869
    %881 = vmatprep.subr.bf16.mxu0 0
    %882 = vmatpush1.bf16.msra.mxu0 %v870
    %883 = vmatprep.subr.bf16.mxu0 0
    %884 = vmatpush1.bf16.msra.mxu0 0
    %885 = vmatprep.subr.bf16.mxu0 0
    %886 = vmatpush1.bf16.msra.mxu0 0
    %887 = vmatprep.subr.bf16.mxu0 0
    %888 = vmatpush1.bf16.msra.mxu0 0
    %889 = vmatprep.subr.bf16.mxu0 0
    %890 = vmatpush1.bf16.msra.mxu0 0
    %891 = vmatprep.subr.bf16.mxu0 0
    %892 = vmatpush1.bf16.msra.mxu0 0
    %893 = vmatprep.subr.bf16.mxu0 0
    %894 = vmatpush1.bf16.msra.mxu0 0
    %895 = vmatprep.subr.bf16.mxu0 0
    %896 = vmatpush1.bf16.msra.mxu0 0
    %897 = vmatprep.subr.bf16.mxu0 0
    %898 = vmatpush1.bf16.msra.mxu0 0
    %899 = vmatprep.subr.bf16.mxu0 0
    %900 = vmatpush1.bf16.msra.mxu0 0
    %901 = vmatprep.subr.bf16.mxu0 0
    %902 = vmatpush1.bf16.msra.mxu0 0
    %903 = vmatprep.subr.bf16.mxu0 0
    %904 = vmatpush1.bf16.msra.mxu0 0
    %905 = vmatprep.subr.bf16.mxu0 0
    %906 = vmatpush1.bf16.msra.mxu0 0
    %907 = vmatprep.subr.bf16.mxu0 0
    %908 = vmatpush1.bf16.msra.mxu0 0
    %909 = vmatprep.subr.bf16.mxu0 0
    %910 = vmatpush1.bf16.msra.mxu0 0
    %911 = vmatprep.mubr.bf16.mxu0 0
    %912 = vmatmul.mubr.bf16.gmra.mrb[0].mxu0 %v874
    %v913 = vpop.f32.mrb[0].mxu0
    %v914 = vadd.f32 %v847, %v913
    %v915 = vpop.f32.mrb[0].mxu0
    %v916 = vpop.f32.mrb[0].mxu0
    %v917 = vadd.f32 %v850, %v916
    %v918 = vpop.f32.mrb[0].mxu0
    %919 = vmatprep.mubr.bf16.mxu0 0
    %920 = vmatmul.mubr.bf16.gmra.mrb[0].mxu0 %v877
    %v921 = vpop.f32.mrb[0].mxu0
    %v922 = vadd.f32 %v855, %v921
    %v923 = vpop.f32.mrb[0].mxu0
    %v924 = vpop.f32.mrb[0].mxu0
    %v925 = vadd.f32 %v858, %v924
    %v926 = vpop.f32.mrb[0].mxu0
    %927 = vdwg.mxu0
    %v928 = vld [vmem:[#allocation2 + $0xa] sm:$0xff]
    %v929 = vld [vmem:[#allocation2 + $0x12] sm:$0xff]
    %v930 = vld [vmem:[#allocation2 + $0x2a] sm:$0xff]
    %v931 = vld [vmem:[#allocation2 + $0x32] sm:$0xff]
    %v932 = vpack.c.bf16 %v929, %v928
    %v933 = vpack.c.bf16 %v931, %v930
    %v938 = vunpack.c.l.b16 %v759
    %v939 = vunpack.c.l.b16 %v760
    %v940 = vunpack.c.l.b16 %v761
    %v941 = vunpack.c.l.b16 %v762
    %v942 = vpack.c.b16 %v939, %v938
    %v943 = vpack.c.b16 %v941, %v940
    %v947 = vsel %vm95, %v932, 0
    %v950 = vsel %vm95, %v933, 0
    %952 = vmatprep.subr.bf16.mxu0 0
    %953 = vmatpush1.bf16.msra.mxu0 %v942
    %954 = vmatprep.subr.bf16.mxu0 0
    %955 = vmatpush1.bf16.msra.mxu0 %v943
    %956 = vmatprep.subr.bf16.mxu0 0
    %957 = vmatpush1.bf16.msra.mxu0 0
    %958 = vmatprep.subr.bf16.mxu0 0
    %959 = vmatpush1.bf16.msra.mxu0 0
    %960 = vmatprep.subr.bf16.mxu0 0
    %961 = vmatpush1.bf16.msra.mxu0 0
    %962 = vmatprep.subr.bf16.mxu0 0
    %963 = vmatpush1.bf16.msra.mxu0 0
    %964 = vmatprep.subr.bf16.mxu0 0
    %965 = vmatpush1.bf16.msra.mxu0 0
    %966 = vmatprep.subr.bf16.mxu0 0
    %967 = vmatpush1.bf16.msra.mxu0 0
    %968 = vmatprep.subr.bf16.mxu0 0
    %969 = vmatpush1.bf16.msra.mxu0 0
    %970 = vmatprep.subr.bf16.mxu0 0
    %971 = vmatpush1.bf16.msra.mxu0 0
    %972 = vmatprep.subr.bf16.mxu0 0
    %973 = vmatpush1.bf16.msra.mxu0 0
    %974 = vmatprep.subr.bf16.mxu0 0
    %975 = vmatpush1.bf16.msra.mxu0 0
    %976 = vmatprep.subr.bf16.mxu0 0
    %977 = vmatpush1.bf16.msra.mxu0 0
    %978 = vmatprep.subr.bf16.mxu0 0
    %979 = vmatpush1.bf16.msra.mxu0 0
    %980 = vmatprep.subr.bf16.mxu0 0
    %981 = vmatpush1.bf16.msra.mxu0 0
    %982 = vmatprep.subr.bf16.mxu0 0
    %983 = vmatpush1.bf16.msra.mxu0 0
    %984 = vmatprep.mubr.bf16.mxu0 0
    %985 = vmatmul.mubr.bf16.gmra.mrb[0].mxu0 %v947
    %v986 = vpop.f32.mrb[0].mxu0
    %v987 = vadd.f32 0.0, %v986
    %v988 = vpop.f32.mrb[0].mxu0
    %v989 = vpop.f32.mrb[0].mxu0
    %v990 = vadd.f32 0.0, %v989
    %v991 = vpop.f32.mrb[0].mxu0
    %992 = vmatprep.mubr.bf16.mxu0 0
    %993 = vmatmul.mubr.bf16.gmra.mrb[0].mxu0 %v950
    %v994 = vpop.f32.mrb[0].mxu0
    %v995 = vadd.f32 0.0, %v994
    %v996 = vpop.f32.mrb[0].mxu0
    %v997 = vpop.f32.mrb[0].mxu0
    %v998 = vadd.f32 0.0, %v997
    %v999 = vpop.f32.mrb[0].mxu0
    %1000 = vdwg.mxu0
    %v1001 = vadd.f32 %v914, %v987
    %v1002 = vadd.f32 %v917, %v990
    %v1003 = vadd.f32 %v922, %v995
    %v1004 = vadd.f32 %v925, %v998
    %v1006 = vlaneseq
    %v1007 = vshrl.u32 %v1006, 7
    %v1008 = vsub.s32 0, %v1007
    %v1009 = vrot.slane %v777, %v1008
    %v1011 = vadd.f32 %v1001, %v1009
    %v1012 = vadd.f32 %v1002, %v1009
    %v1013 = vadd.f32 %v1003, %v1009
    %v1014 = vadd.f32 %v1004, %v1009
    %v1015 = vsel %vm95, %v1011, 0.0
    %v1016 = vsel %vm95, %v1012, 0.0
    %v1017 = vadd.f32 %v1015, %v1016
    %v1018 = vsel %vm95, %v1013, 0.0
    %v1019 = vadd.f32 %v1017, %v1018
    %v1020 = vsel %vm95, %v1014, 0.0
    %v1021 = vadd.f32 %v1019, %v1020
    %v1022 = vrot.slane %v1021, 4
    %v1023 = vadd.f32 %v1021, %v1022
    %v1024 = vrot.slane %v1023, 2
    %v1025 = vadd.f32 %v1023, %v1024
    %v1026 = vrot.slane %v1025, 1
    %v1027 = vadd.f32 %v1025, %v1026
    %v1028 = vmul.f32 %v1011, %v1011
    %v1029 = vmul.f32 %v1012, %v1012
    %v1030 = vmul.f32 %v1013, %v1013
    %v1031 = vmul.f32 %v1014, %v1014
    %v1032 = vsel %vm95, %v1028, 0.0
    %v1033 = vsel %vm95, %v1029, 0.0
    %v1034 = vadd.f32 %v1032, %v1033
    %v1035 = vsel %vm95, %v1030, 0.0
    %v1036 = vadd.f32 %v1034, %v1035
    %v1037 = vsel %vm95, %v1031, 0.0
    %v1038 = vadd.f32 %v1036, %v1037
    %v1039 = vrot.slane %v1038, 4
    %v1040 = vadd.f32 %v1038, %v1039
    %v1041 = vrot.slane %v1040, 2
    %v1042 = vadd.f32 %v1040, %v1041
    %v1043 = vrot.slane %v1042, 1
    %v1044 = vadd.f32 %v1042, %v1043
    %v1045 = vmul.f32 %v1027, 0.03125
    %v1046 = vmul.f32 %v1044, 0.03125
    %v1047 = vmul.f32 %v1045, %v1045
    %v1048 = vsub.f32 %v1046, %v1047
    %v1049 = vadd.f32 %v1048, 1e-05
    %v1050 = vrsqrt.pop %v1049
    %v1051 = vmul.f32 %v779, %v1050
    %v1053 = vlaneseq
    %v1054 = vshrl.u32 %v1053, 7
    %v1055 = vsub.s32 0, %v1054
    %v1056 = vrot.slane %v1051, %v1055
    %v1058 = vmul.f32 %v1011, %v1056
    %v1059 = vmul.f32 %v1012, %v1056
    %v1060 = vmul.f32 %v1013, %v1056
    %v1061 = vmul.f32 %v1014, %v1056
    %v1062 = vmul.f32 %v1045, %v1051
    %v1063 = vsub.f32 %v781, %v1062
    %v1065 = vlaneseq
    %v1066 = vshrl.u32 %v1065, 7
    %v1067 = vsub.s32 0, %v1066
    %v1068 = vrot.slane %v1063, %v1067
    %v1070 = vadd.f32 %v1058, %v1068
    %v1071 = vadd.f32 %v1059, %v1068
    %v1072 = vadd.f32 %v1060, %v1068
    %v1073 = vadd.f32 %v1061, %v1068
    %v1074 = vmax.f32 %v1070, 0.0
    %v1075 = vmax.f32 %v1071, 0.0
    %v1076 = vmax.f32 %v1072, 0.0
    %v1077 = vmax.f32 %v1073, 0.0
    %1078 = vst.msk [vmem:[#allocation3 + $0x8] sm:$0xff] %vm95, %v1074
    %1079 = vst.msk [vmem:[#allocation3 + $0x10] sm:$0xff] %vm95, %v1075
    %1080 = vst.msk [vmem:[#allocation3 + $0x28] sm:$0xff] %vm95, %v1076
    %1081 = vst.msk [vmem:[#allocation3 + $0x30] sm:$0xff] %vm95, %v1077
    %s1082 = scalar_lea.vmem %s6, 1
    %v1083 = vld [vmem:[%s1082] sm:$0x1]
    %s1084 = scalar_lea.vmem %s7, 1
    %v1085 = vld [vmem:[%s1084] sm:$0x1]
    %s1086 = scalar_lea.vmem %s8, 1
    %v1087 = vld [vmem:[%s1086] sm:$0x1]
    %v1088 = vld [vmem:[#allocation3 + $0x6] sm:$0xff]
    %v1089 = vld [vmem:[#allocation3 + $0xe] sm:$0xff]
    %v1090 = vld [vmem:[#allocation3 + $0x26] sm:$0xff]
    %v1091 = vld [vmem:[#allocation3 + $0x2e] sm:$0xff]
    %v1092 = vpack.c.bf16 %v1089, %v1088
    %v1093 = vpack.c.bf16 %v1091, %v1090
    %v1094 = vld [vmem:[#allocation3 + $0x8] sm:$0xff]
    %v1095 = vld [vmem:[#allocation3 + $0x10] sm:$0xff]
    %v1096 = vld [vmem:[#allocation3 + $0x28] sm:$0xff]
    %v1097 = vld [vmem:[#allocation3 + $0x30] sm:$0xff]
    %v1098 = vpack.c.bf16 %v1095, %v1094
    %v1099 = vpack.c.bf16 %v1097, %v1096
    %v1104 = vunpack.c.l.b16 %v768
    %v1105 = vunpack.c.l.b16 %v769
    %v1106 = vunpack.c.l.b16 %v770
    %v1107 = vunpack.c.l.b16 %v771
    %v1108 = vpack.c.b16 %v1105, %v1104
    %v1109 = vpack.c.b16 %v1107, %v1106
    %v1113 = vsel %vm95, %v1098, 0
    %v1116 = vsel %vm95, %v1099, 0
    %1118 = vmatprep.subr.bf16.mxu0 0
    %1119 = vmatpush1.bf16.msra.mxu0 %v1108
    %1120 = vmatprep.subr.bf16.mxu0 0
    %1121 = vmatpush1.bf16.msra.mxu0 %v1109
    %1122 = vmatprep.subr.bf16.mxu0 0
    %1123 = vmatpush1.bf16.msra.mxu0 0
    %1124 = vmatprep.subr.bf16.mxu0 0
    %1125 = vmatpush1.bf16.msra.mxu0 0
    %1126 = vmatprep.subr.bf16.mxu0 0
    %1127 = vmatpush1.bf16.msra.mxu0 0
    %1128 = vmatprep.subr.bf16.mxu0 0
    %1129 = vmatpush1.bf16.msra.mxu0 0
    %1130 = vmatprep.subr.bf16.mxu0 0
    %1131 = vmatpush1.bf16.msra.mxu0 0
    %1132 = vmatprep.subr.bf16.mxu0 0
    %1133 = vmatpush1.bf16.msra.mxu0 0
    %1134 = vmatprep.subr.bf16.mxu0 0
    %1135 = vmatpush1.bf16.msra.mxu0 0
    %1136 = vmatprep.subr.bf16.mxu0 0
    %1137 = vmatpush1.bf16.msra.mxu0 0
    %1138 = vmatprep.subr.bf16.mxu0 0
    %1139 = vmatpush1.bf16.msra.mxu0 0
    %1140 = vmatprep.subr.bf16.mxu0 0
    %1141 = vmatpush1.bf16.msra.mxu0 0
    %1142 = vmatprep.subr.bf16.mxu0 0
    %1143 = vmatpush1.bf16.msra.mxu0 0
    %1144 = vmatprep.subr.bf16.mxu0 0
    %1145 = vmatpush1.bf16.msra.mxu0 0
    %1146 = vmatprep.subr.bf16.mxu0 0
    %1147 = vmatpush1.bf16.msra.mxu0 0
    %1148 = vmatprep.subr.bf16.mxu0 0
    %1149 = vmatpush1.bf16.msra.mxu0 0
    %1150 = vmatprep.mubr.bf16.mxu0 0
    %1151 = vmatmul.mubr.bf16.gmra.mrb[0].mxu0 %v1113
    %v1152 = vpop.f32.mrb[0].mxu0
    %v1153 = vadd.f32 0.0, %v1152
    %v1154 = vpop.f32.mrb[0].mxu0
    %v1155 = vpop.f32.mrb[0].mxu0
    %v1156 = vadd.f32 0.0, %v1155
    %v1157 = vpop.f32.mrb[0].mxu0
    %1158 = vmatprep.mubr.bf16.mxu0 0
    %1159 = vmatmul.mubr.bf16.gmra.mrb[0].mxu0 %v1116
    %v1160 = vpop.f32.mrb[0].mxu0
    %v1161 = vadd.f32 0.0, %v1160
    %v1162 = vpop.f32.mrb[0].mxu0
    %v1163 = vpop.f32.mrb[0].mxu0
    %v1164 = vadd.f32 0.0, %v1163
    %v1165 = vpop.f32.mrb[0].mxu0
    %1166 = vdwg.mxu0
    %v1171 = vunpack.c.l.b16 %v764
    %v1172 = vunpack.c.l.b16 %v765
    %v1173 = vunpack.c.l.b16 %v766
    %v1174 = vunpack.c.l.b16 %v767
    %v1175 = vpack.c.b16 %v1172, %v1171
    %v1176 = vpack.c.b16 %v1174, %v1173
    %v1180 = vsel %vm95, %v1092, 0
    %v1183 = vsel %vm95, %v1093, 0
    %1185 = vmatprep.subr.bf16.mxu0 0
    %1186 = vmatpush1.bf16.msra.mxu0 %v1175
    %1187 = vmatprep.subr.bf16.mxu0 0
    %1188 = vmatpush1.bf16.msra.mxu0 %v1176
    %1189 = vmatprep.subr.bf16.mxu0 0
    %1190 = vmatpush1.bf16.msra.mxu0 0
    %1191 = vmatprep.subr.bf16.mxu0 0
    %1192 = vmatpush1.bf16.msra.mxu0 0
    %1193 = vmatprep.subr.bf16.mxu0 0
    %1194 = vmatpush1.bf16.msra.mxu0 0
    %1195 = vmatprep.subr.bf16.mxu0 0
    %1196 = vmatpush1.bf16.msra.mxu0 0
    %1197 = vmatprep.subr.bf16.mxu0 0
    %1198 = vmatpush1.bf16.msra.mxu0 0
    %1199 = vmatprep.subr.bf16.mxu0 0
    %1200 = vmatpush1.bf16.msra.mxu0 0
    %1201 = vmatprep.subr.bf16.mxu0 0
    %1202 = vmatpush1.bf16.msra.mxu0 0
    %1203 = vmatprep.subr.bf16.mxu0 0
    %1204 = vmatpush1.bf16.msra.mxu0 0
    %1205 = vmatprep.subr.bf16.mxu0 0
    %1206 = vmatpush1.bf16.msra.mxu0 0
    %1207 = vmatprep.subr.bf16.mxu0 0
    %1208 = vmatpush1.bf16.msra.mxu0 0
    %1209 = vmatprep.subr.bf16.mxu0 0
    %1210 = vmatpush1.bf16.msra.mxu0 0
    %1211 = vmatprep.subr.bf16.mxu0 0
    %1212 = vmatpush1.bf16.msra.mxu0 0
    %1213 = vmatprep.subr.bf16.mxu0 0
    %1214 = vmatpush1.bf16.msra.mxu0 0
    %1215 = vmatprep.subr.bf16.mxu0 0
    %1216 = vmatpush1.bf16.msra.mxu0 0
    %1217 = vmatprep.mubr.bf16.mxu0 0
    %1218 = vmatmul.mubr.bf16.gmra.mrb[0].mxu0 %v1180
    %v1219 = vpop.f32.mrb[0].mxu0
    %v1220 = vadd.f32 %v1153, %v1219
    %v1221 = vpop.f32.mrb[0].mxu0
    %v1222 = vpop.f32.mrb[0].mxu0
    %v1223 = vadd.f32 %v1156, %v1222
    %v1224 = vpop.f32.mrb[0].mxu0
    %1225 = vmatprep.mubr.bf16.mxu0 0
    %1226 = vmatmul.mubr.bf16.gmra.mrb[0].mxu0 %v1183
    %v1227 = vpop.f32.mrb[0].mxu0
    %v1228 = vadd.f32 %v1161, %v1227
    %v1229 = vpop.f32.mrb[0].mxu0
    %v1230 = vpop.f32.mrb[0].mxu0
    %v1231 = vadd.f32 %v1164, %v1230
    %v1232 = vpop.f32.mrb[0].mxu0
    %1233 = vdwg.mxu0
    %v1234 = vld [vmem:[#allocation3 + $0xa] sm:$0xff]
    %v1235 = vld [vmem:[#allocation3 + $0x12] sm:$0xff]
    %v1236 = vld [vmem:[#allocation3 + $0x2a] sm:$0xff]
    %v1237 = vld [vmem:[#allocation3 + $0x32] sm:$0xff]
    %v1238 = vpack.c.bf16 %v1235, %v1234
    %v1239 = vpack.c.bf16 %v1237, %v1236
    %v1244 = vunpack.c.l.b16 %v772
    %v1245 = vunpack.c.l.b16 %v773
    %v1246 = vunpack.c.l.b16 %v774
    %v1247 = vunpack.c.l.b16 %v775
    %v1248 = vpack.c.b16 %v1245, %v1244
    %v1249 = vpack.c.b16 %v1247, %v1246
    %v1253 = vsel %vm95, %v1238, 0
    %v1256 = vsel %vm95, %v1239, 0
    %1258 = vmatprep.subr.bf16.mxu0 0
    %1259 = vmatpush1.bf16.msra.mxu0 %v1248
    %1260 = vmatprep.subr.bf16.mxu0 0
    %1261 = vmatpush1.bf16.msra.mxu0 %v1249
    %1262 = vmatprep.subr.bf16.mxu0 0
    %1263 = vmatpush1.bf16.msra.mxu0 0
    %1264 = vmatprep.subr.bf16.mxu0 0
    %1265 = vmatpush1.bf16.msra.mxu0 0
    %1266 = vmatprep.subr.bf16.mxu0 0
    %1267 = vmatpush1.bf16.msra.mxu0 0
    %1268 = vmatprep.subr.bf16.mxu0 0
    %1269 = vmatpush1.bf16.msra.mxu0 0
    %1270 = vmatprep.subr.bf16.mxu0 0
    %1271 = vmatpush1.bf16.msra.mxu0 0
    %1272 = vmatprep.subr.bf16.mxu0 0
    %1273 = vmatpush1.bf16.msra.mxu0 0
    %1274 = vmatprep.subr.bf16.mxu0 0
    %1275 = vmatpush1.bf16.msra.mxu0 0
    %1276 = vmatprep.subr.bf16.mxu0 0
    %1277 = vmatpush1.bf16.msra.mxu0 0
    %1278 = vmatprep.subr.bf16.mxu0 0
    %1279 = vmatpush1.bf16.msra.mxu0 0
    %1280 = vmatprep.subr.bf16.mxu0 0
    %1281 = vmatpush1.bf16.msra.mxu0 0
    %1282 = vmatprep.subr.bf16.mxu0 0
    %1283 = vmatpush1.bf16.msra.mxu0 0
    %1284 = vmatprep.subr.bf16.mxu0 0
    %1285 = vmatpush1.bf16.msra.mxu0 0
    %1286 = vmatprep.subr.bf16.mxu0 0
    %1287 = vmatpush1.bf16.msra.mxu0 0
    %1288 = vmatprep.subr.bf16.mxu0 0
    %1289 = vmatpush1.bf16.msra.mxu0 0
    %1290 = vmatprep.mubr.bf16.mxu0 0
    %1291 = vmatmul.mubr.bf16.gmra.mrb[0].mxu0 %v1253
    %v1292 = vpop.f32.mrb[0].mxu0
    %v1293 = vadd.f32 0.0, %v1292
    %v1294 = vpop.f32.mrb[0].mxu0
    %v1295 = vpop.f32.mrb[0].mxu0
    %v1296 = vadd.f32 0.0, %v1295
    %v1297 = vpop.f32.mrb[0].mxu0
    %1298 = vmatprep.mubr.bf16.mxu0 0
    %1299 = vmatmul.mubr.bf16.gmra.mrb[0].mxu0 %v1256
    %v1300 = vpop.f32.mrb[0].mxu0
    %v1301 = vadd.f32 0.0, %v1300
    %v1302 = vpop.f32.mrb[0].mxu0
    %v1303 = vpop.f32.mrb[0].mxu0
    %v1304 = vadd.f32 0.0, %v1303
    %v1305 = vpop.f32.mrb[0].mxu0
    %1306 = vdwg.mxu0
    %v1307 = vadd.f32 %v1220, %v1293
    %v1308 = vadd.f32 %v1223, %v1296
    %v1309 = vadd.f32 %v1228, %v1301
    %v1310 = vadd.f32 %v1231, %v1304
    %v1312 = vlaneseq
    %v1313 = vshrl.u32 %v1312, 7
    %v1314 = vsub.s32 0, %v1313
    %v1315 = vrot.slane %v1083, %v1314
    %v1317 = vadd.f32 %v1307, %v1315
    %v1318 = vadd.f32 %v1308, %v1315
    %v1319 = vadd.f32 %v1309, %v1315
    %v1320 = vadd.f32 %v1310, %v1315
    %v1321 = vsel %vm95, %v1317, 0.0
    %v1322 = vsel %vm95, %v1318, 0.0
    %v1323 = vadd.f32 %v1321, %v1322
    %v1324 = vsel %vm95, %v1319, 0.0
    %v1325 = vadd.f32 %v1323, %v1324
    %v1326 = vsel %vm95, %v1320, 0.0
    %v1327 = vadd.f32 %v1325, %v1326
    %v1328 = vrot.slane %v1327, 4
    %v1329 = vadd.f32 %v1327, %v1328
    %v1330 = vrot.slane %v1329, 2
    %v1331 = vadd.f32 %v1329, %v1330
    %v1332 = vrot.slane %v1331, 1
    %v1333 = vadd.f32 %v1331, %v1332
    %v1334 = vmul.f32 %v1317, %v1317
    %v1335 = vmul.f32 %v1318, %v1318
    %v1336 = vmul.f32 %v1319, %v1319
    %v1337 = vmul.f32 %v1320, %v1320
    %v1338 = vsel %vm95, %v1334, 0.0
    %v1339 = vsel %vm95, %v1335, 0.0
    %v1340 = vadd.f32 %v1338, %v1339
    %v1341 = vsel %vm95, %v1336, 0.0
    %v1342 = vadd.f32 %v1340, %v1341
    %v1343 = vsel %vm95, %v1337, 0.0
    %v1344 = vadd.f32 %v1342, %v1343
    %v1345 = vrot.slane %v1344, 4
    %v1346 = vadd.f32 %v1344, %v1345
    %v1347 = vrot.slane %v1346, 2
    %v1348 = vadd.f32 %v1346, %v1347
    %v1349 = vrot.slane %v1348, 1
    %v1350 = vadd.f32 %v1348, %v1349
    %v1351 = vmul.f32 %v1333, 0.03125
    %v1352 = vmul.f32 %v1350, 0.03125
    %v1353 = vmul.f32 %v1351, %v1351
    %v1354 = vsub.f32 %v1352, %v1353
    %v1355 = vadd.f32 %v1354, 1e-05
    %v1356 = vrsqrt.pop %v1355
    %v1357 = vmul.f32 %v1085, %v1356
    %v1359 = vlaneseq
    %v1360 = vshrl.u32 %v1359, 7
    %v1361 = vsub.s32 0, %v1360
    %v1362 = vrot.slane %v1357, %v1361
    %v1364 = vmul.f32 %v1317, %v1362
    %v1365 = vmul.f32 %v1318, %v1362
    %v1366 = vmul.f32 %v1319, %v1362
    %v1367 = vmul.f32 %v1320, %v1362
    %v1368 = vmul.f32 %v1351, %v1357
    %v1369 = vsub.f32 %v1087, %v1368
    %v1371 = vlaneseq
    %v1372 = vshrl.u32 %v1371, 7
    %v1373 = vsub.s32 0, %v1372
    %v1374 = vrot.slane %v1369, %v1373
    %v1376 = vadd.f32 %v1364, %v1374
    %v1377 = vadd.f32 %v1365, %v1374
    %v1378 = vadd.f32 %v1366, %v1374
    %v1379 = vadd.f32 %v1367, %v1374
    %v1380 = vld [vmem:[#allocation2 + $0x8] sm:$0xff]
    %v1381 = vld [vmem:[#allocation2 + $0x10] sm:$0xff]
    %v1382 = vld [vmem:[#allocation2 + $0x28] sm:$0xff]
    %v1383 = vld [vmem:[#allocation2 + $0x30] sm:$0xff]
    %v1384 = vadd.f32 %v1376, %v1380
    %v1385 = vadd.f32 %v1377, %v1381
    %v1386 = vadd.f32 %v1378, %v1382
    %v1387 = vadd.f32 %v1379, %v1383
    %v1388 = vmax.f32 %v1384, 0.0
    %v1389 = vmax.f32 %v1385, 0.0
    %v1390 = vmax.f32 %v1386, 0.0
    %v1391 = vmax.f32 %v1387, 0.0
    %1392 = vst.msk [vmem:[#allocation2 + $0x8] sm:$0xff] %vm95, %v1388
    %1393 = vst.msk [vmem:[#allocation2 + $0x10] sm:$0xff] %vm95, %v1389
    %1394 = vst.msk [vmem:[#allocation2 + $0x28] sm:$0xff] %vm95, %v1390
    %1395 = vst.msk [vmem:[#allocation2 + $0x30] sm:$0xff] %vm95, %v1391
    %s1396 = scalar_lea.vmem [#allocation7], 96
    %v1397 = vld [vmem:[%s1396] sm:$0xf]
    %v1398 = vld [vmem:[%s1396 + $0x4] sm:$0xf]
    %v1399 = vld [vmem:[%s1396 + $0x8] sm:$0xf]
    %v1400 = vld [vmem:[%s1396 + $0xc] sm:$0xf]
    %v1401 = vld [vmem:[%s1396 + $0x10] sm:$0xf]
    %v1402 = vld [vmem:[%s1396 + $0x14] sm:$0xf]
    %v1403 = vld [vmem:[%s1396 + $0x18] sm:$0xf]
    %v1404 = vld [vmem:[%s1396 + $0x1c] sm:$0xf]
    %v1405 = vld [vmem:[%s1396 + $0x20] sm:$0xf]
    %v1406 = vld [vmem:[%s1396 + $0x24] sm:$0xf]
    %v1407 = vld [vmem:[%s1396 + $0x28] sm:$0xf]
    %v1408 = vld [vmem:[%s1396 + $0x2c] sm:$0xf]
    %s1409 = scalar_lea.vmem [#allocation9], 96
    %v1410 = vld [vmem:[%s1409] sm:$0xf]
    %v1411 = vld [vmem:[%s1409 + $0x4] sm:$0xf]
    %v1412 = vld [vmem:[%s1409 + $0x8] sm:$0xf]
    %v1413 = vld [vmem:[%s1409 + $0xc] sm:$0xf]
    %v1414 = vld [vmem:[%s1409 + $0x10] sm:$0xf]
    %v1415 = vld [vmem:[%s1409 + $0x14] sm:$0xf]
    %v1416 = vld [vmem:[%s1409 + $0x18] sm:$0xf]
    %v1417 = vld [vmem:[%s1409 + $0x1c] sm:$0xf]
    %v1418 = vld [vmem:[%s1409 + $0x20] sm:$0xf]
    %v1419 = vld [vmem:[%s1409 + $0x24] sm:$0xf]
    %v1420 = vld [vmem:[%s1409 + $0x28] sm:$0xf]
    %v1421 = vld [vmem:[%s1409 + $0x2c] sm:$0xf]
    %s1422 = scalar_lea.vmem %s2, 2
    %v1423 = vld [vmem:[%s1422] sm:$0x1]
    %s1424 = scalar_lea.vmem %s3, 2
    %v1425 = vld [vmem:[%s1424] sm:$0x1]
    %s1426 = scalar_lea.vmem %s4, 2
    %v1427 = vld [vmem:[%s1426] sm:$0x1]
    %v1428 = vld [vmem:[#allocation2 + $0x4] sm:$0xff]
    %v1429 = vld [vmem:[#allocation2 + $0xc] sm:$0xff]
    %v1430 = vld [vmem:[#allocation2 + $0x24] sm:$0xff]
    %v1431 = vld [vmem:[#allocation2 + $0x2c] sm:$0xff]
    %v1432 = vpack.c.bf16 %v1429, %v1428
    %v1433 = vpack.c.bf16 %v1431, %v1430
    %v1434 = vld [vmem:[#allocation2 + $0x8] sm:$0xff]
    %v1435 = vld [vmem:[#allocation2 + $0x10] sm:$0xff]
    %v1436 = vld [vmem:[#allocation2 + $0x28] sm:$0xff]
    %v1437 = vld [vmem:[#allocation2 + $0x30] sm:$0xff]
    %v1438 = vpack.c.bf16 %v1435, %v1434
    %v1439 = vpack.c.bf16 %v1437, %v1436
    %v1444 = vunpack.c.l.b16 %v1401
    %v1445 = vunpack.c.l.b16 %v1402
    %v1446 = vunpack.c.l.b16 %v1403
    %v1447 = vunpack.c.l.b16 %v1404
    %v1448 = vpack.c.b16 %v1445, %v1444
    %v1449 = vpack.c.b16 %v1447, %v1446
    %v1453 = vsel %vm95, %v1438, 0
    %v1456 = vsel %vm95, %v1439, 0
    %1458 = vmatprep.subr.bf16.mxu0 0
    %1459 = vmatpush1.bf16.msra.mxu0 %v1448
    %1460 = vmatprep.subr.bf16.mxu0 0
    %1461 = vmatpush1.bf16.msra.mxu0 %v1449
    %1462 = vmatprep.subr.bf16.mxu0 0
    %1463 = vmatpush1.bf16.msra.mxu0 0
    %1464 = vmatprep.subr.bf16.mxu0 0
    %1465 = vmatpush1.bf16.msra.mxu0 0
    %1466 = vmatprep.subr.bf16.mxu0 0
    %1467 = vmatpush1.bf16.msra.mxu0 0
    %1468 = vmatprep.subr.bf16.mxu0 0
    %1469 = vmatpush1.bf16.msra.mxu0 0
    %1470 = vmatprep.subr.bf16.mxu0 0
    %1471 = vmatpush1.bf16.msra.mxu0 0
    %1472 = vmatprep.subr.bf16.mxu0 0
    %1473 = vmatpush1.bf16.msra.mxu0 0
    %1474 = vmatprep.subr.bf16.mxu0 0
    %1475 = vmatpush1.bf16.msra.mxu0 0
    %1476 = vmatprep.subr.bf16.mxu0 0
    %1477 = vmatpush1.bf16.msra.mxu0 0
    %1478 = vmatprep.subr.bf16.mxu0 0
    %1479 = vmatpush1.bf16.msra.mxu0 0
    %1480 = vmatprep.subr.bf16.mxu0 0
    %1481 = vmatpush1.bf16.msra.mxu0 0
    %1482 = vmatprep.subr.bf16.mxu0 0
    %1483 = vmatpush1.bf16.msra.mxu0 0
    %1484 = vmatprep.subr.bf16.mxu0 0
    %1485 = vmatpush1.bf16.msra.mxu0 0
    %1486 = vmatprep.subr.bf16.mxu0 0
    %1487 = vmatpush1.bf16.msra.mxu0 0
    %1488 = vmatprep.subr.bf16.mxu0 0
    %1489 = vmatpush1.bf16.msra.mxu0 0
    %1490 = vmatprep.mubr.bf16.mxu0 0
    %1491 = vmatmul.mubr.bf16.gmra.mrb[0].mxu0 %v1453
    %v1492 = vpop.f32.mrb[0].mxu0
    %v1493 = vadd.f32 0.0, %v1492
    %v1494 = vpop.f32.mrb[0].mxu0
    %v1495 = vpop.f32.mrb[0].mxu0
    %v1496 = vadd.f32 0.0, %v1495
    %v1497 = vpop.f32.mrb[0].mxu0
    %1498 = vmatprep.mubr.bf16.mxu0 0
    %1499 = vmatmul.mubr.bf16.gmra.mrb[0].mxu0 %v1456
    %v1500 = vpop.f32.mrb[0].mxu0
    %v1501 = vadd.f32 0.0, %v1500
    %v1502 = vpop.f32.mrb[0].mxu0
    %v1503 = vpop.f32.mrb[0].mxu0
    %v1504 = vadd.f32 0.0, %v1503
    %v1505 = vpop.f32.mrb[0].mxu0
    %1506 = vdwg.mxu0
    %v1511 = vunpack.c.l.b16 %v1397
    %v1512 = vunpack.c.l.b16 %v1398
    %v1513 = vunpack.c.l.b16 %v1399
    %v1514 = vunpack.c.l.b16 %v1400
    %v1515 = vpack.c.b16 %v1512, %v1511
    %v1516 = vpack.c.b16 %v1514, %v1513
    %v1520 = vsel %vm95, %v1432, 0
    %v1523 = vsel %vm95, %v1433, 0
    %1525 = vmatprep.subr.bf16.mxu0 0
    %1526 = vmatpush1.bf16.msra.mxu0 %v1515
    %1527 = vmatprep.subr.bf16.mxu0 0
    %1528 = vmatpush1.bf16.msra.mxu0 %v1516
    %1529 = vmatprep.subr.bf16.mxu0 0
    %1530 = vmatpush1.bf16.msra.mxu0 0
    %1531 = vmatprep.subr.bf16.mxu0 0
    %1532 = vmatpush1.bf16.msra.mxu0 0
    %1533 = vmatprep.subr.bf16.mxu0 0
    %1534 = vmatpush1.bf16.msra.mxu0 0
    %1535 = vmatprep.subr.bf16.mxu0 0
    %1536 = vmatpush1.bf16.msra.mxu0 0
    %1537 = vmatprep.subr.bf16.mxu0 0
    %1538 = vmatpush1.bf16.msra.mxu0 0
    %1539 = vmatprep.subr.bf16.mxu0 0
    %1540 = vmatpush1.bf16.msra.mxu0 0
    %1541 = vmatprep.subr.bf16.mxu0 0
    %1542 = vmatpush1.bf16.msra.mxu0 0
    %1543 = vmatprep.subr.bf16.mxu0 0
    %1544 = vmatpush1.bf16.msra.mxu0 0
    %1545 = vmatprep.subr.bf16.mxu0 0
    %1546 = vmatpush1.bf16.msra.mxu0 0
    %1547 = vmatprep.subr.bf16.mxu0 0
    %1548 = vmatpush1.bf16.msra.mxu0 0
    %1549 = vmatprep.subr.bf16.mxu0 0
    %1550 = vmatpush1.bf16.msra.mxu0 0
    %1551 = vmatprep.subr.bf16.mxu0 0
    %1552 = vmatpush1.bf16.msra.mxu0 0
    %1553 = vmatprep.subr.bf16.mxu0 0
    %1554 = vmatpush1.bf16.msra.mxu0 0
    %1555 = vmatprep.subr.bf16.mxu0 0
    %1556 = vmatpush1.bf16.msra.mxu0 0
    %1557 = vmatprep.mubr.bf16.mxu0 0
    %1558 = vmatmul.mubr.bf16.gmra.mrb[0].mxu0 %v1520
    %v1559 = vpop.f32.mrb[0].mxu0
    %v1560 = vadd.f32 %v1493, %v1559
    %v1561 = vpop.f32.mrb[0].mxu0
    %v1562 = vpop.f32.mrb[0].mxu0
    %v1563 = vadd.f32 %v1496, %v1562
    %v1564 = vpop.f32.mrb[0].mxu0
    %1565 = vmatprep.mubr.bf16.mxu0 0
    %1566 = vmatmul.mubr.bf16.gmra.mrb[0].mxu0 %v1523
    %v1567 = vpop.f32.mrb[0].mxu0
    %v1568 = vadd.f32 %v1501, %v1567
    %v1569 = vpop.f32.mrb[0].mxu0
    %v1570 = vpop.f32.mrb[0].mxu0
    %v1571 = vadd.f32 %v1504, %v1570
    %v1572 = vpop.f32.mrb[0].mxu0
    %1573 = vdwg.mxu0
    %v1574 = vld [vmem:[#allocation2 + $0xc] sm:$0xff]
    %v1575 = vld [vmem:[#allocation2 + $0x14] sm:$0xff]
    %v1576 = vld [vmem:[#allocation2 + $0x2c] sm:$0xff]
    %v1577 = vld [vmem:[#allocation2 + $0x34] sm:$0xff]
    %v1578 = vpack.c.bf16 %v1575, %v1574
    %v1579 = vpack.c.bf16 %v1577, %v1576
    %v1584 = vunpack.c.l.b16 %v1405
    %v1585 = vunpack.c.l.b16 %v1406
    %v1586 = vunpack.c.l.b16 %v1407
    %v1587 = vunpack.c.l.b16 %v1408
    %v1588 = vpack.c.b16 %v1585, %v1584
    %v1589 = vpack.c.b16 %v1587, %v1586
    %v1593 = vsel %vm95, %v1578, 0
    %v1596 = vsel %vm95, %v1579, 0
    %1598 = vmatprep.subr.bf16.mxu0 0
    %1599 = vmatpush1.bf16.msra.mxu0 %v1588
    %1600 = vmatprep.subr.bf16.mxu0 0
    %1601 = vmatpush1.bf16.msra.mxu0 %v1589
    %1602 = vmatprep.subr.bf16.mxu0 0
    %1603 = vmatpush1.bf16.msra.mxu0 0
    %1604 = vmatprep.subr.bf16.mxu0 0
    %1605 = vmatpush1.bf16.msra.mxu0 0
    %1606 = vmatprep.subr.bf16.mxu0 0
    %1607 = vmatpush1.bf16.msra.mxu0 0
    %1608 = vmatprep.subr.bf16.mxu0 0
    %1609 = vmatpush1.bf16.msra.mxu0 0
    %1610 = vmatprep.subr.bf16.mxu0 0
    %1611 = vmatpush1.bf16.msra.mxu0 0
    %1612 = vmatprep.subr.bf16.mxu0 0
    %1613 = vmatpush1.bf16.msra.mxu0 0
    %1614 = vmatprep.subr.bf16.mxu0 0
    %1615 = vmatpush1.bf16.msra.mxu0 0
    %1616 = vmatprep.subr.bf16.mxu0 0
    %1617 = vmatpush1.bf16.msra.mxu0 0
    %1618 = vmatprep.subr.bf16.mxu0 0
    %1619 = vmatpush1.bf16.msra.mxu0 0
    %1620 = vmatprep.subr.bf16.mxu0 0
    %1621 = vmatpush1.bf16.msra.mxu0 0
    %1622 = vmatprep.subr.bf16.mxu0 0
    %1623 = vmatpush1.bf16.msra.mxu0 0
    %1624 = vmatprep.subr.bf16.mxu0 0
    %1625 = vmatpush1.bf16.msra.mxu0 0
    %1626 = vmatprep.subr.bf16.mxu0 0
    %1627 = vmatpush1.bf16.msra.mxu0 0
    %1628 = vmatprep.subr.bf16.mxu0 0
    %1629 = vmatpush1.bf16.msra.mxu0 0
    %1630 = vmatprep.mubr.bf16.mxu0 0
    %1631 = vmatmul.mubr.bf16.gmra.mrb[0].mxu0 %v1593
    %v1632 = vpop.f32.mrb[0].mxu0
    %v1633 = vadd.f32 0.0, %v1632
    %v1634 = vpop.f32.mrb[0].mxu0
    %v1635 = vpop.f32.mrb[0].mxu0
    %v1636 = vadd.f32 0.0, %v1635
    %v1637 = vpop.f32.mrb[0].mxu0
    %1638 = vmatprep.mubr.bf16.mxu0 0
    %1639 = vmatmul.mubr.bf16.gmra.mrb[0].mxu0 %v1596
    %v1640 = vpop.f32.mrb[0].mxu0
    %v1641 = vadd.f32 0.0, %v1640
    %v1642 = vpop.f32.mrb[0].mxu0
    %v1643 = vpop.f32.mrb[0].mxu0
    %v1644 = vadd.f32 0.0, %v1643
    %v1645 = vpop.f32.mrb[0].mxu0
    %1646 = vdwg.mxu0
    %v1647 = vadd.f32 %v1560, %v1633
    %v1648 = vadd.f32 %v1563, %v1636
    %v1649 = vadd.f32 %v1568, %v1641
    %v1650 = vadd.f32 %v1571, %v1644
    %v1652 = vlaneseq
    %v1653 = vshrl.u32 %v1652, 7
    %v1654 = vsub.s32 0, %v1653
    %v1655 = vrot.slane %v1423, %v1654
    %v1657 = vadd.f32 %v1647, %v1655
    %v1658 = vadd.f32 %v1648, %v1655
    %v1659 = vadd.f32 %v1649, %v1655
    %v1660 = vadd.f32 %v1650, %v1655
    %v1661 = vsel %vm95, %v1657, 0.0
    %v1662 = vsel %vm95, %v1658, 0.0
    %v1663 = vadd.f32 %v1661, %v1662
    %v1664 = vsel %vm95, %v1659, 0.0
    %v1665 = vadd.f32 %v1663, %v1664
    %v1666 = vsel %vm95, %v1660, 0.0
    %v1667 = vadd.f32 %v1665, %v1666
    %v1668 = vrot.slane %v1667, 4
    %v1669 = vadd.f32 %v1667, %v1668
    %v1670 = vrot.slane %v1669, 2
    %v1671 = vadd.f32 %v1669, %v1670
    %v1672 = vrot.slane %v1671, 1
    %v1673 = vadd.f32 %v1671, %v1672
    %v1674 = vmul.f32 %v1657, %v1657
    %v1675 = vmul.f32 %v1658, %v1658
    %v1676 = vmul.f32 %v1659, %v1659
    %v1677 = vmul.f32 %v1660, %v1660
    %v1678 = vsel %vm95, %v1674, 0.0
    %v1679 = vsel %vm95, %v1675, 0.0
    %v1680 = vadd.f32 %v1678, %v1679
    %v1681 = vsel %vm95, %v1676, 0.0
    %v1682 = vadd.f32 %v1680, %v1681
    %v1683 = vsel %vm95, %v1677, 0.0
    %v1684 = vadd.f32 %v1682, %v1683
    %v1685 = vrot.slane %v1684, 4
    %v1686 = vadd.f32 %v1684, %v1685
    %v1687 = vrot.slane %v1686, 2
    %v1688 = vadd.f32 %v1686, %v1687
    %v1689 = vrot.slane %v1688, 1
    %v1690 = vadd.f32 %v1688, %v1689
    %v1691 = vmul.f32 %v1673, 0.03125
    %v1692 = vmul.f32 %v1690, 0.03125
    %v1693 = vmul.f32 %v1691, %v1691
    %v1694 = vsub.f32 %v1692, %v1693
    %v1695 = vadd.f32 %v1694, 1e-05
    %v1696 = vrsqrt.pop %v1695
    %v1697 = vmul.f32 %v1425, %v1696
    %v1699 = vlaneseq
    %v1700 = vshrl.u32 %v1699, 7
    %v1701 = vsub.s32 0, %v1700
    %v1702 = vrot.slane %v1697, %v1701
    %v1704 = vmul.f32 %v1657, %v1702
    %v1705 = vmul.f32 %v1658, %v1702
    %v1706 = vmul.f32 %v1659, %v1702
    %v1707 = vmul.f32 %v1660, %v1702
    %v1708 = vmul.f32 %v1691, %v1697
    %v1709 = vsub.f32 %v1427, %v1708
    %v1711 = vlaneseq
    %v1712 = vshrl.u32 %v1711, 7
    %v1713 = vsub.s32 0, %v1712
    %v1714 = vrot.slane %v1709, %v1713
    %v1716 = vadd.f32 %v1704, %v1714
    %v1717 = vadd.f32 %v1705, %v1714
    %v1718 = vadd.f32 %v1706, %v1714
    %v1719 = vadd.f32 %v1707, %v1714
    %v1720 = vmax.f32 %v1716, 0.0
    %v1721 = vmax.f32 %v1717, 0.0
    %v1722 = vmax.f32 %v1718, 0.0
    %v1723 = vmax.f32 %v1719, 0.0
    %1724 = vst.msk [vmem:[#allocation3 + $0x8] sm:$0xff] %vm95, %v1720
    %1725 = vst.msk [vmem:[#allocation3 + $0x10] sm:$0xff] %vm95, %v1721
    %1726 = vst.msk [vmem:[#allocation3 + $0x28] sm:$0xff] %vm95, %v1722
    %1727 = vst.msk [vmem:[#allocation3 + $0x30] sm:$0xff] %vm95, %v1723
    %s1728 = scalar_lea.vmem %s6, 2
    %v1729 = vld [vmem:[%s1728] sm:$0x1]
    %s1730 = scalar_lea.vmem %s7, 2
    %v1731 = vld [vmem:[%s1730] sm:$0x1]
    %s1732 = scalar_lea.vmem %s8, 2
    %v1733 = vld [vmem:[%s1732] sm:$0x1]
    %v1734 = vld [vmem:[#allocation3 + $0x4] sm:$0xff]
    %v1735 = vld [vmem:[#allocation3 + $0xc] sm:$0xff]
    %v1736 = vld [vmem:[#allocation3 + $0x24] sm:$0xff]
    %v1737 = vld [vmem:[#allocation3 + $0x2c] sm:$0xff]
    %v1738 = vpack.c.bf16 %v1735, %v1734
    %v1739 = vpack.c.bf16 %v1737, %v1736
    %v1740 = vld [vmem:[#allocation3 + $0x8] sm:$0xff]
    %v1741 = vld [vmem:[#allocation3 + $0x10] sm:$0xff]
    %v1742 = vld [vmem:[#allocation3 + $0x28] sm:$0xff]
    %v1743 = vld [vmem:[#allocation3 + $0x30] sm:$0xff]
    %v1744 = vpack.c.bf16 %v1741, %v1740
    %v1745 = vpack.c.bf16 %v1743, %v1742
    %v1750 = vunpack.c.l.b16 %v1414
    %v1751 = vunpack.c.l.b16 %v1415
    %v1752 = vunpack.c.l.b16 %v1416
    %v1753 = vunpack.c.l.b16 %v1417
    %v1754 = vpack.c.b16 %v1751, %v1750
    %v1755 = vpack.c.b16 %v1753, %v1752
    %v1759 = vsel %vm95, %v1744, 0
    %v1762 = vsel %vm95, %v1745, 0
    %1764 = vmatprep.subr.bf16.mxu0 0
    %1765 = vmatpush1.bf16.msra.mxu0 %v1754
    %1766 = vmatprep.subr.bf16.mxu0 0
    %1767 = vmatpush1.bf16.msra.mxu0 %v1755
    %1768 = vmatprep.subr.bf16.mxu0 0
    %1769 = vmatpush1.bf16.msra.mxu0 0
    %1770 = vmatprep.subr.bf16.mxu0 0
    %1771 = vmatpush1.bf16.msra.mxu0 0
    %1772 = vmatprep.subr.bf16.mxu0 0
    %1773 = vmatpush1.bf16.msra.mxu0 0
    %1774 = vmatprep.subr.bf16.mxu0 0
    %1775 = vmatpush1.bf16.msra.mxu0 0
    %1776 = vmatprep.subr.bf16.mxu0 0
    %1777 = vmatpush1.bf16.msra.mxu0 0
    %1778 = vmatprep.subr.bf16.mxu0 0
    %1779 = vmatpush1.bf16.msra.mxu0 0
    %1780 = vmatprep.subr.bf16.mxu0 0
    %1781 = vmatpush1.bf16.msra.mxu0 0
    %1782 = vmatprep.subr.bf16.mxu0 0
    %1783 = vmatpush1.bf16.msra.mxu0 0
    %1784 = vmatprep.subr.bf16.mxu0 0
    %1785 = vmatpush1.bf16.msra.mxu0 0
    %1786 = vmatprep.subr.bf16.mxu0 0
    %1787 = vmatpush1.bf16.msra.mxu0 0
    %1788 = vmatprep.subr.bf16.mxu0 0
    %1789 = vmatpush1.bf16.msra.mxu0 0
    %1790 = vmatprep.subr.bf16.mxu0 0
    %1791 = vmatpush1.bf16.msra.mxu0 0
    %1792 = vmatprep.subr.bf16.mxu0 0
    %1793 = vmatpush1.bf16.msra.mxu0 0
    %1794 = vmatprep.subr.bf16.mxu0 0
    %1795 = vmatpush1.bf16.msra.mxu0 0
    %1796 = vmatprep.mubr.bf16.mxu0 0
    %1797 = vmatmul.mubr.bf16.gmra.mrb[0].mxu0 %v1759
    %v1798 = vpop.f32.mrb[0].mxu0
    %v1799 = vadd.f32 0.0, %v1798
    %v1800 = vpop.f32.mrb[0].mxu0
    %v1801 = vpop.f32.mrb[0].mxu0
    %v1802 = vadd.f32 0.0, %v1801
    %v1803 = vpop.f32.mrb[0].mxu0
    %1804 = vmatprep.mubr.bf16.mxu0 0
    %1805 = vmatmul.mubr.bf16.gmra.mrb[0].mxu0 %v1762
    %v1806 = vpop.f32.mrb[0].mxu0
    %v1807 = vadd.f32 0.0, %v1806
    %v1808 = vpop.f32.mrb[0].mxu0
    %v1809 = vpop.f32.mrb[0].mxu0
    %v1810 = vadd.f32 0.0, %v1809
    %v1811 = vpop.f32.mrb[0].mxu0
    %1812 = vdwg.mxu0
    %v1817 = vunpack.c.l.b16 %v1410
    %v1818 = vunpack.c.l.b16 %v1411
    %v1819 = vunpack.c.l.b16 %v1412
    %v1820 = vunpack.c.l.b16 %v1413
    %v1821 = vpack.c.b16 %v1818, %v1817
    %v1822 = vpack.c.b16 %v1820, %v1819
    %v1826 = vsel %vm95, %v1738, 0
    %v1829 = vsel %vm95, %v1739, 0
    %1831 = vmatprep.subr.bf16.mxu0 0
    %1832 = vmatpush1.bf16.msra.mxu0 %v1821
    %1833 = vmatprep.subr.bf16.mxu0 0
    %1834 = vmatpush1.bf16.msra.mxu0 %v1822
    %1835 = vmatprep.subr.bf16.mxu0 0
    %1836 = vmatpush1.bf16.msra.mxu0 0
    %1837 = vmatprep.subr.bf16.mxu0 0
    %1838 = vmatpush1.bf16.msra.mxu0 0
    %1839 = vmatprep.subr.bf16.mxu0 0
    %1840 = vmatpush1.bf16.msra.mxu0 0
    %1841 = vmatprep.subr.bf16.mxu0 0
    %1842 = vmatpush1.bf16.msra.mxu0 0
    %1843 = vmatprep.subr.bf16.mxu0 0
    %1844 = vmatpush1.bf16.msra.mxu0 0
    %1845 = vmatprep.subr.bf16.mxu0 0
    %1846 = vmatpush1.bf16.msra.mxu0 0
    %1847 = vmatprep.subr.bf16.mxu0 0
    %1848 = vmatpush1.bf16.msra.mxu0 0
    %1849 = vmatprep.subr.bf16.mxu0 0
    %1850 = vmatpush1.bf16.msra.mxu0 0
    %1851 = vmatprep.subr.bf16.mxu0 0
    %1852 = vmatpush1.bf16.msra.mxu0 0
    %1853 = vmatprep.subr.bf16.mxu0 0
    %1854 = vmatpush1.bf16.msra.mxu0 0
    %1855 = vmatprep.subr.bf16.mxu0 0
    %1856 = vmatpush1.bf16.msra.mxu0 0
    %1857 = vmatprep.subr.bf16.mxu0 0
    %1858 = vmatpush1.bf16.msra.mxu0 0
    %1859 = vmatprep.subr.bf16.mxu0 0
    %1860 = vmatpush1.bf16.msra.mxu0 0
    %1861 = vmatprep.subr.bf16.mxu0 0
    %1862 = vmatpush1.bf16.msra.mxu0 0
    %1863 = vmatprep.mubr.bf16.mxu0 0
    %1864 = vmatmul.mubr.bf16.gmra.mrb[0].mxu0 %v1826
    %v1865 = vpop.f32.mrb[0].mxu0
    %v1866 = vadd.f32 %v1799, %v1865
    %v1867 = vpop.f32.mrb[0].mxu0
    %v1868 = vpop.f32.mrb[0].mxu0
    %v1869 = vadd.f32 %v1802, %v1868
    %v1870 = vpop.f32.mrb[0].mxu0
    %1871 = vmatprep.mubr.bf16.mxu0 0
    %1872 = vmatmul.mubr.bf16.gmra.mrb[0].mxu0 %v1829
    %v1873 = vpop.f32.mrb[0].mxu0
    %v1874 = vadd.f32 %v1807, %v1873
    %v1875 = vpop.f32.mrb[0].mxu0
    %v1876 = vpop.f32.mrb[0].mxu0
    %v1877 = vadd.f32 %v1810, %v1876
    %v1878 = vpop.f32.mrb[0].mxu0
    %1879 = vdwg.mxu0
    %v1880 = vld [vmem:[#allocation3 + $0xc] sm:$0xff]
    %v1881 = vld [vmem:[#allocation3 + $0x14] sm:$0xff]
    %v1882 = vld [vmem:[#allocation3 + $0x2c] sm:$0xff]
    %v1883 = vld [vmem:[#allocation3 + $0x34] sm:$0xff]
    %v1884 = vpack.c.bf16 %v1881, %v1880
    %v1885 = vpack.c.bf16 %v1883, %v1882
    %v1890 = vunpack.c.l.b16 %v1418
    %v1891 = vunpack.c.l.b16 %v1419
    %v1892 = vunpack.c.l.b16 %v1420
    %v1893 = vunpack.c.l.b16 %v1421
    %v1894 = vpack.c.b16 %v1891, %v1890
    %v1895 = vpack.c.b16 %v1893, %v1892
    %v1899 = vsel %vm95, %v1884, 0
    %v1902 = vsel %vm95, %v1885, 0
    %1904 = vmatprep.subr.bf16.mxu0 0
    %1905 = vmatpush1.bf16.msra.mxu0 %v1894
    %1906 = vmatprep.subr.bf16.mxu0 0
    %1907 = vmatpush1.bf16.msra.mxu0 %v1895
    %1908 = vmatprep.subr.bf16.mxu0 0
    %1909 = vmatpush1.bf16.msra.mxu0 0
    %1910 = vmatprep.subr.bf16.mxu0 0
    %1911 = vmatpush1.bf16.msra.mxu0 0
    %1912 = vmatprep.subr.bf16.mxu0 0
    %1913 = vmatpush1.bf16.msra.mxu0 0
    %1914 = vmatprep.subr.bf16.mxu0 0
    %1915 = vmatpush1.bf16.msra.mxu0 0
    %1916 = vmatprep.subr.bf16.mxu0 0
    %1917 = vmatpush1.bf16.msra.mxu0 0
    %1918 = vmatprep.subr.bf16.mxu0 0
    %1919 = vmatpush1.bf16.msra.mxu0 0
    %1920 = vmatprep.subr.bf16.mxu0 0
    %1921 = vmatpush1.bf16.msra.mxu0 0
    %1922 = vmatprep.subr.bf16.mxu0 0
    %1923 = vmatpush1.bf16.msra.mxu0 0
    %1924 = vmatprep.subr.bf16.mxu0 0
    %1925 = vmatpush1.bf16.msra.mxu0 0
    %1926 = vmatprep.subr.bf16.mxu0 0
    %1927 = vmatpush1.bf16.msra.mxu0 0
    %1928 = vmatprep.subr.bf16.mxu0 0
    %1929 = vmatpush1.bf16.msra.mxu0 0
    %1930 = vmatprep.subr.bf16.mxu0 0
    %1931 = vmatpush1.bf16.msra.mxu0 0
    %1932 = vmatprep.subr.bf16.mxu0 0
    %1933 = vmatpush1.bf16.msra.mxu0 0
    %1934 = vmatprep.subr.bf16.mxu0 0
    %1935 = vmatpush1.bf16.msra.mxu0 0
    %1936 = vmatprep.mubr.bf16.mxu0 0
    %1937 = vmatmul.mubr.bf16.gmra.mrb[0].mxu0 %v1899
    %v1938 = vpop.f32.mrb[0].mxu0
    %v1939 = vadd.f32 0.0, %v1938
    %v1940 = vpop.f32.mrb[0].mxu0
    %v1941 = vpop.f32.mrb[0].mxu0
    %v1942 = vadd.f32 0.0, %v1941
    %v1943 = vpop.f32.mrb[0].mxu0
    %1944 = vmatprep.mubr.bf16.mxu0 0
    %1945 = vmatmul.mubr.bf16.gmra.mrb[0].mxu0 %v1902
    %v1946 = vpop.f32.mrb[0].mxu0
    %v1947 = vadd.f32 0.0, %v1946
    %v1948 = vpop.f32.mrb[0].mxu0
    %v1949 = vpop.f32.mrb[0].mxu0
    %v1950 = vadd.f32 0.0, %v1949
    %v1951 = vpop.f32.mrb[0].mxu0
    %1952 = vdwg.mxu0
    %v1953 = vadd.f32 %v1866, %v1939
    %v1954 = vadd.f32 %v1869, %v1942
    %v1955 = vadd.f32 %v1874, %v1947
    %v1956 = vadd.f32 %v1877, %v1950
    %v1958 = vlaneseq
    %v1959 = vshrl.u32 %v1958, 7
    %v1960 = vsub.s32 0, %v1959
    %v1961 = vrot.slane %v1729, %v1960
    %v1963 = vadd.f32 %v1953, %v1961
    %v1964 = vadd.f32 %v1954, %v1961
    %v1965 = vadd.f32 %v1955, %v1961
    %v1966 = vadd.f32 %v1956, %v1961
    %v1967 = vsel %vm95, %v1963, 0.0
    %v1968 = vsel %vm95, %v1964, 0.0
    %v1969 = vadd.f32 %v1967, %v1968
    %v1970 = vsel %vm95, %v1965, 0.0
    %v1971 = vadd.f32 %v1969, %v1970
    %v1972 = vsel %vm95, %v1966, 0.0
    %v1973 = vadd.f32 %v1971, %v1972
    %v1974 = vrot.slane %v1973, 4
    %v1975 = vadd.f32 %v1973, %v1974
    %v1976 = vrot.slane %v1975, 2
    %v1977 = vadd.f32 %v1975, %v1976
    %v1978 = vrot.slane %v1977, 1
    %v1979 = vadd.f32 %v1977, %v1978
    %v1980 = vmul.f32 %v1963, %v1963
    %v1981 = vmul.f32 %v1964, %v1964
    %v1982 = vmul.f32 %v1965, %v1965
    %v1983 = vmul.f32 %v1966, %v1966
    %v1984 = vsel %vm95, %v1980, 0.0
    %v1985 = vsel %vm95, %v1981, 0.0
    %v1986 = vadd.f32 %v1984, %v1985
    %v1987 = vsel %vm95, %v1982, 0.0
    %v1988 = vadd.f32 %v1986, %v1987
    %v1989 = vsel %vm95, %v1983, 0.0
    %v1990 = vadd.f32 %v1988, %v1989
    %v1991 = vrot.slane %v1990, 4
    %v1992 = vadd.f32 %v1990, %v1991
    %v1993 = vrot.slane %v1992, 2
    %v1994 = vadd.f32 %v1992, %v1993
    %v1995 = vrot.slane %v1994, 1
    %v1996 = vadd.f32 %v1994, %v1995
    %v1997 = vmul.f32 %v1979, 0.03125
    %v1998 = vmul.f32 %v1996, 0.03125
    %v1999 = vmul.f32 %v1997, %v1997
    %v2000 = vsub.f32 %v1998, %v1999
    %v2001 = vadd.f32 %v2000, 1e-05
    %v2002 = vrsqrt.pop %v2001
    %v2003 = vmul.f32 %v1731, %v2002
    %v2005 = vlaneseq
    %v2006 = vshrl.u32 %v2005, 7
    %v2007 = vsub.s32 0, %v2006
    %v2008 = vrot.slane %v2003, %v2007
    %v2010 = vmul.f32 %v1963, %v2008
    %v2011 = vmul.f32 %v1964, %v2008
    %v2012 = vmul.f32 %v1965, %v2008
    %v2013 = vmul.f32 %v1966, %v2008
    %v2014 = vmul.f32 %v1997, %v2003
    %v2015 = vsub.f32 %v1733, %v2014
    %v2017 = vlaneseq
    %v2018 = vshrl.u32 %v2017, 7
    %v2019 = vsub.s32 0, %v2018
    %v2020 = vrot.slane %v2015, %v2019
    %v2022 = vadd.f32 %v2010, %v2020
    %v2023 = vadd.f32 %v2011, %v2020
    %v2024 = vadd.f32 %v2012, %v2020
    %v2025 = vadd.f32 %v2013, %v2020
    %v2026 = vld [vmem:[#allocation2 + $0x8] sm:$0xff]
    %v2027 = vld [vmem:[#allocation2 + $0x10] sm:$0xff]
    %v2028 = vld [vmem:[#allocation2 + $0x28] sm:$0xff]
    %v2029 = vld [vmem:[#allocation2 + $0x30] sm:$0xff]
    %v2030 = vadd.f32 %v2022, %v2026
    %v2031 = vadd.f32 %v2023, %v2027
    %v2032 = vadd.f32 %v2024, %v2028
    %v2033 = vadd.f32 %v2025, %v2029
    %v2034 = vmax.f32 %v2030, 0.0
    %v2035 = vmax.f32 %v2031, 0.0
    %v2036 = vmax.f32 %v2032, 0.0
    %v2037 = vmax.f32 %v2033, 0.0
    %2038 = vst.msk [vmem:[#allocation2 + $0x8] sm:$0xff] %vm95, %v2034
    %2039 = vst.msk [vmem:[#allocation2 + $0x10] sm:$0xff] %vm95, %v2035
    %2040 = vst.msk [vmem:[#allocation2 + $0x28] sm:$0xff] %vm95, %v2036
    %2041 = vst.msk [vmem:[#allocation2 + $0x30] sm:$0xff] %vm95, %v2037
    %v2042 = vld [vmem:[#allocation10] sm:$0xf]
    %v2043 = vld [vmem:[#allocation10 + $0x4] sm:$0xf]
    %v2044 = vld [vmem:[#allocation10 + $0x8] sm:$0xf]
    %v2045 = vld [vmem:[#allocation10 + $0xc] sm:$0xf]
    %v2046 = vld [vmem:[#allocation10 + $0x10] sm:$0xf]
    %v2047 = vld [vmem:[#allocation10 + $0x14] sm:$0xf]
    %v2048 = vld [vmem:[#allocation10 + $0x18] sm:$0xf]
    %v2049 = vld [vmem:[#allocation10 + $0x1c] sm:$0xf]
    %v2050 = vld [vmem:[#allocation10 + $0x20] sm:$0xf]
    %v2051 = vld [vmem:[#allocation10 + $0x24] sm:$0xf]
    %v2052 = vld [vmem:[#allocation10 + $0x28] sm:$0xf]
    %v2053 = vld [vmem:[#allocation10 + $0x2c] sm:$0xf]
    %v2054 = vld [vmem:[#allocation10 + $0x30] sm:$0xf]
    %v2055 = vld [vmem:[#allocation10 + $0x34] sm:$0xf]
    %v2056 = vld [vmem:[#allocation10 + $0x38] sm:$0xf]
    %v2057 = vld [vmem:[#allocation10 + $0x3c] sm:$0xf]
    %v2058 = vld [vmem:[%s10] sm:$0x1]
    %v2059 = vld [vmem:[#allocation2 + $0x8] sm:$0xff]
    %v2060 = vld [vmem:[#allocation2 + $0x10] sm:$0xff]
    %v2061 = vld [vmem:[#allocation2 + $0x28] sm:$0xff]
    %v2062 = vld [vmem:[#allocation2 + $0x30] sm:$0xff]
    %v2063 = vpack.c.bf16 %v2060, %v2059
    %v2064 = vpack.c.bf16 %v2062, %v2061
    %v2065 = vld [vmem:[#allocation2 + $0x7] sm:$0xff]
    %v2066 = vld [vmem:[#allocation2 + $0xf] sm:$0xff]
    %v2067 = vld [vmem:[#allocation2 + $0x27] sm:$0xff]
    %v2068 = vld [vmem:[#allocation2 + $0x2f] sm:$0xff]
    %v2069 = vpack.c.bf16 %v2066, %v2065
    %v2070 = vpack.c.bf16 %v2068, %v2067
    %v2075 = vunpack.c.l.b16 %v2054
    %v2076 = vunpack.c.l.b16 %v2055
    %v2077 = vunpack.c.l.b16 %v2056
    %v2078 = vunpack.c.l.b16 %v2057
    %v2079 = vpack.c.b16 %v2076, %v2075
    %v2080 = vpack.c.b16 %v2078, %v2077
    %v2084 = vsel %vm95, %v2069, 0
    %v2087 = vsel %vm95, %v2070, 0
    %2089 = vmatprep.subr.bf16.mxu0 0
    %2090 = vmatpush1.bf16.msra.mxu0 %v2079
    %2091 = vmatprep.subr.bf16.mxu0 0
    %2092 = vmatpush1.bf16.msra.mxu0 %v2080
    %2093 = vmatprep.subr.bf16.mxu0 0
    %2094 = vmatpush1.bf16.msra.mxu0 0
    %2095 = vmatprep.subr.bf16.mxu0 0
    %2096 = vmatpush1.bf16.msra.mxu0 0
    %2097 = vmatprep.subr.bf16.mxu0 0
    %2098 = vmatpush1.bf16.msra.mxu0 0
    %2099 = vmatprep.subr.bf16.mxu0 0
    %2100 = vmatpush1.bf16.msra.mxu0 0
    %2101 = vmatprep.subr.bf16.mxu0 0
    %2102 = vmatpush1.bf16.msra.mxu0 0
    %2103 = vmatprep.subr.bf16.mxu0 0
    %2104 = vmatpush1.bf16.msra.mxu0 0
    %2105 = vmatprep.subr.bf16.mxu0 0
    %2106 = vmatpush1.bf16.msra.mxu0 0
    %2107 = vmatprep.subr.bf16.mxu0 0
    %2108 = vmatpush1.bf16.msra.mxu0 0
    %2109 = vmatprep.subr.bf16.mxu0 0
    %2110 = vmatpush1.bf16.msra.mxu0 0
    %2111 = vmatprep.subr.bf16.mxu0 0
    %2112 = vmatpush1.bf16.msra.mxu0 0
    %2113 = vmatprep.subr.bf16.mxu0 0
    %2114 = vmatpush1.bf16.msra.mxu0 0
    %2115 = vmatprep.subr.bf16.mxu0 0
    %2116 = vmatpush1.bf16.msra.mxu0 0
    %2117 = vmatprep.subr.bf16.mxu0 0
    %2118 = vmatpush1.bf16.msra.mxu0 0
    %2119 = vmatprep.subr.bf16.mxu0 0
    %2120 = vmatpush1.bf16.msra.mxu0 0
    %2121 = vmatprep.mubr.bf16.mxu0 0
    %2122 = vmatmul.mubr.bf16.gmra.mrb[0].mxu0 %v2084
    %v2123 = vpop.f32.mrb[0].mxu0
    %v2124 = vadd.f32 0.0, %v2123
    %v2125 = vpop.f32.mrb[0].mxu0
    %v2126 = vpop.f32.mrb[0].mxu0
    %v2127 = vadd.f32 0.0, %v2126
    %v2128 = vpop.f32.mrb[0].mxu0
    %2129 = vmatprep.mubr.bf16.mxu0 0
    %2130 = vmatmul.mubr.bf16.gmra.mrb[0].mxu0 %v2087
    %v2131 = vpop.f32.mrb[0].mxu0
    %v2132 = vadd.f32 0.0, %v2131
    %v2133 = vpop.f32.mrb[0].mxu0
    %v2134 = vpop.f32.mrb[0].mxu0
    %v2135 = vadd.f32 0.0, %v2134
    %v2136 = vpop.f32.mrb[0].mxu0
    %2137 = vdwg.mxu0
    %v2142 = vunpack.c.l.b16 %v2046
    %v2143 = vunpack.c.l.b16 %v2047
    %v2144 = vunpack.c.l.b16 %v2048
    %v2145 = vunpack.c.l.b16 %v2049
    %v2146 = vpack.c.b16 %v2143, %v2142
    %v2147 = vpack.c.b16 %v2145, %v2144
    %v2151 = vsel %vm95, %v2063, 0
    %v2154 = vsel %vm95, %v2064, 0
    %2156 = vmatprep.subr.bf16.mxu0 0
    %2157 = vmatpush1.bf16.msra.mxu0 %v2146
    %2158 = vmatprep.subr.bf16.mxu0 0
    %2159 = vmatpush1.bf16.msra.mxu0 %v2147
    %2160 = vmatprep.subr.bf16.mxu0 0
    %2161 = vmatpush1.bf16.msra.mxu0 0
    %2162 = vmatprep.subr.bf16.mxu0 0
    %2163 = vmatpush1.bf16.msra.mxu0 0
    %2164 = vmatprep.subr.bf16.mxu0 0
    %2165 = vmatpush1.bf16.msra.mxu0 0
    %2166 = vmatprep.subr.bf16.mxu0 0
    %2167 = vmatpush1.bf16.msra.mxu0 0
    %2168 = vmatprep.subr.bf16.mxu0 0
    %2169 = vmatpush1.bf16.msra.mxu0 0
    %2170 = vmatprep.subr.bf16.mxu0 0
    %2171 = vmatpush1.bf16.msra.mxu0 0
    %2172 = vmatprep.subr.bf16.mxu0 0
    %2173 = vmatpush1.bf16.msra.mxu0 0
    %2174 = vmatprep.subr.bf16.mxu0 0
    %2175 = vmatpush1.bf16.msra.mxu0 0
    %2176 = vmatprep.subr.bf16.mxu0 0
    %2177 = vmatpush1.bf16.msra.mxu0 0
    %2178 = vmatprep.subr.bf16.mxu0 0
    %2179 = vmatpush1.bf16.msra.mxu0 0
    %2180 = vmatprep.subr.bf16.mxu0 0
    %2181 = vmatpush1.bf16.msra.mxu0 0
    %2182 = vmatprep.subr.bf16.mxu0 0
    %2183 = vmatpush1.bf16.msra.mxu0 0
    %2184 = vmatprep.subr.bf16.mxu0 0
    %2185 = vmatpush1.bf16.msra.mxu0 0
    %2186 = vmatprep.subr.bf16.mxu0 0
    %2187 = vmatpush1.bf16.msra.mxu0 0
    %2188 = vmatprep.mubr.bf16.mxu0 0
    %2189 = vmatmul.mubr.bf16.gmra.mrb[0].mxu0 %v2151
    %v2190 = vpop.f32.mrb[0].mxu0
    %v2191 = vadd.f32 %v2124, %v2190
    %v2192 = vpop.f32.mrb[0].mxu0
    %v2193 = vpop.f32.mrb[0].mxu0
    %v2194 = vadd.f32 %v2127, %v2193
    %v2195 = vpop.f32.mrb[0].mxu0
    %2196 = vmatprep.mubr.bf16.mxu0 0
    %2197 = vmatmul.mubr.bf16.gmra.mrb[0].mxu0 %v2154
    %v2198 = vpop.f32.mrb[0].mxu0
    %v2199 = vadd.f32 %v2132, %v2198
    %v2200 = vpop.f32.mrb[0].mxu0
    %v2201 = vpop.f32.mrb[0].mxu0
    %v2202 = vadd.f32 %v2135, %v2201
    %v2203 = vpop.f32.mrb[0].mxu0
    %2204 = vdwg.mxu0
    %v2206 = vlaneseq
    %v2207 = vshrl.u32 %v2206, 7
    %v2208 = vsub.s32 0, %v2207
    %v2209 = vrot.slane %v2058, %v2208
    %v2211 = vadd.f32 %v2191, %v2209
    %v2212 = vadd.f32 %v2194, %v2209
    %v2213 = vadd.f32 %v2199, %v2209
    %v2214 = vadd.f32 %v2202, %v2209
    %v2215 = vmax.f32 %v2211, 0.0
    %v2216 = vmax.f32 %v2212, 0.0
    %v2217 = vmax.f32 %v2213, 0.0
    %v2218 = vmax.f32 %v2214, 0.0
    %2219 = vst.msk [vmem:[#allocation12] sm:$0xff] %vm95, %v2215
    %2220 = vst.msk [vmem:[#allocation12 + $0x8] sm:$0xff] %vm95, %v2216
    %2221 = vst.msk [vmem:[#allocation12 + $0x10] sm:$0xff] %vm95, %v2217
    %2222 = vst.msk [vmem:[#allocation12 + $0x18] sm:$0xff] %vm95, %v2218
    %v2223 = vld [vmem:[#allocation2 + $0x9] sm:$0xff]
    %v2224 = vld [vmem:[#allocation2 + $0x11] sm:$0xff]
    %v2225 = vld [vmem:[#allocation2 + $0x29] sm:$0xff]
    %v2226 = vld [vmem:[#allocation2 + $0x31] sm:$0xff]
    %v2227 = vpack.c.bf16 %v2224, %v2223
    %v2228 = vpack.c.bf16 %v2226, %v2225
    %v2229 = vld [vmem:[#allocation2 + $0x8] sm:$0xff]
    %v2230 = vld [vmem:[#allocation2 + $0x10] sm:$0xff]
    %v2231 = vld [vmem:[#allocation2 + $0x28] sm:$0xff]
    %v2232 = vld [vmem:[#allocation2 + $0x30] sm:$0xff]
    %v2233 = vpack.c.bf16 %v2230, %v2229
    %v2234 = vpack.c.bf16 %v2232, %v2231
    %v2239 = vunpack.c.l.b16 %v2050
    %v2240 = vunpack.c.l.b16 %v2051
    %v2241 = vunpack.c.l.b16 %v2052
    %v2242 = vunpack.c.l.b16 %v2053
    %v2243 = vpack.c.b16 %v2240, %v2239
    %v2244 = vpack.c.b16 %v2242, %v2241
    %v2248 = vsel %vm95, %v2233, 0
    %v2251 = vsel %vm95, %v2234, 0
    %2253 = vmatprep.subr.bf16.mxu0 0
    %2254 = vmatpush1.bf16.msra.mxu0 %v2243
    %2255 = vmatprep.subr.bf16.mxu0 0
    %2256 = vmatpush1.bf16.msra.mxu0 %v2244
    %2257 = vmatprep.subr.bf16.mxu0 0
    %2258 = vmatpush1.bf16.msra.mxu0 0
    %2259 = vmatprep.subr.bf16.mxu0 0
    %2260 = vmatpush1.bf16.msra.mxu0 0
    %2261 = vmatprep.subr.bf16.mxu0 0
    %2262 = vmatpush1.bf16.msra.mxu0 0
    %2263 = vmatprep.subr.bf16.mxu0 0
    %2264 = vmatpush1.bf16.msra.mxu0 0
    %2265 = vmatprep.subr.bf16.mxu0 0
    %2266 = vmatpush1.bf16.msra.mxu0 0
    %2267 = vmatprep.subr.bf16.mxu0 0
    %2268 = vmatpush1.bf16.msra.mxu0 0
    %2269 = vmatprep.subr.bf16.mxu0 0
    %2270 = vmatpush1.bf16.msra.mxu0 0
    %2271 = vmatprep.subr.bf16.mxu0 0
    %2272 = vmatpush1.bf16.msra.mxu0 0
    %2273 = vmatprep.subr.bf16.mxu0 0
    %2274 = vmatpush1.bf16.msra.mxu0 0
    %2275 = vmatprep.subr.bf16.mxu0 0
    %2276 = vmatpush1.bf16.msra.mxu0 0
    %2277 = vmatprep.subr.bf16.mxu0 0
    %2278 = vmatpush1.bf16.msra.mxu0 0
    %2279 = vmatprep.subr.bf16.mxu0 0
    %2280 = vmatpush1.bf16.msra.mxu0 0
    %2281 = vmatprep.subr.bf16.mxu0 0
    %2282 = vmatpush1.bf16.msra.mxu0 0
    %2283 = vmatprep.subr.bf16.mxu0 0
    %2284 = vmatpush1.bf16.msra.mxu0 0
    %2285 = vmatprep.mubr.bf16.mxu0 0
    %2286 = vmatmul.mubr.bf16.gmra.mrb[0].mxu0 %v2248
    %v2287 = vpop.f32.mrb[0].mxu0
    %v2288 = vadd.f32 0.0, %v2287
    %v2289 = vpop.f32.mrb[0].mxu0
    %v2290 = vpop.f32.mrb[0].mxu0
    %v2291 = vadd.f32 0.0, %v2290
    %v2292 = vpop.f32.mrb[0].mxu0
    %2293 = vmatprep.mubr.bf16.mxu0 0
    %2294 = vmatmul.mubr.bf16.gmra.mrb[0].mxu0 %v2251
    %v2295 = vpop.f32.mrb[0].mxu0
    %v2296 = vadd.f32 0.0, %v2295
    %v2297 = vpop.f32.mrb[0].mxu0
    %v2298 = vpop.f32.mrb[0].mxu0
    %v2299 = vadd.f32 0.0, %v2298
    %v2300 = vpop.f32.mrb[0].mxu0
    %2301 = vdwg.mxu0
    %v2306 = vunpack.c.l.b16 %v2042
    %v2307 = vunpack.c.l.b16 %v2043
    %v2308 = vunpack.c.l.b16 %v2044
    %v2309 = vunpack.c.l.b16 %v2045
    %v2310 = vpack.c.b16 %v2307, %v2306
    %v2311 = vpack.c.b16 %v2309, %v2308
    %v2315 = vsel %vm95, %v2227, 0
    %v2318 = vsel %vm95, %v2228, 0
    %2320 = vmatprep.subr.bf16.mxu0 0
    %2321 = vmatpush1.bf16.msra.mxu0 %v2310
    %2322 = vmatprep.subr.bf16.mxu0 0
    %2323 = vmatpush1.bf16.msra.mxu0 %v2311
    %2324 = vmatprep.subr.bf16.mxu0 0
    %2325 = vmatpush1.bf16.msra.mxu0 0
    %2326 = vmatprep.subr.bf16.mxu0 0
    %2327 = vmatpush1.bf16.msra.mxu0 0
    %2328 = vmatprep.subr.bf16.mxu0 0
    %2329 = vmatpush1.bf16.msra.mxu0 0
    %2330 = vmatprep.subr.bf16.mxu0 0
    %2331 = vmatpush1.bf16.msra.mxu0 0
    %2332 = vmatprep.subr.bf16.mxu0 0
    %2333 = vmatpush1.bf16.msra.mxu0 0
    %2334 = vmatprep.subr.bf16.mxu0 0
    %2335 = vmatpush1.bf16.msra.mxu0 0
    %2336 = vmatprep.subr.bf16.mxu0 0
    %2337 = vmatpush1.bf16.msra.mxu0 0
    %2338 = vmatprep.subr.bf16.mxu0 0
    %2339 = vmatpush1.bf16.msra.mxu0 0
    %2340 = vmatprep.subr.bf16.mxu0 0
    %2341 = vmatpush1.bf16.msra.mxu0 0
    %2342 = vmatprep.subr.bf16.mxu0 0
    %2343 = vmatpush1.bf16.msra.mxu0 0
    %2344 = vmatprep.subr.bf16.mxu0 0
    %2345 = vmatpush1.bf16.msra.mxu0 0
    %2346 = vmatprep.subr.bf16.mxu0 0
    %2347 = vmatpush1.bf16.msra.mxu0 0
    %2348 = vmatprep.subr.bf16.mxu0 0
    %2349 = vmatpush1.bf16.msra.mxu0 0
    %2350 = vmatprep.subr.bf16.mxu0 0
    %2351 = vmatpush1.bf16.msra.mxu0 0
    %2352 = vmatprep.mubr.bf16.mxu0 0
    %2353 = vmatmul.mubr.bf16.gmra.mrb[0].mxu0 %v2315
    %v2354 = vpop.f32.mrb[0].mxu0
    %v2355 = vadd.f32 %v2288, %v2354
    %v2356 = vpop.f32.mrb[0].mxu0
    %v2357 = vpop.f32.mrb[0].mxu0
    %v2358 = vadd.f32 %v2291, %v2357
    %v2359 = vpop.f32.mrb[0].mxu0
    %2360 = vmatprep.mubr.bf16.mxu0 0
    %2361 = vmatmul.mubr.bf16.gmra.mrb[0].mxu0 %v2318
    %v2362 = vpop.f32.mrb[0].mxu0
    %v2363 = vadd.f32 %v2296, %v2362
    %v2364 = vpop.f32.mrb[0].mxu0
    %v2365 = vpop.f32.mrb[0].mxu0
    %v2366 = vadd.f32 %v2299, %v2365
    %v2367 = vpop.f32.mrb[0].mxu0
    %2368 = vdwg.mxu0
    %v2369 = vadd.f32 %v2355, %v2209
    %v2370 = vadd.f32 %v2358, %v2209
    %v2371 = vadd.f32 %v2363, %v2209
    %v2372 = vadd.f32 %v2366, %v2209
    %v2373 = vmax.f32 %v2369, 0.0
    %v2374 = vmax.f32 %v2370, 0.0
    %v2375 = vmax.f32 %v2371, 0.0
    %v2376 = vmax.f32 %v2372, 0.0
    %s2377 = scalar_lea.vmem [#allocation12], 32
    %2378 = vst.msk [vmem:[%s2377] sm:$0xff] %vm95, %v2373
    %2379 = vst.msk [vmem:[%s2377 + $0x8] sm:$0xff] %vm95, %v2374
    %2380 = vst.msk [vmem:[%s2377 + $0x10] sm:$0xff] %vm95, %v2375
    %2381 = vst.msk [vmem:[%s2377 + $0x18] sm:$0xff] %vm95, %v2376
    // Predicated region
    $region62: #{tpu_custom_call.1} parent=1 // pred_check
      _
    $region63: #{tpu_custom_call.1} parent=1 // pred_check_branch
      %2383 = sbr.rel (0) target = $region65
    $region64: #{tpu_custom_call.1} parent=1 // pred_region
      %s2385 = ssub.s32 1024, 1024
      %2386 = vsyncadd [#allocation6], %s2385
      %s2387 = sshll.u32 [#allocation12], 4
      %s2388 = int_to_ptr.vmem [resolvable:$true] %s2387
      %2393 = dma.vmem_to_hbm [thread:$0]  %s2388, 1024, %s11, [#allocation6], 128, 128, 8
    $region65: #{tpu_custom_call.1} parent=1 // pred_fallthru
      _
    // Predicated region
    $region66: #{tpu_custom_call.1} parent=1 // pred_check
      _
    $region67: #{tpu_custom_call.1} parent=1 // pred_check_branch
      %2395 = sbr.rel (0) target = $region69
    $region68: #{tpu_custom_call.1} parent=1 // pred_region
      %2396 = dma.done [#allocation6], 1024
    $region69: #{tpu_custom_call.1} parent=1 // pred_fallthru
      _
    %2397 = vsyncpa [#allocation5], 1
    %2398 = vsyncpa [#allocation8], 1
    %2399 = vsyncpa [#allocation11], 1
    %2400 = vsyncpa [#allocation6], 1

</llo_original>
